<compile_context>
chip_gen: v6e
topology: v6e:2x2x1
jax: 0.10.0
libtpu: 0.0.40
codegen_flags: <defaults>
</compile_context>

<pallas_src>
import functools

import numpy as np
import jax
import jax.numpy as jnp
from jax.experimental import pallas as pl
from jax.experimental.pallas import tpu as pltpu


# ---------------------------------------------------------------------------
# Fused forward kernel
# ---------------------------------------------------------------------------

def _fused_kernel(x_ref, w1t_ref, b1_ref, l1_ref, g2_ref, w2t_ref, b2_ref,
                  l2_ref, h4_ref, wf1_ref, bf1_ref, wf2_ref, bf2_ref, o_ref,
                  *, bn):
    f32 = jnp.float32
    bf16 = jnp.bfloat16

    xv = x_ref[...]                                           # (bn, 28, 28) f32

    # ---- conv1: 1->10, k=5, via Toeplitz matmuls over kh -------------------
    # y1 rows = (b, oh) [bn*24], lanes = parity*128 + ow_half*10 + oc  (256)
    acc1 = None
    for kh in range(5):
        xs = xv[:, kh:kh + 24, :].reshape(bn * 24, 28).astype(bf16)
        t = jnp.dot(xs, w1t_ref[kh], preferred_element_type=f32)
        acc1 = t if acc1 is None else acc1 + t
    y1 = acc1 + b1_ref[...]                                   # (bn*24, 256)

    # ---- maxpool 2x2 + relu -------------------------------------------------
    ev = jnp.dot(l1_ref[0], y1, preferred_element_type=f32)   # even rows (bn*12, 256)
    od = jnp.dot(l1_ref[1], y1, preferred_element_type=f32)   # odd rows
    rmax = jnp.maximum(ev, od)
    p1 = jnp.maximum(jnp.maximum(rmax[:, :128], rmax[:, 128:]), 0.0)  # (bn*12, 128)

    # ---- conv2: 10->20, k=5 -------------------------------------------------
    # y2 rows = (b, oh2) [bn*8], lanes = parity*256 + ow2_half*20 + oc  (512)
    acc2 = None
    for kh in range(5):
        rows = jnp.dot(g2_ref[kh], p1, preferred_element_type=f32)     # (bn*8, 128)
        t = jnp.dot(rows.astype(bf16), w2t_ref[kh], preferred_element_type=f32)
        acc2 = t if acc2 is None else acc2 + t
    y2 = acc2 + b2_ref[...]                                   # (bn*8, 512)

    # ---- maxpool 2x2 + relu -------------------------------------------------
    ev2 = jnp.dot(l2_ref[0], y2, preferred_element_type=f32)  # (bn*4, 512)
    od2 = jnp.dot(l2_ref[1], y2, preferred_element_type=f32)
    rmax2 = jnp.maximum(ev2, od2)
    p2 = jnp.maximum(jnp.maximum(rmax2[:, :256], rmax2[:, 256:]), 0.0)  # (bn*4, 256)

    # ---- fc1 (NCHW flatten folded into per-row weight slabs) + relu ---------
    acc3 = None
    for h2 in range(4):
        rows = jnp.dot(h4_ref[h2], p2, preferred_element_type=f32)      # (bn, 256)
        t = jnp.dot(rows.astype(bf16), wf1_ref[h2], preferred_element_type=f32)
        acc3 = t if acc3 is None else acc3 + t
    hdn = jnp.maximum(acc3 + bf1_ref[...], 0.0)               # (bn, 128), cols>=50 are 0

    # ---- fc2 + log_softmax over the 10 valid lanes --------------------------
    logits = jnp.dot(hdn.astype(bf16), wf2_ref[...],
                     preferred_element_type=f32) + bf2_ref[...]          # (bn, 128)
    lane = jax.lax.broadcasted_iota(jnp.int32, logits.shape, 1)
    valid = lane < 10
    ml = jnp.where(valid, logits, -1e30)
    m = jnp.max(ml, axis=-1, keepdims=True)
    lse = jnp.log(jnp.sum(jnp.exp(ml - m), axis=-1, keepdims=True))
    out = jnp.where(valid, logits - m - lse, 0.0)
    o_ref[...] = out.astype(o_ref.dtype)


# ---------------------------------------------------------------------------
# One-time host-side weight packing (hoisted transposes / padding)
# ---------------------------------------------------------------------------

def pack_params(params, bn):
    w1 = np.asarray(params["w1"], np.float32)      # (10, 1, 5, 5)
    b1 = np.asarray(params["b1"], np.float32)      # (10,)
    w2 = np.asarray(params["w2"], np.float32)      # (20, 10, 5, 5)
    b2 = np.asarray(params["b2"], np.float32)      # (20,)
    wfc1 = np.asarray(params["wfc1"], np.float32)  # (50, 320)
    bfc1 = np.asarray(params["bfc1"], np.float32)  # (50,)
    wfc2 = np.asarray(params["wfc2"], np.float32)  # (10, 50)
    bfc2 = np.asarray(params["bfc2"], np.float32)  # (10,)

    eye = np.eye(bn, dtype=np.float32)

    # conv1 Toeplitz slabs: (5, 28, 256); lane = parity*128 + j*10 + oc, ow = 2j+parity
    w1t = np.zeros((5, 28, 256), np.float32)
    b1row = np.zeros((1, 256), np.float32)
    for parity in range(2):
        for j in range(12):
            ow = 2 * j + parity
            base = parity * 128 + j * 10
            b1row[0, base:base + 10] = b1
            for oc in range(10):
                for kh in range(5):
                    for kw in range(5):
                        w1t[kh, ow + kw, base + oc] = w1[oc, 0, kh, kw]

    # pool1 row selectors: (2, bn*12, bn*24)
    e_even = np.zeros((12, 24), np.float32); e_even[np.arange(12), 2 * np.arange(12)] = 1
    e_odd = np.zeros((12, 24), np.float32); e_odd[np.arange(12), 2 * np.arange(12) + 1] = 1
    l1 = np.stack([np.kron(eye, e_even), np.kron(eye, e_odd)])

    # conv2 row slicers: (5, bn*8, bn*12)
    g2 = np.zeros((5, bn * 8, bn * 12), np.float32)
    for kh in range(5):
        pk = np.zeros((8, 12), np.float32); pk[np.arange(8), np.arange(8) + kh] = 1
        g2[kh] = np.kron(eye, pk)

    # conv2 Toeplitz slabs: (5, 128, 512); input lane = w_in*10 + ic,
    # output lane = parity*256 + j2*20 + oc, ow2 = 2*j2 + parity
    w2t = np.zeros((5, 128, 512), np.float32)
    b2row = np.zeros((1, 512), np.float32)
    for parity in range(2):
        for j2 in range(4):
            ow2 = 2 * j2 + parity
            base = parity * 256 + j2 * 20
            b2row[0, base:base + 20] = b2
            for oc in range(20):
                for ic in range(10):
                    for kh in range(5):
                        for kw in range(5):
                            w2t[kh, (ow2 + kw) * 10 + ic, base + oc] = w2[oc, ic, kh, kw]

    # pool2 row selectors: (2, bn*4, bn*8)
    e2_even = np.zeros((4, 8), np.float32); e2_even[np.arange(4), 2 * np.arange(4)] = 1
    e2_odd = np.zeros((4, 8), np.float32); e2_odd[np.arange(4), 2 * np.arange(4) + 1] = 1
    l2 = np.stack([np.kron(eye, e2_even), np.kron(eye, e2_odd)])

    # fc1 per-h2 row pickers: (4, bn, bn*4)
    h4 = np.zeros((4, bn, bn * 4), np.float32)
    for h2 in range(4):
        sel = np.zeros((1, 4), np.float32); sel[0, h2] = 1
        h4[h2] = np.kron(eye, sel)

    # fc1 weight slabs: (4, 256, 128); torch flatten order f = oc*16 + h2*4 + w2p
    wf1 = np.zeros((4, 256, 128), np.float32)
    bf1row = np.zeros((1, 128), np.float32); bf1row[0, :50] = bfc1
    for h2 in range(4):
        for w2p in range(4):
            for oc in range(20):
                wf1[h2, w2p * 20 + oc, :50] = wfc1[:, oc * 16 + h2 * 4 + w2p]

    # fc2: (128, 128), padded lane-dense
    wf2 = np.zeros((128, 128), np.float32); wf2[:50, :10] = wfc2.T
    bf2row = np.zeros((1, 128), np.float32); bf2row[0, :10] = bfc2

    bf16 = jnp.bfloat16
    return dict(
        w1t=jnp.asarray(w1t, bf16), b1=jnp.asarray(b1row),
        l1=jnp.asarray(l1), g2=jnp.asarray(g2),
        w2t=jnp.asarray(w2t, bf16), b2=jnp.asarray(b2row),
        l2=jnp.asarray(l2), h4=jnp.asarray(h4),
        wf1=jnp.asarray(wf1, bf16), bf1=jnp.asarray(bf1row),
        wf2=jnp.asarray(wf2, bf16), bf2=jnp.asarray(bf2row),
    )


# ---------------------------------------------------------------------------
# Wrapper
# ---------------------------------------------------------------------------

def _const_spec(arr):
    nd = arr.ndim
    return pl.BlockSpec(arr.shape, lambda i, _nd=nd: (0,) * _nd)


def cnn_mnist_forward(x, packed, *, bn=8):
    """x: (N, 1, 28, 28) float32 NCHW -> log-probs (N, 10)."""
    n = x.shape[0]
    x3 = x.reshape(n, 28, 28).astype(jnp.float32)
    npad = ((n + bn - 1) // bn) * bn
    if npad != n:
        x3 = jnp.pad(x3, ((0, npad - n), (0, 0), (0, 0)))

    names = ["w1t", "b1", "l1", "g2", "w2t", "b2", "l2", "h4", "wf1", "bf1",
             "wf2", "bf2"]
    consts = [packed[k] for k in names]

    in_specs = [pl.BlockSpec((bn, 28, 28), lambda i: (i, 0, 0))]
    in_specs += [_const_spec(c) for c in consts]

    out = pl.pallas_call(
        functools.partial(_fused_kernel, bn=bn),
        out_shape=jax.ShapeDtypeStruct((npad, 128), jnp.float32),
        grid_spec=pltpu.PrefetchScalarGridSpec(
            num_scalar_prefetch=0,
            grid=(npad // bn,),
            in_specs=in_specs,
            out_specs=pl.BlockSpec((bn, 128), lambda i: (i, 0)),
        ),
        compiler_params=pltpu.CompilerParams(
            dimension_semantics=("parallel",),
            vmem_limit_bytes=32 * 1024 * 1024,
        ),
    )(x3, *consts)
    return out[:n, :10]


# ---------------------------------------------------------------------------
# Pure-JAX reference (for numerical validation) + init
# ---------------------------------------------------------------------------

def reference_forward(x, params):
    dn = ("NCHW", "OIHW", "NCHW")
    y = jax.lax.conv_general_dilated(x, params["w1"], (1, 1), "VALID",
                                     dimension_numbers=dn)
    y = y + params["b1"][None, :, None, None]
    y = jax.lax.reduce_window(y, -jnp.inf, jax.lax.max, (1, 1, 2, 2),
                              (1, 1, 2, 2), "VALID")
    y = jnp.maximum(y, 0.0)
    y = jax.lax.conv_general_dilated(y, params["w2"], (1, 1), "VALID",
                                     dimension_numbers=dn)
    y = y + params["b2"][None, :, None, None]
    y = jax.lax.reduce_window(y, -jnp.inf, jax.lax.max, (1, 1, 2, 2),
                              (1, 1, 2, 2), "VALID")
    y = jnp.maximum(y, 0.0)
    flat = y.reshape(y.shape[0], -1)
    h = jnp.maximum(flat @ params["wfc1"].T + params["bfc1"], 0.0)
    logits = h @ params["wfc2"].T + params["bfc2"]
    return jax.nn.log_softmax(logits, axis=1)


def init_params(key):
    """Deterministic PyTorch-style uniform(-1/sqrt(fan_in), 1/sqrt(fan_in)) init."""
    def u(k, shape, fan_in):
        bound = 1.0 / jnp.sqrt(jnp.float32(fan_in))
        return jax.random.uniform(k, shape, jnp.float32, -bound, bound)

    ks = jax.random.split(key, 8)
    return {
        "w1": u(ks[0], (10, 1, 5, 5), 1 * 5 * 5),
        "b1": u(ks[1], (10,), 1 * 5 * 5),
        "w2": u(ks[2], (20, 10, 5, 5), 10 * 5 * 5),
        "b2": u(ks[3], (20,), 10 * 5 * 5),
        "wfc1": u(ks[4], (50, 320), 320),
        "bfc1": u(ks[5], (50,), 320),
        "wfc2": u(ks[6], (10, 50), 50),
        "bfc2": u(ks[7], (10,), 50),
    }


if __name__ == "__main__":
    BN = 8
    key = jax.random.PRNGKey(0)
    k_params, k_x = jax.random.split(key)
    params = init_params(k_params)
    # MNIST-shaped input: fc1 expects 320 = 20*4*4, which forces 28x28 spatial.
    x = jax.random.normal(k_x, (2, 1, 28, 28), dtype=jnp.float32)

    packed = pack_params(params, BN)
    fwd = jax.jit(functools.partial(cnn_mnist_forward, bn=BN))
    out = jax.block_until_ready(fwd(x, packed))

    assert out.shape == (2, 10)
    # log_softmax rows should sum (in prob space) to ~1.
    assert jnp.allclose(jnp.exp(out).sum(axis=1), 1.0, atol=1e-4)
    # match the f32 XLA reference (bf16 matmul operands -> loose tolerance).
    ref = jax.block_until_ready(reference_forward(x, params))
    assert jnp.allclose(out, ref, atol=1e-1)
    print("KERNEL_OK")
</pallas_src>

<mosaic_0001>
module attributes {stable_mosaic.version = 11 : i64} {
  func.func @_fused_kernel(%arg0: i32, %arg1: memref<8x28x28xf32, #tpu.memory_space<vmem>>, %arg2: memref<5x28x256xbf16, #tpu.memory_space<vmem>>, %arg3: memref<1x256xf32, #tpu.memory_space<vmem>>, %arg4: memref<2x96x192xf32, #tpu.memory_space<vmem>>, %arg5: memref<5x64x96xf32, #tpu.memory_space<vmem>>, %arg6: memref<5x128x512xbf16, #tpu.memory_space<vmem>>, %arg7: memref<1x512xf32, #tpu.memory_space<vmem>>, %arg8: memref<2x32x64xf32, #tpu.memory_space<vmem>>, %arg9: memref<4x8x32xf32, #tpu.memory_space<vmem>>, %arg10: memref<4x256x128xbf16, #tpu.memory_space<vmem>>, %arg11: memref<1x128xf32, #tpu.memory_space<vmem>>, %arg12: memref<128x128xbf16, #tpu.memory_space<vmem>>, %arg13: memref<1x128xf32, #tpu.memory_space<vmem>>, %arg14: memref<8x128xf32, #tpu.memory_space<vmem>>) attributes {dimension_semantics = [#tpu.dimension_semantics<parallel>], iteration_bounds = array<i64: 1>, scalar_prefetch = 0 : i64, scratch_operands = 0 : i64, tpu.core_type = #tpu.core_type<tc>, window_params = [{transform_indices = @transform_0, window_bounds = array<i64: 8, 28, 28>}, {pipeline_mode = #tpu.pipeline_mode<synchronous>, transform_indices = @transform_1, window_bounds = array<i64: 5, 28, 256>}, {pipeline_mode = #tpu.pipeline_mode<synchronous>, transform_indices = @transform_2, window_bounds = array<i64: 1, 256>}, {pipeline_mode = #tpu.pipeline_mode<synchronous>, transform_indices = @transform_3, window_bounds = array<i64: 2, 96, 192>}, {pipeline_mode = #tpu.pipeline_mode<synchronous>, transform_indices = @transform_4, window_bounds = array<i64: 5, 64, 96>}, {pipeline_mode = #tpu.pipeline_mode<synchronous>, transform_indices = @transform_5, window_bounds = array<i64: 5, 128, 512>}, {pipeline_mode = #tpu.pipeline_mode<synchronous>, transform_indices = @transform_6, window_bounds = array<i64: 1, 512>}, {pipeline_mode = #tpu.pipeline_mode<synchronous>, transform_indices = @transform_7, window_bounds = array<i64: 2, 32, 64>}, {pipeline_mode = #tpu.pipeline_mode<synchronous>, transform_indices = @transform_8, window_bounds = array<i64: 4, 8, 32>}, {pipeline_mode = #tpu.pipeline_mode<synchronous>, transform_indices = @transform_9, window_bounds = array<i64: 4, 256, 128>}, {pipeline_mode = #tpu.pipeline_mode<synchronous>, transform_indices = @transform_10, window_bounds = array<i64: 1, 128>}, {pipeline_mode = #tpu.pipeline_mode<synchronous>, transform_indices = @transform_11, window_bounds = array<i64: 128, 128>}, {pipeline_mode = #tpu.pipeline_mode<synchronous>, transform_indices = @transform_12, window_bounds = array<i64: 1, 128>}, {transform_indices = @transform_13, window_bounds = array<i64: 8, 128>}]} {
    %c0 = arith.constant 0 : index
    %c0_0 = arith.constant 0 : index
    %c0_1 = arith.constant 0 : index
    %0 = vector.load %arg1[%c0, %c0_0, %c0_1] : memref<8x28x28xf32, #tpu.memory_space<vmem>>, vector<8x28x28xf32>
    %1 = vector.extract_strided_slice %0 {offsets = [0, 0, 0], sizes = [8, 24, 28], strides = [1, 1, 1]} : vector<8x28x28xf32> to vector<8x24x28xf32>
    %2 = vector.shape_cast %1 : vector<8x24x28xf32> to vector<192x28xf32>
    %3 = arith.truncf %2 : vector<192x28xf32> to vector<192x28xbf16>
    %c0_2 = arith.constant 0 : index
    %c0_3 = arith.constant 0 : index
    %c0_4 = arith.constant 0 : index
    %4 = vector.load %arg2[%c0_2, %c0_3, %c0_4] : memref<5x28x256xbf16, #tpu.memory_space<vmem>>, vector<1x28x256xbf16>
    %5 = vector.shape_cast %4 : vector<1x28x256xbf16> to vector<28x256xbf16>
    %cst = arith.constant dense<0.000000e+00> : vector<192x256xf32>
    %6 = tpu.matmul %3, %5, %cst {dimension_numbers = #tpu.dot_dimension_numbers<[1], [0], [0], [1], [0, 0, 1, 1], [], []>} : vector<192x28xbf16>, vector<28x256xbf16>, vector<192x256xf32> -> vector<192x256xf32>
    %7 = vector.extract_strided_slice %0 {offsets = [0, 1, 0], sizes = [8, 24, 28], strides = [1, 1, 1]} : vector<8x28x28xf32> to vector<8x24x28xf32>
    %8 = vector.shape_cast %7 : vector<8x24x28xf32> to vector<192x28xf32>
    %9 = arith.truncf %8 : vector<192x28xf32> to vector<192x28xbf16>
    %c1 = arith.constant 1 : index
    %c0_5 = arith.constant 0 : index
    %c0_6 = arith.constant 0 : index
    %10 = vector.load %arg2[%c1, %c0_5, %c0_6] : memref<5x28x256xbf16, #tpu.memory_space<vmem>>, vector<1x28x256xbf16>
    %11 = vector.shape_cast %10 : vector<1x28x256xbf16> to vector<28x256xbf16>
    %cst_7 = arith.constant dense<0.000000e+00> : vector<192x256xf32>
    %12 = tpu.matmul %9, %11, %cst_7 {dimension_numbers = #tpu.dot_dimension_numbers<[1], [0], [0], [1], [0, 0, 1, 1], [], []>} : vector<192x28xbf16>, vector<28x256xbf16>, vector<192x256xf32> -> vector<192x256xf32>
    %13 = arith.addf %6, %12 : vector<192x256xf32>
    %14 = vector.extract_strided_slice %0 {offsets = [0, 2, 0], sizes = [8, 24, 28], strides = [1, 1, 1]} : vector<8x28x28xf32> to vector<8x24x28xf32>
    %15 = vector.shape_cast %14 : vector<8x24x28xf32> to vector<192x28xf32>
    %16 = arith.truncf %15 : vector<192x28xf32> to vector<192x28xbf16>
    %c2 = arith.constant 2 : index
    %c0_8 = arith.constant 0 : index
    %c0_9 = arith.constant 0 : index
    %17 = vector.load %arg2[%c2, %c0_8, %c0_9] : memref<5x28x256xbf16, #tpu.memory_space<vmem>>, vector<1x28x256xbf16>
    %18 = vector.shape_cast %17 : vector<1x28x256xbf16> to vector<28x256xbf16>
    %cst_10 = arith.constant dense<0.000000e+00> : vector<192x256xf32>
    %19 = tpu.matmul %16, %18, %cst_10 {dimension_numbers = #tpu.dot_dimension_numbers<[1], [0], [0], [1], [0, 0, 1, 1], [], []>} : vector<192x28xbf16>, vector<28x256xbf16>, vector<192x256xf32> -> vector<192x256xf32>
    %20 = arith.addf %13, %19 : vector<192x256xf32>
    %21 = vector.extract_strided_slice %0 {offsets = [0, 3, 0], sizes = [8, 24, 28], strides = [1, 1, 1]} : vector<8x28x28xf32> to vector<8x24x28xf32>
    %22 = vector.shape_cast %21 : vector<8x24x28xf32> to vector<192x28xf32>
    %23 = arith.truncf %22 : vector<192x28xf32> to vector<192x28xbf16>
    %c3 = arith.constant 3 : index
    %c0_11 = arith.constant 0 : index
    %c0_12 = arith.constant 0 : index
    %24 = vector.load %arg2[%c3, %c0_11, %c0_12] : memref<5x28x256xbf16, #tpu.memory_space<vmem>>, vector<1x28x256xbf16>
    %25 = vector.shape_cast %24 : vector<1x28x256xbf16> to vector<28x256xbf16>
    %cst_13 = arith.constant dense<0.000000e+00> : vector<192x256xf32>
    %26 = tpu.matmul %23, %25, %cst_13 {dimension_numbers = #tpu.dot_dimension_numbers<[1], [0], [0], [1], [0, 0, 1, 1], [], []>} : vector<192x28xbf16>, vector<28x256xbf16>, vector<192x256xf32> -> vector<192x256xf32>
    %27 = arith.addf %20, %26 : vector<192x256xf32>
    %28 = vector.extract_strided_slice %0 {offsets = [0, 4, 0], sizes = [8, 24, 28], strides = [1, 1, 1]} : vector<8x28x28xf32> to vector<8x24x28xf32>
    %29 = vector.shape_cast %28 : vector<8x24x28xf32> to vector<192x28xf32>
    %30 = arith.truncf %29 : vector<192x28xf32> to vector<192x28xbf16>
    %c4 = arith.constant 4 : index
    %c0_14 = arith.constant 0 : index
    %c0_15 = arith.constant 0 : index
    %31 = vector.load %arg2[%c4, %c0_14, %c0_15] : memref<5x28x256xbf16, #tpu.memory_space<vmem>>, vector<1x28x256xbf16>
    %32 = vector.shape_cast %31 : vector<1x28x256xbf16> to vector<28x256xbf16>
    %cst_16 = arith.constant dense<0.000000e+00> : vector<192x256xf32>
    %33 = tpu.matmul %30, %32, %cst_16 {dimension_numbers = #tpu.dot_dimension_numbers<[1], [0], [0], [1], [0, 0, 1, 1], [], []>} : vector<192x28xbf16>, vector<28x256xbf16>, vector<192x256xf32> -> vector<192x256xf32>
    %34 = arith.addf %27, %33 : vector<192x256xf32>
    %c0_17 = arith.constant 0 : index
    %c0_18 = arith.constant 0 : index
    %35 = vector.load %arg3[%c0_17, %c0_18] : memref<1x256xf32, #tpu.memory_space<vmem>>, vector<1x256xf32>
    %36 = vector.broadcast %35 : vector<1x256xf32> to vector<192x256xf32>
    %37 = arith.addf %34, %36 : vector<192x256xf32>
    %c0_19 = arith.constant 0 : index
    %c0_20 = arith.constant 0 : index
    %c0_21 = arith.constant 0 : index
    %38 = vector.load %arg4[%c0_19, %c0_20, %c0_21] : memref<2x96x192xf32, #tpu.memory_space<vmem>>, vector<1x96x192xf32>
    %39 = vector.shape_cast %38 : vector<1x96x192xf32> to vector<96x192xf32>
    %cst_22 = arith.constant dense<0.000000e+00> : vector<96x256xf32>
    %40 = tpu.matmul %39, %37, %cst_22 {dimension_numbers = #tpu.dot_dimension_numbers<[1], [0], [0], [1], [0, 0, 1, 1], [], []>} : vector<96x192xf32>, vector<192x256xf32>, vector<96x256xf32> -> vector<96x256xf32>
    %c1_23 = arith.constant 1 : index
    %c0_24 = arith.constant 0 : index
    %c0_25 = arith.constant 0 : index
    %41 = vector.load %arg4[%c1_23, %c0_24, %c0_25] : memref<2x96x192xf32, #tpu.memory_space<vmem>>, vector<1x96x192xf32>
    %42 = vector.shape_cast %41 : vector<1x96x192xf32> to vector<96x192xf32>
    %cst_26 = arith.constant dense<0.000000e+00> : vector<96x256xf32>
    %43 = tpu.matmul %42, %37, %cst_26 {dimension_numbers = #tpu.dot_dimension_numbers<[1], [0], [0], [1], [0, 0, 1, 1], [], []>} : vector<96x192xf32>, vector<192x256xf32>, vector<96x256xf32> -> vector<96x256xf32>
    %44 = arith.maximumf %40, %43 : vector<96x256xf32>
    %45 = vector.extract_strided_slice %44 {offsets = [0, 0], sizes = [96, 128], strides = [1, 1]} : vector<96x256xf32> to vector<96x128xf32>
    %46 = vector.extract_strided_slice %44 {offsets = [0, 128], sizes = [96, 128], strides = [1, 1]} : vector<96x256xf32> to vector<96x128xf32>
    %47 = arith.maximumf %45, %46 : vector<96x128xf32>
    %cst_27 = arith.constant 0.000000e+00 : f32
    %48 = vector.broadcast %cst_27 : f32 to vector<96x128xf32>
    %49 = arith.maximumf %47, %48 : vector<96x128xf32>
    %c0_28 = arith.constant 0 : index
    %c0_29 = arith.constant 0 : index
    %c0_30 = arith.constant 0 : index
    %50 = vector.load %arg5[%c0_28, %c0_29, %c0_30] : memref<5x64x96xf32, #tpu.memory_space<vmem>>, vector<1x64x96xf32>
    %51 = vector.shape_cast %50 : vector<1x64x96xf32> to vector<64x96xf32>
    %cst_31 = arith.constant dense<0.000000e+00> : vector<64x128xf32>
    %52 = tpu.matmul %51, %49, %cst_31 {dimension_numbers = #tpu.dot_dimension_numbers<[1], [0], [0], [1], [0, 0, 1, 1], [], []>} : vector<64x96xf32>, vector<96x128xf32>, vector<64x128xf32> -> vector<64x128xf32>
    %53 = arith.truncf %52 : vector<64x128xf32> to vector<64x128xbf16>
    %c0_32 = arith.constant 0 : index
    %c0_33 = arith.constant 0 : index
    %c0_34 = arith.constant 0 : index
    %54 = vector.load %arg6[%c0_32, %c0_33, %c0_34] : memref<5x128x512xbf16, #tpu.memory_space<vmem>>, vector<1x128x512xbf16>
    %55 = vector.shape_cast %54 : vector<1x128x512xbf16> to vector<128x512xbf16>
    %cst_35 = arith.constant dense<0.000000e+00> : vector<64x512xf32>
    %56 = tpu.matmul %53, %55, %cst_35 {dimension_numbers = #tpu.dot_dimension_numbers<[1], [0], [0], [1], [0, 0, 1, 1], [], []>} : vector<64x128xbf16>, vector<128x512xbf16>, vector<64x512xf32> -> vector<64x512xf32>
    %c1_36 = arith.constant 1 : index
    %c0_37 = arith.constant 0 : index
    %c0_38 = arith.constant 0 : index
    %57 = vector.load %arg5[%c1_36, %c0_37, %c0_38] : memref<5x64x96xf32, #tpu.memory_space<vmem>>, vector<1x64x96xf32>
    %58 = vector.shape_cast %57 : vector<1x64x96xf32> to vector<64x96xf32>
    %cst_39 = arith.constant dense<0.000000e+00> : vector<64x128xf32>
    %59 = tpu.matmul %58, %49, %cst_39 {dimension_numbers = #tpu.dot_dimension_numbers<[1], [0], [0], [1], [0, 0, 1, 1], [], []>} : vector<64x96xf32>, vector<96x128xf32>, vector<64x128xf32> -> vector<64x128xf32>
    %60 = arith.truncf %59 : vector<64x128xf32> to vector<64x128xbf16>
    %c1_40 = arith.constant 1 : index
    %c0_41 = arith.constant 0 : index
    %c0_42 = arith.constant 0 : index
    %61 = vector.load %arg6[%c1_40, %c0_41, %c0_42] : memref<5x128x512xbf16, #tpu.memory_space<vmem>>, vector<1x128x512xbf16>
    %62 = vector.shape_cast %61 : vector<1x128x512xbf16> to vector<128x512xbf16>
    %cst_43 = arith.constant dense<0.000000e+00> : vector<64x512xf32>
    %63 = tpu.matmul %60, %62, %cst_43 {dimension_numbers = #tpu.dot_dimension_numbers<[1], [0], [0], [1], [0, 0, 1, 1], [], []>} : vector<64x128xbf16>, vector<128x512xbf16>, vector<64x512xf32> -> vector<64x512xf32>
    %64 = arith.addf %56, %63 : vector<64x512xf32>
    %c2_44 = arith.constant 2 : index
    %c0_45 = arith.constant 0 : index
    %c0_46 = arith.constant 0 : index
    %65 = vector.load %arg5[%c2_44, %c0_45, %c0_46] : memref<5x64x96xf32, #tpu.memory_space<vmem>>, vector<1x64x96xf32>
    %66 = vector.shape_cast %65 : vector<1x64x96xf32> to vector<64x96xf32>
    %cst_47 = arith.constant dense<0.000000e+00> : vector<64x128xf32>
    %67 = tpu.matmul %66, %49, %cst_47 {dimension_numbers = #tpu.dot_dimension_numbers<[1], [0], [0], [1], [0, 0, 1, 1], [], []>} : vector<64x96xf32>, vector<96x128xf32>, vector<64x128xf32> -> vector<64x128xf32>
    %68 = arith.truncf %67 : vector<64x128xf32> to vector<64x128xbf16>
    %c2_48 = arith.constant 2 : index
    %c0_49 = arith.constant 0 : index
    %c0_50 = arith.constant 0 : index
    %69 = vector.load %arg6[%c2_48, %c0_49, %c0_50] : memref<5x128x512xbf16, #tpu.memory_space<vmem>>, vector<1x128x512xbf16>
    %70 = vector.shape_cast %69 : vector<1x128x512xbf16> to vector<128x512xbf16>
    %cst_51 = arith.constant dense<0.000000e+00> : vector<64x512xf32>
    %71 = tpu.matmul %68, %70, %cst_51 {dimension_numbers = #tpu.dot_dimension_numbers<[1], [0], [0], [1], [0, 0, 1, 1], [], []>} : vector<64x128xbf16>, vector<128x512xbf16>, vector<64x512xf32> -> vector<64x512xf32>
    %72 = arith.addf %64, %71 : vector<64x512xf32>
    %c3_52 = arith.constant 3 : index
    %c0_53 = arith.constant 0 : index
    %c0_54 = arith.constant 0 : index
    %73 = vector.load %arg5[%c3_52, %c0_53, %c0_54] : memref<5x64x96xf32, #tpu.memory_space<vmem>>, vector<1x64x96xf32>
    %74 = vector.shape_cast %73 : vector<1x64x96xf32> to vector<64x96xf32>
    %cst_55 = arith.constant dense<0.000000e+00> : vector<64x128xf32>
    %75 = tpu.matmul %74, %49, %cst_55 {dimension_numbers = #tpu.dot_dimension_numbers<[1], [0], [0], [1], [0, 0, 1, 1], [], []>} : vector<64x96xf32>, vector<96x128xf32>, vector<64x128xf32> -> vector<64x128xf32>
    %76 = arith.truncf %75 : vector<64x128xf32> to vector<64x128xbf16>
    %c3_56 = arith.constant 3 : index
    %c0_57 = arith.constant 0 : index
    %c0_58 = arith.constant 0 : index
    %77 = vector.load %arg6[%c3_56, %c0_57, %c0_58] : memref<5x128x512xbf16, #tpu.memory_space<vmem>>, vector<1x128x512xbf16>
    %78 = vector.shape_cast %77 : vector<1x128x512xbf16> to vector<128x512xbf16>
    %cst_59 = arith.constant dense<0.000000e+00> : vector<64x512xf32>
    %79 = tpu.matmul %76, %78, %cst_59 {dimension_numbers = #tpu.dot_dimension_numbers<[1], [0], [0], [1], [0, 0, 1, 1], [], []>} : vector<64x128xbf16>, vector<128x512xbf16>, vector<64x512xf32> -> vector<64x512xf32>
    %80 = arith.addf %72, %79 : vector<64x512xf32>
    %c4_60 = arith.constant 4 : index
    %c0_61 = arith.constant 0 : index
    %c0_62 = arith.constant 0 : index
    %81 = vector.load %arg5[%c4_60, %c0_61, %c0_62] : memref<5x64x96xf32, #tpu.memory_space<vmem>>, vector<1x64x96xf32>
    %82 = vector.shape_cast %81 : vector<1x64x96xf32> to vector<64x96xf32>
    %cst_63 = arith.constant dense<0.000000e+00> : vector<64x128xf32>
    %83 = tpu.matmul %82, %49, %cst_63 {dimension_numbers = #tpu.dot_dimension_numbers<[1], [0], [0], [1], [0, 0, 1, 1], [], []>} : vector<64x96xf32>, vector<96x128xf32>, vector<64x128xf32> -> vector<64x128xf32>
    %84 = arith.truncf %83 : vector<64x128xf32> to vector<64x128xbf16>
    %c4_64 = arith.constant 4 : index
    %c0_65 = arith.constant 0 : index
    %c0_66 = arith.constant 0 : index
    %85 = vector.load %arg6[%c4_64, %c0_65, %c0_66] : memref<5x128x512xbf16, #tpu.memory_space<vmem>>, vector<1x128x512xbf16>
    %86 = vector.shape_cast %85 : vector<1x128x512xbf16> to vector<128x512xbf16>
    %cst_67 = arith.constant dense<0.000000e+00> : vector<64x512xf32>
    %87 = tpu.matmul %84, %86, %cst_67 {dimension_numbers = #tpu.dot_dimension_numbers<[1], [0], [0], [1], [0, 0, 1, 1], [], []>} : vector<64x128xbf16>, vector<128x512xbf16>, vector<64x512xf32> -> vector<64x512xf32>
    %88 = arith.addf %80, %87 : vector<64x512xf32>
    %c0_68 = arith.constant 0 : index
    %c0_69 = arith.constant 0 : index
    %89 = vector.load %arg7[%c0_68, %c0_69] : memref<1x512xf32, #tpu.memory_space<vmem>>, vector<1x512xf32>
    %90 = vector.broadcast %89 : vector<1x512xf32> to vector<64x512xf32>
    %91 = arith.addf %88, %90 : vector<64x512xf32>
    %c0_70 = arith.constant 0 : index
    %c0_71 = arith.constant 0 : index
    %c0_72 = arith.constant 0 : index
    %92 = vector.load %arg8[%c0_70, %c0_71, %c0_72] : memref<2x32x64xf32, #tpu.memory_space<vmem>>, vector<1x32x64xf32>
    %93 = vector.shape_cast %92 : vector<1x32x64xf32> to vector<32x64xf32>
    %cst_73 = arith.constant dense<0.000000e+00> : vector<32x512xf32>
    %94 = tpu.matmul %93, %91, %cst_73 {dimension_numbers = #tpu.dot_dimension_numbers<[1], [0], [0], [1], [0, 0, 1, 1], [], []>} : vector<32x64xf32>, vector<64x512xf32>, vector<32x512xf32> -> vector<32x512xf32>
    %c1_74 = arith.constant 1 : index
    %c0_75 = arith.constant 0 : index
    %c0_76 = arith.constant 0 : index
    %95 = vector.load %arg8[%c1_74, %c0_75, %c0_76] : memref<2x32x64xf32, #tpu.memory_space<vmem>>, vector<1x32x64xf32>
    %96 = vector.shape_cast %95 : vector<1x32x64xf32> to vector<32x64xf32>
    %cst_77 = arith.constant dense<0.000000e+00> : vector<32x512xf32>
    %97 = tpu.matmul %96, %91, %cst_77 {dimension_numbers = #tpu.dot_dimension_numbers<[1], [0], [0], [1], [0, 0, 1, 1], [], []>} : vector<32x64xf32>, vector<64x512xf32>, vector<32x512xf32> -> vector<32x512xf32>
    %98 = arith.maximumf %94, %97 : vector<32x512xf32>
    %99 = vector.extract_strided_slice %98 {offsets = [0, 0], sizes = [32, 256], strides = [1, 1]} : vector<32x512xf32> to vector<32x256xf32>
    %100 = vector.extract_strided_slice %98 {offsets = [0, 256], sizes = [32, 256], strides = [1, 1]} : vector<32x512xf32> to vector<32x256xf32>
    %101 = arith.maximumf %99, %100 : vector<32x256xf32>
    %cst_78 = arith.constant 0.000000e+00 : f32
    %102 = vector.broadcast %cst_78 : f32 to vector<32x256xf32>
    %103 = arith.maximumf %101, %102 : vector<32x256xf32>
    %c0_79 = arith.constant 0 : index
    %c0_80 = arith.constant 0 : index
    %c0_81 = arith.constant 0 : index
    %104 = vector.load %arg9[%c0_79, %c0_80, %c0_81] : memref<4x8x32xf32, #tpu.memory_space<vmem>>, vector<1x8x32xf32>
    %105 = vector.shape_cast %104 : vector<1x8x32xf32> to vector<8x32xf32>
    %cst_82 = arith.constant dense<0.000000e+00> : vector<8x256xf32>
    %106 = tpu.matmul %105, %103, %cst_82 {dimension_numbers = #tpu.dot_dimension_numbers<[1], [0], [0], [1], [0, 0, 1, 1], [], []>} : vector<8x32xf32>, vector<32x256xf32>, vector<8x256xf32> -> vector<8x256xf32>
    %107 = arith.truncf %106 : vector<8x256xf32> to vector<8x256xbf16>
    %c0_83 = arith.constant 0 : index
    %c0_84 = arith.constant 0 : index
    %c0_85 = arith.constant 0 : index
    %108 = vector.load %arg10[%c0_83, %c0_84, %c0_85] : memref<4x256x128xbf16, #tpu.memory_space<vmem>>, vector<1x256x128xbf16>
    %109 = vector.shape_cast %108 : vector<1x256x128xbf16> to vector<256x128xbf16>
    %cst_86 = arith.constant dense<0.000000e+00> : vector<8x128xf32>
    %110 = tpu.matmul %107, %109, %cst_86 {dimension_numbers = #tpu.dot_dimension_numbers<[1], [0], [0], [1], [0, 0, 1, 1], [], []>} : vector<8x256xbf16>, vector<256x128xbf16>, vector<8x128xf32> -> vector<8x128xf32>
    %c1_87 = arith.constant 1 : index
    %c0_88 = arith.constant 0 : index
    %c0_89 = arith.constant 0 : index
    %111 = vector.load %arg9[%c1_87, %c0_88, %c0_89] : memref<4x8x32xf32, #tpu.memory_space<vmem>>, vector<1x8x32xf32>
    %112 = vector.shape_cast %111 : vector<1x8x32xf32> to vector<8x32xf32>
    %cst_90 = arith.constant dense<0.000000e+00> : vector<8x256xf32>
    %113 = tpu.matmul %112, %103, %cst_90 {dimension_numbers = #tpu.dot_dimension_numbers<[1], [0], [0], [1], [0, 0, 1, 1], [], []>} : vector<8x32xf32>, vector<32x256xf32>, vector<8x256xf32> -> vector<8x256xf32>
    %114 = arith.truncf %113 : vector<8x256xf32> to vector<8x256xbf16>
    %c1_91 = arith.constant 1 : index
    %c0_92 = arith.constant 0 : index
    %c0_93 = arith.constant 0 : index
    %115 = vector.load %arg10[%c1_91, %c0_92, %c0_93] : memref<4x256x128xbf16, #tpu.memory_space<vmem>>, vector<1x256x128xbf16>
    %116 = vector.shape_cast %115 : vector<1x256x128xbf16> to vector<256x128xbf16>
    %cst_94 = arith.constant dense<0.000000e+00> : vector<8x128xf32>
    %117 = tpu.matmul %114, %116, %cst_94 {dimension_numbers = #tpu.dot_dimension_numbers<[1], [0], [0], [1], [0, 0, 1, 1], [], []>} : vector<8x256xbf16>, vector<256x128xbf16>, vector<8x128xf32> -> vector<8x128xf32>
    %118 = arith.addf %110, %117 : vector<8x128xf32>
    %c2_95 = arith.constant 2 : index
    %c0_96 = arith.constant 0 : index
    %c0_97 = arith.constant 0 : index
    %119 = vector.load %arg9[%c2_95, %c0_96, %c0_97] : memref<4x8x32xf32, #tpu.memory_space<vmem>>, vector<1x8x32xf32>
    %120 = vector.shape_cast %119 : vector<1x8x32xf32> to vector<8x32xf32>
    %cst_98 = arith.constant dense<0.000000e+00> : vector<8x256xf32>
    %121 = tpu.matmul %120, %103, %cst_98 {dimension_numbers = #tpu.dot_dimension_numbers<[1], [0], [0], [1], [0, 0, 1, 1], [], []>} : vector<8x32xf32>, vector<32x256xf32>, vector<8x256xf32> -> vector<8x256xf32>
    %122 = arith.truncf %121 : vector<8x256xf32> to vector<8x256xbf16>
    %c2_99 = arith.constant 2 : index
    %c0_100 = arith.constant 0 : index
    %c0_101 = arith.constant 0 : index
    %123 = vector.load %arg10[%c2_99, %c0_100, %c0_101] : memref<4x256x128xbf16, #tpu.memory_space<vmem>>, vector<1x256x128xbf16>
    %124 = vector.shape_cast %123 : vector<1x256x128xbf16> to vector<256x128xbf16>
    %cst_102 = arith.constant dense<0.000000e+00> : vector<8x128xf32>
    %125 = tpu.matmul %122, %124, %cst_102 {dimension_numbers = #tpu.dot_dimension_numbers<[1], [0], [0], [1], [0, 0, 1, 1], [], []>} : vector<8x256xbf16>, vector<256x128xbf16>, vector<8x128xf32> -> vector<8x128xf32>
    %126 = arith.addf %118, %125 : vector<8x128xf32>
    %c3_103 = arith.constant 3 : index
    %c0_104 = arith.constant 0 : index
    %c0_105 = arith.constant 0 : index
    %127 = vector.load %arg9[%c3_103, %c0_104, %c0_105] : memref<4x8x32xf32, #tpu.memory_space<vmem>>, vector<1x8x32xf32>
    %128 = vector.shape_cast %127 : vector<1x8x32xf32> to vector<8x32xf32>
    %cst_106 = arith.constant dense<0.000000e+00> : vector<8x256xf32>
    %129 = tpu.matmul %128, %103, %cst_106 {dimension_numbers = #tpu.dot_dimension_numbers<[1], [0], [0], [1], [0, 0, 1, 1], [], []>} : vector<8x32xf32>, vector<32x256xf32>, vector<8x256xf32> -> vector<8x256xf32>
    %130 = arith.truncf %129 : vector<8x256xf32> to vector<8x256xbf16>
    %c3_107 = arith.constant 3 : index
    %c0_108 = arith.constant 0 : index
    %c0_109 = arith.constant 0 : index
    %131 = vector.load %arg10[%c3_107, %c0_108, %c0_109] : memref<4x256x128xbf16, #tpu.memory_space<vmem>>, vector<1x256x128xbf16>
    %132 = vector.shape_cast %131 : vector<1x256x128xbf16> to vector<256x128xbf16>
    %cst_110 = arith.constant dense<0.000000e+00> : vector<8x128xf32>
    %133 = tpu.matmul %130, %132, %cst_110 {dimension_numbers = #tpu.dot_dimension_numbers<[1], [0], [0], [1], [0, 0, 1, 1], [], []>} : vector<8x256xbf16>, vector<256x128xbf16>, vector<8x128xf32> -> vector<8x128xf32>
    %134 = arith.addf %126, %133 : vector<8x128xf32>
    %c0_111 = arith.constant 0 : index
    %c0_112 = arith.constant 0 : index
    %135 = vector.load %arg11[%c0_111, %c0_112] : memref<1x128xf32, #tpu.memory_space<vmem>>, vector<1x128xf32>
    %136 = vector.broadcast %135 : vector<1x128xf32> to vector<8x128xf32>
    %137 = arith.addf %134, %136 : vector<8x128xf32>
    %cst_113 = arith.constant 0.000000e+00 : f32
    %138 = vector.broadcast %cst_113 : f32 to vector<8x128xf32>
    %139 = arith.maximumf %137, %138 : vector<8x128xf32>
    %140 = arith.truncf %139 : vector<8x128xf32> to vector<8x128xbf16>
    %c0_114 = arith.constant 0 : index
    %c0_115 = arith.constant 0 : index
    %141 = vector.load %arg12[%c0_114, %c0_115] : memref<128x128xbf16, #tpu.memory_space<vmem>>, vector<128x128xbf16>
    %cst_116 = arith.constant dense<0.000000e+00> : vector<8x128xf32>
    %142 = tpu.matmul %140, %141, %cst_116 {dimension_numbers = #tpu.dot_dimension_numbers<[1], [0], [0], [1], [0, 0, 1, 1], [], []>} : vector<8x128xbf16>, vector<128x128xbf16>, vector<8x128xf32> -> vector<8x128xf32>
    %c0_117 = arith.constant 0 : index
    %c0_118 = arith.constant 0 : index
    %143 = vector.load %arg13[%c0_117, %c0_118] : memref<1x128xf32, #tpu.memory_space<vmem>>, vector<1x128xf32>
    %144 = vector.broadcast %143 : vector<1x128xf32> to vector<8x128xf32>
    %145 = arith.addf %142, %144 : vector<8x128xf32>
    %146 = tpu.iota {dimensions = array<i32: 1>} : vector<8x128xi32>
    %c10_i32 = arith.constant 10 : i32
    %147 = vector.broadcast %c10_i32 : i32 to vector<8x128xi32>
    %148 = arith.cmpi slt, %146, %147 : vector<8x128xi32>
    %cst_119 = arith.constant -1.000000e+30 : f32
    %149 = vector.broadcast %cst_119 : f32 to vector<8x128xf32>
    %150 = arith.select %148, %145, %149 : vector<8x128xi1>, vector<8x128xf32>
    %cst_120 = arith.constant dense<0xFF800000> : vector<8xf32>
    %151 = vector.multi_reduction <maximumf>, %150, %cst_120 [1] : vector<8x128xf32> to vector<8xf32>
    %152 = vector.shape_cast %151 : vector<8xf32> to vector<8x1xf32>
    %153 = vector.broadcast %152 : vector<8x1xf32> to vector<8x128xf32>
    %154 = arith.subf %150, %153 : vector<8x128xf32>
    %155 = math.exp %154 : vector<8x128xf32>
    %cst_121 = arith.constant dense<0.000000e+00> : vector<8xf32>
    %156 = vector.multi_reduction <add>, %155, %cst_121 [1] : vector<8x128xf32> to vector<8xf32>
    %157 = vector.shape_cast %156 : vector<8xf32> to vector<8x1xf32>
    %158 = math.log %157 : vector<8x1xf32>
    %159 = vector.broadcast %152 : vector<8x1xf32> to vector<8x128xf32>
    %160 = arith.subf %145, %159 : vector<8x128xf32>
    %161 = vector.broadcast %158 : vector<8x1xf32> to vector<8x128xf32>
    %162 = arith.subf %160, %161 : vector<8x128xf32>
    %cst_122 = arith.constant 0.000000e+00 : f32
    %163 = vector.broadcast %cst_122 : f32 to vector<8x128xf32>
    %164 = arith.select %148, %162, %163 : vector<8x128xi1>, vector<8x128xf32>
    %c0_123 = arith.constant 0 : index
    %c0_124 = arith.constant 0 : index
    %165 = vector.load %arg14[%c0_123, %c0_124] : memref<8x128xf32, #tpu.memory_space<vmem>>, vector<8x128xf32>
    tpu.vector_store %arg14[%c0_123, %c0_124], %164 {strides = array<i32>} : memref<8x128xf32, #tpu.memory_space<vmem>>, vector<8x128xf32>,
    return
  }
  func.func @transform_0(%arg0: i32) -> (i32, i32, i32) {
    %c0_i32 = arith.constant 0 : i32
    %c0_i32_0 = arith.constant 0 : i32
    %c0_i32_1 = arith.constant 0 : i32
    return %arg0, %c0_i32, %c0_i32_0 : i32, i32, i32
  }
  func.func @transform_1(%arg0: i32) -> (i32, i32, i32) {
    %c0_i32 = arith.constant 0 : i32
    %c0_i32_0 = arith.constant 0 : i32
    %c0_i32_1 = arith.constant 0 : i32
    %c0_i32_2 = arith.constant 0 : i32
    return %c0_i32, %c0_i32_0, %c0_i32_1 : i32, i32, i32
  }
  func.func @transform_2(%arg0: i32) -> (i32, i32) {
    %c0_i32 = arith.constant 0 : i32
    %c0_i32_0 = arith.constant 0 : i32
    %c0_i32_1 = arith.constant 0 : i32
    return %c0_i32, %c0_i32_0 : i32, i32
  }
  func.func @transform_3(%arg0: i32) -> (i32, i32, i32) {
    %c0_i32 = arith.constant 0 : i32
    %c0_i32_0 = arith.constant 0 : i32
    %c0_i32_1 = arith.constant 0 : i32
    %c0_i32_2 = arith.constant 0 : i32
    return %c0_i32, %c0_i32_0, %c0_i32_1 : i32, i32, i32
  }
  func.func @transform_4(%arg0: i32) -> (i32, i32, i32) {
    %c0_i32 = arith.constant 0 : i32
    %c0_i32_0 = arith.constant 0 : i32
    %c0_i32_1 = arith.constant 0 : i32
    %c0_i32_2 = arith.constant 0 : i32
    return %c0_i32, %c0_i32_0, %c0_i32_1 : i32, i32, i32
  }
  func.func @transform_5(%arg0: i32) -> (i32, i32, i32) {
    %c0_i32 = arith.constant 0 : i32
    %c0_i32_0 = arith.constant 0 : i32
    %c0_i32_1 = arith.constant 0 : i32
    %c0_i32_2 = arith.constant 0 : i32
    return %c0_i32, %c0_i32_0, %c0_i32_1 : i32, i32, i32
  }
  func.func @transform_6(%arg0: i32) -> (i32, i32) {
    %c0_i32 = arith.constant 0 : i32
    %c0_i32_0 = arith.constant 0 : i32
    %c0_i32_1 = arith.constant 0 : i32
    return %c0_i32, %c0_i32_0 : i32, i32
  }
  func.func @transform_7(%arg0: i32) -> (i32, i32, i32) {
    %c0_i32 = arith.constant 0 : i32
    %c0_i32_0 = arith.constant 0 : i32
    %c0_i32_1 = arith.constant 0 : i32
    %c0_i32_2 = arith.constant 0 : i32
    return %c0_i32, %c0_i32_0, %c0_i32_1 : i32, i32, i32
  }
  func.func @transform_8(%arg0: i32) -> (i32, i32, i32) {
    %c0_i32 = arith.constant 0 : i32
    %c0_i32_0 = arith.constant 0 : i32
    %c0_i32_1 = arith.constant 0 : i32
    %c0_i32_2 = arith.constant 0 : i32
    return %c0_i32, %c0_i32_0, %c0_i32_1 : i32, i32, i32
  }
  func.func @transform_9(%arg0: i32) -> (i32, i32, i32) {
    %c0_i32 = arith.constant 0 : i32
    %c0_i32_0 = arith.constant 0 : i32
    %c0_i32_1 = arith.constant 0 : i32
    %c0_i32_2 = arith.constant 0 : i32
    return %c0_i32, %c0_i32_0, %c0_i32_1 : i32, i32, i32
  }
  func.func @transform_10(%arg0: i32) -> (i32, i32) {
    %c0_i32 = arith.constant 0 : i32
    %c0_i32_0 = arith.constant 0 : i32
    %c0_i32_1 = arith.constant 0 : i32
    return %c0_i32, %c0_i32_0 : i32, i32
  }
  func.func @transform_11(%arg0: i32) -> (i32, i32) {
    %c0_i32 = arith.constant 0 : i32
    %c0_i32_0 = arith.constant 0 : i32
    %c0_i32_1 = arith.constant 0 : i32
    return %c0_i32, %c0_i32_0 : i32, i32
  }
  func.func @transform_12(%arg0: i32) -> (i32, i32) {
    %c0_i32 = arith.constant 0 : i32
    %c0_i32_0 = arith.constant 0 : i32
    %c0_i32_1 = arith.constant 0 : i32
    return %c0_i32, %c0_i32_0 : i32, i32
  }
  func.func @transform_13(%arg0: i32) -> (i32, i32) {
    %c0_i32 = arith.constant 0 : i32
    %c0_i32_0 = arith.constant 0 : i32
    return %arg0, %c0_i32 : i32, i32
  }
}

</mosaic_0001>

<llo_original>
// kernel: cnn_mnist_forward.1
$region0: #{cnn_mnist_forward.1}
  #allocation0 [shape = 'u32[]', space=smem, size = 0x4, offset = 0x4, fixed_abs, tag = 'smem constant byte address 0x4 - core index']
  #allocation1 [shape = 'u32[144,128]{1,0:T(1,128)}', space=vmem, size = 0x12000, scoped, tag = 'internal scratch']
  %s0 = inlined_call_operand.vmem [shape: f32[8,28,28], index: 0, kind: input, shape index: {}]
  %s1 = inlined_call_operand.hbm [shape: bf16[5,28,256], index: 1, kind: input, shape index: {}]
  %s2 = inlined_call_operand.vmem [shape: f32[1,256], index: 2, kind: input, shape index: {}]
  %s3 = inlined_call_operand.hbm [shape: f32[2,96,192], index: 3, kind: input, shape index: {}]
  %s4 = inlined_call_operand.hbm [shape: f32[5,64,96], index: 4, kind: input, shape index: {}]
  %s5 = inlined_call_operand.hbm [shape: bf16[5,128,512], index: 5, kind: input, shape index: {}]
  %s6 = inlined_call_operand.vmem [shape: f32[1,512], index: 6, kind: input, shape index: {}]
  %s7 = inlined_call_operand.hbm [shape: f32[2,32,64], index: 7, kind: input, shape index: {}]
  %s8 = inlined_call_operand.vmem [shape: f32[4,8,32], index: 8, kind: input, shape index: {}]
  %s9 = inlined_call_operand.vmem [shape: bf16[4,256,128], index: 9, kind: input, shape index: {}]
  %s10 = inlined_call_operand.vmem [shape: f32[1,128], index: 10, kind: input, shape index: {}]
  %s11 = inlined_call_operand.hbm [shape: bf16[128,128], index: 11, kind: input, shape index: {}]
  %s12 = inlined_call_operand.vmem [shape: f32[1,128], index: 12, kind: input, shape index: {}]
  %s13 = inlined_call_operand.vmem [shape: f32[8,128], index: 13, kind: output, shape index: {}]
  %s14 = sld [smem:[#allocation0]]
  $region86: #{cnn_mnist_forward.1} parent=0
    _
  %s16 = ssub.s32 1, %s14
  %s17 = scalar_select 0, %s16, %s14
  $region1: #{cnn_mnist_forward.1} parent=0
    #allocation2 [shape = 'u8[81920]{0}', space=vmem, size = 0x14000, scoped, tag = 'input window, operand 1, single buffered']
    #allocation3 [shape = 's32[1]{0}', space=sflag, size = 0x4, scoped, tag = 'scoped memory for cnn_mnist_forward.1']
    #allocation4 [shape = 'u8[196608]{0}', space=vmem, size = 0x30000, scoped, tag = 'input window, operand 3, single buffered']
    #allocation5 [shape = 's32[1]{0}', space=sflag, size = 0x4, scoped, tag = 'scoped memory for cnn_mnist_forward.1']
    #allocation6 [shape = 'u8[163840]{0}', space=vmem, size = 0x28000, scoped, tag = 'input window, operand 4, single buffered']
    #allocation7 [shape = 'u8[655360]{0}', space=vmem, size = 0xa0000, scoped, tag = 'input window, operand 5, single buffered']
    #allocation8 [shape = 's32[1]{0}', space=sflag, size = 0x4, scoped, tag = 'scoped memory for cnn_mnist_forward.1']
    #allocation9 [shape = 'u8[32768]{0}', space=vmem, size = 0x8000, scoped, tag = 'input window, operand 7, single buffered']
    #allocation10 [shape = 'u8[32768]{0}', space=vmem, size = 0x8000, scoped, tag = 'input window, operand 11, single buffered']
    #allocation11 [shape = 's32[1]{0}', space=sflag, size = 0x4, scoped, tag = 'scoped memory for cnn_mnist_forward.1']
    %18 = vsyncpa [#allocation3], 0
    %19 = vsyncpa [#allocation5], 0
    %20 = vsyncpa [#allocation8], 0
    %21 = vsyncpa [#allocation11], 0
    // Predicated region
    $region2: #{cnn_mnist_forward.1} parent=1 // pred_check
      _
    $region3: #{cnn_mnist_forward.1} parent=1 // pred_check_branch
      %23 = sbr.rel (0) target = $region5
    $region4: #{cnn_mnist_forward.1} parent=1 // pred_region
      _
    $region5: #{cnn_mnist_forward.1} parent=1 // pred_fallthru
      _
    // Predicated region
    $region6: #{cnn_mnist_forward.1} parent=1 // pred_check
      _
    $region7: #{cnn_mnist_forward.1} parent=1 // pred_check_branch
      %25 = sbr.rel (0) target = $region9
    $region8: #{cnn_mnist_forward.1} parent=1 // pred_region
      %s27 = ssub.s32 2560, 2560
      %28 = vsyncadd [#allocation3], %s27
      %s29 = sshll.u32 [#allocation2], 4
      %s30 = int_to_ptr.vmem [resolvable:$true] %s29
      %35 = dma.hbm_to_vmem [thread:$0]  %s1, 2560, %s30, [#allocation3], 128, 128, 8
    $region9: #{cnn_mnist_forward.1} parent=1 // pred_fallthru
      _
    // Predicated region
    $region10: #{cnn_mnist_forward.1} parent=1 // pred_check
      _
    $region11: #{cnn_mnist_forward.1} parent=1 // pred_check_branch
      %37 = sbr.rel (0) target = $region13
    $region12: #{cnn_mnist_forward.1} parent=1 // pred_region
      _
    $region13: #{cnn_mnist_forward.1} parent=1 // pred_fallthru
      _
    // Predicated region
    $region14: #{cnn_mnist_forward.1} parent=1 // pred_check
      _
    $region15: #{cnn_mnist_forward.1} parent=1 // pred_check_branch
      %39 = sbr.rel (0) target = $region17
    $region16: #{cnn_mnist_forward.1} parent=1 // pred_region
      %s41 = ssub.s32 6144, 6144
      %42 = vsyncadd [#allocation5], %s41
      %s43 = sshll.u32 [#allocation4], 4
      %s44 = int_to_ptr.vmem [resolvable:$true] %s43
      %49 = dma.hbm_to_vmem [thread:$0]  %s3, 6144, %s44, [#allocation5], 256, 256, 16
    $region17: #{cnn_mnist_forward.1} parent=1 // pred_fallthru
      _
    // Predicated region
    $region18: #{cnn_mnist_forward.1} parent=1 // pred_check
      _
    $region19: #{cnn_mnist_forward.1} parent=1 // pred_check_branch
      %51 = sbr.rel (0) target = $region21
    $region20: #{cnn_mnist_forward.1} parent=1 // pred_region
      %s53 = ssub.s32 5120, 5120
      %54 = vsyncadd [#allocation5], %s53
      %s55 = sshll.u32 [#allocation6], 4
      %s56 = int_to_ptr.vmem [resolvable:$true] %s55
      %61 = dma.hbm_to_vmem [thread:$0]  %s4, 5120, %s56, [#allocation5], 128, 128, 8
    $region21: #{cnn_mnist_forward.1} parent=1 // pred_fallthru
      _
    // Predicated region
    $region22: #{cnn_mnist_forward.1} parent=1 // pred_check
      _
    $region23: #{cnn_mnist_forward.1} parent=1 // pred_check_branch
      %63 = sbr.rel (0) target = $region25
    $region24: #{cnn_mnist_forward.1} parent=1 // pred_region
      %s65 = ssub.s32 20480, 20480
      %66 = vsyncadd [#allocation8], %s65
      %s67 = sshll.u32 [#allocation7], 4
      %s68 = int_to_ptr.vmem [resolvable:$true] %s67
      %73 = dma.hbm_to_vmem [thread:$0]  %s5, 20480, %s68, [#allocation8], 256, 256, 16
    $region25: #{cnn_mnist_forward.1} parent=1 // pred_fallthru
      _
    // Predicated region
    $region26: #{cnn_mnist_forward.1} parent=1 // pred_check
      _
    $region27: #{cnn_mnist_forward.1} parent=1 // pred_check_branch
      %75 = sbr.rel (0) target = $region29
    $region28: #{cnn_mnist_forward.1} parent=1 // pred_region
      _
    $region29: #{cnn_mnist_forward.1} parent=1 // pred_fallthru
      _
    // Predicated region
    $region30: #{cnn_mnist_forward.1} parent=1 // pred_check
      _
    $region31: #{cnn_mnist_forward.1} parent=1 // pred_check_branch
      %77 = sbr.rel (0) target = $region33
    $region32: #{cnn_mnist_forward.1} parent=1 // pred_region
      %s79 = ssub.s32 1024, 1024
      %80 = vsyncadd [#allocation8], %s79
      %s81 = sshll.u32 [#allocation9], 4
      %s82 = int_to_ptr.vmem [resolvable:$true] %s81
      %87 = dma.hbm_to_vmem [thread:$0]  %s7, 1024, %s82, [#allocation8], 128, 128, 8
    $region33: #{cnn_mnist_forward.1} parent=1 // pred_fallthru
      _
    // Predicated region
    $region34: #{cnn_mnist_forward.1} parent=1 // pred_check
      _
    $region35: #{cnn_mnist_forward.1} parent=1 // pred_check_branch
      %89 = sbr.rel (0) target = $region37
    $region36: #{cnn_mnist_forward.1} parent=1 // pred_region
      _
    $region37: #{cnn_mnist_forward.1} parent=1 // pred_fallthru
      _
    // Predicated region
    $region38: #{cnn_mnist_forward.1} parent=1 // pred_check
      _
    $region39: #{cnn_mnist_forward.1} parent=1 // pred_check_branch
      %91 = sbr.rel (0) target = $region41
    $region40: #{cnn_mnist_forward.1} parent=1 // pred_region
      _
    $region41: #{cnn_mnist_forward.1} parent=1 // pred_fallthru
      _
    // Predicated region
    $region42: #{cnn_mnist_forward.1} parent=1 // pred_check
      _
    $region43: #{cnn_mnist_forward.1} parent=1 // pred_check_branch
      %93 = sbr.rel (0) target = $region45
    $region44: #{cnn_mnist_forward.1} parent=1 // pred_region
      _
    $region45: #{cnn_mnist_forward.1} parent=1 // pred_fallthru
      _
    // Predicated region
    $region46: #{cnn_mnist_forward.1} parent=1 // pred_check
      _
    $region47: #{cnn_mnist_forward.1} parent=1 // pred_check_branch
      %95 = sbr.rel (0) target = $region49
    $region48: #{cnn_mnist_forward.1} parent=1 // pred_region
      %s97 = ssub.s32 1024, 1024
      %98 = vsyncadd [#allocation11], %s97
      %s99 = sshll.u32 [#allocation10], 4
      %s100 = int_to_ptr.vmem [resolvable:$true] %s99
      %105 = dma.hbm_to_vmem [thread:$0]  %s11, 1024, %s100, [#allocation11], 64, 64, 4
    $region49: #{cnn_mnist_forward.1} parent=1 // pred_fallthru
      _
    // Predicated region
    $region50: #{cnn_mnist_forward.1} parent=1 // pred_check
      _
    $region51: #{cnn_mnist_forward.1} parent=1 // pred_check_branch
      %107 = sbr.rel (0) target = $region53
    $region52: #{cnn_mnist_forward.1} parent=1 // pred_region
      _
    $region53: #{cnn_mnist_forward.1} parent=1 // pred_fallthru
      _
    // Predicated region
    $region54: #{cnn_mnist_forward.1} parent=1 // pred_check
      _
    $region55: #{cnn_mnist_forward.1} parent=1 // pred_check_branch
      %109 = sbr.rel (0) target = $region57
    $region56: #{cnn_mnist_forward.1} parent=1 // pred_region
      %110 = dma.done [#allocation3], 2560
    $region57: #{cnn_mnist_forward.1} parent=1 // pred_fallthru
      _
    // Predicated region
    $region58: #{cnn_mnist_forward.1} parent=1 // pred_check
      _
    $region59: #{cnn_mnist_forward.1} parent=1 // pred_check_branch
      %112 = sbr.rel (0) target = $region61
    $region60: #{cnn_mnist_forward.1} parent=1 // pred_region
      %113 = dma.done [#allocation5], 6144
    $region61: #{cnn_mnist_forward.1} parent=1 // pred_fallthru
      _
    // Predicated region
    $region62: #{cnn_mnist_forward.1} parent=1 // pred_check
      _
    $region63: #{cnn_mnist_forward.1} parent=1 // pred_check_branch
      %115 = sbr.rel (0) target = $region65
    $region64: #{cnn_mnist_forward.1} parent=1 // pred_region
      %116 = dma.done [#allocation5], 5120
    $region65: #{cnn_mnist_forward.1} parent=1 // pred_fallthru
      _
    // Predicated region
    $region66: #{cnn_mnist_forward.1} parent=1 // pred_check
      _
    $region67: #{cnn_mnist_forward.1} parent=1 // pred_check_branch
      %118 = sbr.rel (0) target = $region69
    $region68: #{cnn_mnist_forward.1} parent=1 // pred_region
      %119 = dma.done [#allocation8], 20480
    $region69: #{cnn_mnist_forward.1} parent=1 // pred_fallthru
      _
    // Predicated region
    $region70: #{cnn_mnist_forward.1} parent=1 // pred_check
      _
    $region71: #{cnn_mnist_forward.1} parent=1 // pred_check_branch
      %121 = sbr.rel (0) target = $region73
    $region72: #{cnn_mnist_forward.1} parent=1 // pred_region
      %122 = dma.done [#allocation8], 1024
    $region73: #{cnn_mnist_forward.1} parent=1 // pred_fallthru
      _
    // Predicated region
    $region74: #{cnn_mnist_forward.1} parent=1 // pred_check
      _
    $region75: #{cnn_mnist_forward.1} parent=1 // pred_check_branch
      %124 = sbr.rel (0) target = $region77
    $region76: #{cnn_mnist_forward.1} parent=1 // pred_region
      %125 = dma.done [#allocation11], 1024
    $region77: #{cnn_mnist_forward.1} parent=1 // pred_fallthru
      _
    %v127 = vld [vmem:[%s0] sm:$0xff]
    %v128 = vld [vmem:[%s0 + $0x8] sm:$0xff]
    %v129 = vld [vmem:[%s0 + $0x10] sm:$0xff]
    %v130 = vld [vmem:[%s0 + $0x18] sm:$0xf]
    %v131 = vld [vmem:[%s0 + $0x20] sm:$0xff]
    %v132 = vld [vmem:[%s0 + $0x28] sm:$0xff]
    %v133 = vld [vmem:[%s0 + $0x30] sm:$0xff]
    %v134 = vld [vmem:[%s0 + $0x38] sm:$0xf]
    %v135 = vld [vmem:[%s0 + $0x40] sm:$0xff]
    %v136 = vld [vmem:[%s0 + $0x48] sm:$0xff]
    %v137 = vld [vmem:[%s0 + $0x50] sm:$0xff]
    %v138 = vld [vmem:[%s0 + $0x58] sm:$0xf]
    %v139 = vld [vmem:[%s0 + $0x60] sm:$0xff]
    %v140 = vld [vmem:[%s0 + $0x68] sm:$0xff]
    %v141 = vld [vmem:[%s0 + $0x70] sm:$0xff]
    %v142 = vld [vmem:[%s0 + $0x78] sm:$0xf]
    %v143 = vld [vmem:[%s0 + $0x80] sm:$0xff]
    %v144 = vld [vmem:[%s0 + $0x88] sm:$0xff]
    %v145 = vld [vmem:[%s0 + $0x90] sm:$0xff]
    %v146 = vld [vmem:[%s0 + $0x98] sm:$0xf]
    %v147 = vld [vmem:[%s0 + $0xa0] sm:$0xff]
    %v148 = vld [vmem:[%s0 + $0xa8] sm:$0xff]
    %v149 = vld [vmem:[%s0 + $0xb0] sm:$0xff]
    %v150 = vld [vmem:[%s0 + $0xb8] sm:$0xf]
    %v151 = vld [vmem:[%s0 + $0xc0] sm:$0xff]
    %v152 = vld [vmem:[%s0 + $0xc8] sm:$0xff]
    %v153 = vld [vmem:[%s0 + $0xd0] sm:$0xff]
    %v154 = vld [vmem:[%s0 + $0xd8] sm:$0xf]
    %v155 = vld [vmem:[%s0 + $0xe0] sm:$0xff]
    %v156 = vld [vmem:[%s0 + $0xe8] sm:$0xff]
    %v157 = vld [vmem:[%s0 + $0xf0] sm:$0xff]
    %v158 = vld [vmem:[%s0 + $0xf8] sm:$0xf]
    %v159 = vpack.c.bf16 %v128, %v127
    %v160 = vpack.c.bf16 %v131, %v129
    %v161 = vpack.c.bf16 %v133, %v132
    %v162 = vpack.c.bf16 %v136, %v135
    %v163 = vpack.c.bf16 %v139, %v137
    %v164 = vpack.c.bf16 %v141, %v140
    %v165 = vpack.c.bf16 %v144, %v143
    %v166 = vpack.c.bf16 %v147, %v145
    %v167 = vpack.c.bf16 %v149, %v148
    %v168 = vpack.c.bf16 %v152, %v151
    %v169 = vpack.c.bf16 %v155, %v153
    %v170 = vpack.c.bf16 %v157, %v156
    %v171 = vld [vmem:[#allocation2] sm:$0xff]
    %v172 = vld [vmem:[#allocation2 + $0x8] sm:$0xff]
    %v173 = vld [vmem:[#allocation2 + $0x10] sm:$0xff]
    %v174 = vld [vmem:[#allocation2 + $0x18] sm:$0x33]
    %vm207 = vcmask 1046528
    %v208 = vrot.slane %v127, 1
    %v209 = vrot.slane %v128, 1
    %v210 = vsel %vm207, %v208, %v209
    %v211 = vrot.slane %v129, 1
    %v212 = vsel %vm207, %v209, %v211
    %v213 = vrot.slane %v130, 1
    %v214 = vsel %vm207, %v211, %v213
    %v215 = vrot.slane %v131, 1
    %v216 = vrot.slane %v132, 1
    %v217 = vsel %vm207, %v215, %v216
    %v218 = vrot.slane %v133, 1
    %v219 = vsel %vm207, %v216, %v218
    %v220 = vrot.slane %v134, 1
    %v221 = vsel %vm207, %v218, %v220
    %v222 = vrot.slane %v135, 1
    %v223 = vrot.slane %v136, 1
    %v224 = vsel %vm207, %v222, %v223
    %v225 = vrot.slane %v137, 1
    %v226 = vsel %vm207, %v223, %v225
    %v227 = vrot.slane %v138, 1
    %v228 = vsel %vm207, %v225, %v227
    %v229 = vrot.slane %v139, 1
    %v230 = vrot.slane %v140, 1
    %v231 = vsel %vm207, %v229, %v230
    %v232 = vrot.slane %v141, 1
    %v233 = vsel %vm207, %v230, %v232
    %v234 = vrot.slane %v142, 1
    %v235 = vsel %vm207, %v232, %v234
    %v236 = vrot.slane %v143, 1
    %v237 = vrot.slane %v144, 1
    %v238 = vsel %vm207, %v236, %v237
    %v239 = vrot.slane %v145, 1
    %v240 = vsel %vm207, %v237, %v239
    %v241 = vrot.slane %v146, 1
    %v242 = vsel %vm207, %v239, %v241
    %v243 = vrot.slane %v147, 1
    %v244 = vrot.slane %v148, 1
    %v245 = vsel %vm207, %v243, %v244
    %v246 = vrot.slane %v149, 1
    %v247 = vsel %vm207, %v244, %v246
    %v248 = vrot.slane %v150, 1
    %v249 = vsel %vm207, %v246, %v248
    %v250 = vrot.slane %v151, 1
    %v251 = vrot.slane %v152, 1
    %v252 = vsel %vm207, %v250, %v251
    %v253 = vrot.slane %v153, 1
    %v254 = vsel %vm207, %v251, %v253
    %v255 = vrot.slane %v154, 1
    %v256 = vsel %vm207, %v253, %v255
    %v257 = vrot.slane %v155, 1
    %v258 = vrot.slane %v156, 1
    %v259 = vsel %vm207, %v257, %v258
    %v260 = vrot.slane %v157, 1
    %v261 = vsel %vm207, %v258, %v260
    %v262 = vrot.slane %v158, 1
    %v263 = vsel %vm207, %v260, %v262
    %v288 = vpack.c.bf16 %v212, %v210
    %v289 = vpack.c.bf16 %v217, %v214
    %v290 = vpack.c.bf16 %v221, %v219
    %v291 = vpack.c.bf16 %v226, %v224
    %v292 = vpack.c.bf16 %v231, %v228
    %v293 = vpack.c.bf16 %v235, %v233
    %v294 = vpack.c.bf16 %v240, %v238
    %v295 = vpack.c.bf16 %v245, %v242
    %v296 = vpack.c.bf16 %v249, %v247
    %v297 = vpack.c.bf16 %v254, %v252
    %v298 = vpack.c.bf16 %v259, %v256
    %v299 = vpack.c.bf16 %v263, %v261
    %s300 = scalar_lea.vmem [#allocation2], 32
    %v301 = vld [vmem:[%s300] sm:$0xff]
    %v302 = vld [vmem:[%s300 + $0x8] sm:$0xff]
    %v303 = vld [vmem:[%s300 + $0x10] sm:$0xff]
    %v304 = vld [vmem:[%s300 + $0x18] sm:$0x33]
    %v309 = vunpack.c.l.b16 %v301
    %v310 = vunpack.c.h.b16 %v301
    %v311 = vunpack.c.l.b16 %v302
    %v312 = vunpack.c.h.b16 %v302
    %v313 = vunpack.c.l.b16 %v303
    %v314 = vunpack.c.h.b16 %v303
    %v315 = vunpack.c.l.b16 %v304
    %v316 = vunpack.c.h.b16 %v304
    %v317 = vpack.c.b16 %v311, %v309
    %v318 = vpack.c.b16 %v312, %v310
    %v319 = vpack.c.b16 %v315, %v313
    %v320 = vpack.c.b16 %v316, %v314
    %vm323 = vcmask 228352
    %v325 = vsel %vm323, %v288, 0
    %v328 = vsel %vm323, %v289, 0
    %v331 = vsel %vm323, %v290, 0
    %v334 = vsel %vm323, %v291, 0
    %v337 = vsel %vm323, %v292, 0
    %v340 = vsel %vm323, %v293, 0
    %v343 = vsel %vm323, %v294, 0
    %v346 = vsel %vm323, %v295, 0
    %v349 = vsel %vm323, %v296, 0
    %v352 = vsel %vm323, %v297, 0
    %v355 = vsel %vm323, %v298, 0
    %v358 = vsel %vm323, %v299, 0
    %vm360 = vcmask 1045504
    %v362 = vsel %vm360, %v319, 0
    %v365 = vsel %vm360, %v320, 0
    %367 = vmatprep.subr.bf16.mxu0 0
    %368 = vmatpush1.bf16.msra.mxu0 0
    %369 = vmatprep.subr.bf16.mxu0 0
    %370 = vmatpush1.bf16.msra.mxu0 0
    %371 = vmatprep.subr.bf16.mxu0 0
    %372 = vmatpush1.bf16.msra.mxu0 0
    %373 = vmatprep.subr.bf16.mxu0 0
    %374 = vmatpush1.bf16.msra.mxu0 0
    %375 = vmatprep.subr.bf16.mxu0 0
    %376 = vmatpush1.bf16.msra.mxu0 0
    %377 = vmatprep.subr.bf16.mxu0 0
    %378 = vmatpush1.bf16.msra.mxu0 0
    %379 = vmatprep.subr.bf16.mxu0 %v365
    %380 = vmatpush1.bf16.msra.mxu0 %v362
    %381 = vmatprep.subr.bf16.mxu0 %v318
    %382 = vmatpush1.bf16.msra.mxu0 %v317
    %383 = vmatprep.subr.bf16.mxu0 0
    %384 = vmatpush2.bf16.msra.mxu0 0
    %385 = vmatprep.subr.bf16.mxu0 0
    %386 = vmatpush2.bf16.msra.mxu0 0
    %387 = vmatprep.subr.bf16.mxu0 0
    %388 = vmatpush2.bf16.msra.mxu0 0
    %389 = vmatprep.subr.bf16.mxu0 0
    %390 = vmatpush2.bf16.msra.mxu0 0
    %391 = vmatprep.subr.bf16.mxu0 0
    %392 = vmatpush2.bf16.msra.mxu0 0
    %393 = vmatprep.subr.bf16.mxu0 0
    %394 = vmatpush2.bf16.msra.mxu0 0
    %395 = vmatprep.subr.bf16.mxu0 0
    %396 = vmatpush2.bf16.msra.mxu0 0
    %397 = vmatprep.subr.bf16.mxu0 0
    %398 = vmatpush2.bf16.msra.mxu0 0
    %399 = vmatprep.mubr.bf16.mxu0 0
    %400 = vmatmul.mubr.bf16.gmra.mxu0 %v325
    %v401 = vpop.f32.mrf.mxu0
    %v402 = vadd.f32 0.0, %v401
    %v403 = vpop.f32.mrf.mxu0
    %v404 = vadd.f32 0.0, %v403
    %v405 = vpop.f32.mrf.mxu0
    %v406 = vadd.f32 0.0, %v405
    %v407 = vpop.f32.mrf.mxu0
    %v408 = vadd.f32 0.0, %v407
    %409 = vmatprep.mubr.bf16.mxu0 0
    %410 = vmatmul.mubr.bf16.gmra.mxu0 %v328
    %v411 = vpop.f32.mrf.mxu0
    %v412 = vadd.f32 0.0, %v411
    %v413 = vpop.f32.mrf.mxu0
    %v414 = vadd.f32 0.0, %v413
    %v415 = vpop.f32.mrf.mxu0
    %v416 = vadd.f32 0.0, %v415
    %v417 = vpop.f32.mrf.mxu0
    %v418 = vadd.f32 0.0, %v417
    %419 = vmatprep.mubr.bf16.mxu0 0
    %420 = vmatmul.mubr.bf16.gmra.mxu0 %v331
    %v421 = vpop.f32.mrf.mxu0
    %v422 = vadd.f32 0.0, %v421
    %v423 = vpop.f32.mrf.mxu0
    %v424 = vadd.f32 0.0, %v423
    %v425 = vpop.f32.mrf.mxu0
    %v426 = vadd.f32 0.0, %v425
    %v427 = vpop.f32.mrf.mxu0
    %v428 = vadd.f32 0.0, %v427
    %429 = vmatprep.mubr.bf16.mxu0 0
    %430 = vmatmul.mubr.bf16.gmra.mxu0 %v334
    %v431 = vpop.f32.mrf.mxu0
    %v432 = vadd.f32 0.0, %v431
    %v433 = vpop.f32.mrf.mxu0
    %v434 = vadd.f32 0.0, %v433
    %v435 = vpop.f32.mrf.mxu0
    %v436 = vadd.f32 0.0, %v435
    %v437 = vpop.f32.mrf.mxu0
    %v438 = vadd.f32 0.0, %v437
    %439 = vmatprep.mubr.bf16.mxu0 0
    %440 = vmatmul.mubr.bf16.gmra.mxu0 %v337
    %v441 = vpop.f32.mrf.mxu0
    %v442 = vadd.f32 0.0, %v441
    %v443 = vpop.f32.mrf.mxu0
    %v444 = vadd.f32 0.0, %v443
    %v445 = vpop.f32.mrf.mxu0
    %v446 = vadd.f32 0.0, %v445
    %v447 = vpop.f32.mrf.mxu0
    %v448 = vadd.f32 0.0, %v447
    %449 = vmatprep.mubr.bf16.mxu0 0
    %450 = vmatmul.mubr.bf16.gmra.mxu0 %v340
    %v451 = vpop.f32.mrf.mxu0
    %v452 = vadd.f32 0.0, %v451
    %v453 = vpop.f32.mrf.mxu0
    %v454 = vadd.f32 0.0, %v453
    %v455 = vpop.f32.mrf.mxu0
    %v456 = vadd.f32 0.0, %v455
    %v457 = vpop.f32.mrf.mxu0
    %v458 = vadd.f32 0.0, %v457
    %459 = vmatprep.mubr.bf16.mxu0 0
    %460 = vmatmul.mubr.bf16.gmra.mxu0 %v343
    %v461 = vpop.f32.mrf.mxu0
    %v462 = vadd.f32 0.0, %v461
    %v463 = vpop.f32.mrf.mxu0
    %v464 = vadd.f32 0.0, %v463
    %v465 = vpop.f32.mrf.mxu0
    %v466 = vadd.f32 0.0, %v465
    %v467 = vpop.f32.mrf.mxu0
    %v468 = vadd.f32 0.0, %v467
    %469 = vmatprep.mubr.bf16.mxu0 0
    %470 = vmatmul.mubr.bf16.gmra.mxu0 %v346
    %v471 = vpop.f32.mrf.mxu0
    %v472 = vadd.f32 0.0, %v471
    %v473 = vpop.f32.mrf.mxu0
    %v474 = vadd.f32 0.0, %v473
    %v475 = vpop.f32.mrf.mxu0
    %v476 = vadd.f32 0.0, %v475
    %v477 = vpop.f32.mrf.mxu0
    %v478 = vadd.f32 0.0, %v477
    %479 = vmatprep.mubr.bf16.mxu0 0
    %480 = vmatmul.mubr.bf16.gmra.mxu0 %v349
    %v481 = vpop.f32.mrf.mxu0
    %v482 = vadd.f32 0.0, %v481
    %v483 = vpop.f32.mrf.mxu0
    %v484 = vadd.f32 0.0, %v483
    %v485 = vpop.f32.mrf.mxu0
    %v486 = vadd.f32 0.0, %v485
    %v487 = vpop.f32.mrf.mxu0
    %v488 = vadd.f32 0.0, %v487
    %489 = vmatprep.mubr.bf16.mxu0 0
    %490 = vmatmul.mubr.bf16.gmra.mxu0 %v352
    %v491 = vpop.f32.mrf.mxu0
    %v492 = vadd.f32 0.0, %v491
    %v493 = vpop.f32.mrf.mxu0
    %v494 = vadd.f32 0.0, %v493
    %v495 = vpop.f32.mrf.mxu0
    %v496 = vadd.f32 0.0, %v495
    %v497 = vpop.f32.mrf.mxu0
    %v498 = vadd.f32 0.0, %v497
    %499 = vmatprep.mubr.bf16.mxu0 0
    %500 = vmatmul.mubr.bf16.gmra.mxu0 %v355
    %v501 = vpop.f32.mrf.mxu0
    %v502 = vadd.f32 0.0, %v501
    %v503 = vpop.f32.mrf.mxu0
    %v504 = vadd.f32 0.0, %v503
    %v505 = vpop.f32.mrf.mxu0
    %v506 = vadd.f32 0.0, %v505
    %v507 = vpop.f32.mrf.mxu0
    %v508 = vadd.f32 0.0, %v507
    %509 = vmatprep.mubr.bf16.mxu0 0
    %510 = vmatmul.mubr.bf16.gmra.mxu0 %v358
    %v511 = vpop.f32.mrf.mxu0
    %v512 = vadd.f32 0.0, %v511
    %v513 = vpop.f32.mrf.mxu0
    %v514 = vadd.f32 0.0, %v513
    %v515 = vpop.f32.mrf.mxu0
    %v516 = vadd.f32 0.0, %v515
    %v517 = vpop.f32.mrf.mxu0
    %v518 = vadd.f32 0.0, %v517
    %519 = vdwg.mxu0
    %v524 = vunpack.c.l.b16 %v171
    %v525 = vunpack.c.h.b16 %v171
    %v526 = vunpack.c.l.b16 %v172
    %v527 = vunpack.c.h.b16 %v172
    %v528 = vunpack.c.l.b16 %v173
    %v529 = vunpack.c.h.b16 %v173
    %v530 = vunpack.c.l.b16 %v174
    %v531 = vunpack.c.h.b16 %v174
    %v532 = vpack.c.b16 %v526, %v524
    %v533 = vpack.c.b16 %v527, %v525
    %v534 = vpack.c.b16 %v530, %v528
    %v535 = vpack.c.b16 %v531, %v529
    %v539 = vsel %vm323, %v159, 0
    %v542 = vsel %vm323, %v160, 0
    %v545 = vsel %vm323, %v161, 0
    %v548 = vsel %vm323, %v162, 0
    %v551 = vsel %vm323, %v163, 0
    %v554 = vsel %vm323, %v164, 0
    %v557 = vsel %vm323, %v165, 0
    %v560 = vsel %vm323, %v166, 0
    %v563 = vsel %vm323, %v167, 0
    %v566 = vsel %vm323, %v168, 0
    %v569 = vsel %vm323, %v169, 0
    %v572 = vsel %vm323, %v170, 0
    %v575 = vsel %vm360, %v534, 0
    %v578 = vsel %vm360, %v535, 0
    %580 = vmatprep.subr.bf16.mxu0 0
    %581 = vmatpush1.bf16.msra.mxu0 0
    %582 = vmatprep.subr.bf16.mxu0 0
    %583 = vmatpush1.bf16.msra.mxu0 0
    %584 = vmatprep.subr.bf16.mxu0 0
    %585 = vmatpush1.bf16.msra.mxu0 0
    %586 = vmatprep.subr.bf16.mxu0 0
    %587 = vmatpush1.bf16.msra.mxu0 0
    %588 = vmatprep.subr.bf16.mxu0 0
    %589 = vmatpush1.bf16.msra.mxu0 0
    %590 = vmatprep.subr.bf16.mxu0 0
    %591 = vmatpush1.bf16.msra.mxu0 0
    %592 = vmatprep.subr.bf16.mxu0 %v578
    %593 = vmatpush1.bf16.msra.mxu0 %v575
    %594 = vmatprep.subr.bf16.mxu0 %v533
    %595 = vmatpush1.bf16.msra.mxu0 %v532
    %596 = vmatprep.subr.bf16.mxu0 0
    %597 = vmatpush2.bf16.msra.mxu0 0
    %598 = vmatprep.subr.bf16.mxu0 0
    %599 = vmatpush2.bf16.msra.mxu0 0
    %600 = vmatprep.subr.bf16.mxu0 0
    %601 = vmatpush2.bf16.msra.mxu0 0
    %602 = vmatprep.subr.bf16.mxu0 0
    %603 = vmatpush2.bf16.msra.mxu0 0
    %604 = vmatprep.subr.bf16.mxu0 0
    %605 = vmatpush2.bf16.msra.mxu0 0
    %606 = vmatprep.subr.bf16.mxu0 0
    %607 = vmatpush2.bf16.msra.mxu0 0
    %608 = vmatprep.subr.bf16.mxu0 0
    %609 = vmatpush2.bf16.msra.mxu0 0
    %610 = vmatprep.subr.bf16.mxu0 0
    %611 = vmatpush2.bf16.msra.mxu0 0
    %612 = vmatprep.mubr.bf16.mxu0 0
    %613 = vmatmul.mubr.bf16.gmra.mxu0 %v539
    %v614 = vpop.f32.mrf.mxu0
    %v615 = vadd.f32 %v402, %v614
    %v616 = vpop.f32.mrf.mxu0
    %v617 = vadd.f32 %v404, %v616
    %v618 = vpop.f32.mrf.mxu0
    %v619 = vadd.f32 %v406, %v618
    %v620 = vpop.f32.mrf.mxu0
    %v621 = vadd.f32 %v408, %v620
    %622 = vmatprep.mubr.bf16.mxu0 0
    %623 = vmatmul.mubr.bf16.gmra.mxu0 %v542
    %v624 = vpop.f32.mrf.mxu0
    %v625 = vadd.f32 %v412, %v624
    %v626 = vpop.f32.mrf.mxu0
    %v627 = vadd.f32 %v414, %v626
    %v628 = vpop.f32.mrf.mxu0
    %v629 = vadd.f32 %v416, %v628
    %v630 = vpop.f32.mrf.mxu0
    %v631 = vadd.f32 %v418, %v630
    %632 = vmatprep.mubr.bf16.mxu0 0
    %633 = vmatmul.mubr.bf16.gmra.mxu0 %v545
    %v634 = vpop.f32.mrf.mxu0
    %v635 = vadd.f32 %v422, %v634
    %v636 = vpop.f32.mrf.mxu0
    %v637 = vadd.f32 %v424, %v636
    %v638 = vpop.f32.mrf.mxu0
    %v639 = vadd.f32 %v426, %v638
    %v640 = vpop.f32.mrf.mxu0
    %v641 = vadd.f32 %v428, %v640
    %642 = vmatprep.mubr.bf16.mxu0 0
    %643 = vmatmul.mubr.bf16.gmra.mxu0 %v548
    %v644 = vpop.f32.mrf.mxu0
    %v645 = vadd.f32 %v432, %v644
    %v646 = vpop.f32.mrf.mxu0
    %v647 = vadd.f32 %v434, %v646
    %v648 = vpop.f32.mrf.mxu0
    %v649 = vadd.f32 %v436, %v648
    %v650 = vpop.f32.mrf.mxu0
    %v651 = vadd.f32 %v438, %v650
    %652 = vmatprep.mubr.bf16.mxu0 0
    %653 = vmatmul.mubr.bf16.gmra.mxu0 %v551
    %v654 = vpop.f32.mrf.mxu0
    %v655 = vadd.f32 %v442, %v654
    %v656 = vpop.f32.mrf.mxu0
    %v657 = vadd.f32 %v444, %v656
    %v658 = vpop.f32.mrf.mxu0
    %v659 = vadd.f32 %v446, %v658
    %v660 = vpop.f32.mrf.mxu0
    %v661 = vadd.f32 %v448, %v660
    %662 = vmatprep.mubr.bf16.mxu0 0
    %663 = vmatmul.mubr.bf16.gmra.mxu0 %v554
    %v664 = vpop.f32.mrf.mxu0
    %v665 = vadd.f32 %v452, %v664
    %v666 = vpop.f32.mrf.mxu0
    %v667 = vadd.f32 %v454, %v666
    %v668 = vpop.f32.mrf.mxu0
    %v669 = vadd.f32 %v456, %v668
    %v670 = vpop.f32.mrf.mxu0
    %v671 = vadd.f32 %v458, %v670
    %672 = vmatprep.mubr.bf16.mxu0 0
    %673 = vmatmul.mubr.bf16.gmra.mxu0 %v557
    %v674 = vpop.f32.mrf.mxu0
    %v675 = vadd.f32 %v462, %v674
    %v676 = vpop.f32.mrf.mxu0
    %v677 = vadd.f32 %v464, %v676
    %v678 = vpop.f32.mrf.mxu0
    %v679 = vadd.f32 %v466, %v678
    %v680 = vpop.f32.mrf.mxu0
    %v681 = vadd.f32 %v468, %v680
    %682 = vmatprep.mubr.bf16.mxu0 0
    %683 = vmatmul.mubr.bf16.gmra.mxu0 %v560
    %v684 = vpop.f32.mrf.mxu0
    %v685 = vadd.f32 %v472, %v684
    %v686 = vpop.f32.mrf.mxu0
    %v687 = vadd.f32 %v474, %v686
    %v688 = vpop.f32.mrf.mxu0
    %v689 = vadd.f32 %v476, %v688
    %v690 = vpop.f32.mrf.mxu0
    %v691 = vadd.f32 %v478, %v690
    %692 = vmatprep.mubr.bf16.mxu0 0
    %693 = vmatmul.mubr.bf16.gmra.mxu0 %v563
    %v694 = vpop.f32.mrf.mxu0
    %v695 = vadd.f32 %v482, %v694
    %v696 = vpop.f32.mrf.mxu0
    %v697 = vadd.f32 %v484, %v696
    %v698 = vpop.f32.mrf.mxu0
    %v699 = vadd.f32 %v486, %v698
    %v700 = vpop.f32.mrf.mxu0
    %v701 = vadd.f32 %v488, %v700
    %702 = vmatprep.mubr.bf16.mxu0 0
    %703 = vmatmul.mubr.bf16.gmra.mxu0 %v566
    %v704 = vpop.f32.mrf.mxu0
    %v705 = vadd.f32 %v492, %v704
    %v706 = vpop.f32.mrf.mxu0
    %v707 = vadd.f32 %v494, %v706
    %v708 = vpop.f32.mrf.mxu0
    %v709 = vadd.f32 %v496, %v708
    %v710 = vpop.f32.mrf.mxu0
    %v711 = vadd.f32 %v498, %v710
    %712 = vmatprep.mubr.bf16.mxu0 0
    %713 = vmatmul.mubr.bf16.gmra.mxu0 %v569
    %v714 = vpop.f32.mrf.mxu0
    %v715 = vadd.f32 %v502, %v714
    %v716 = vpop.f32.mrf.mxu0
    %v717 = vadd.f32 %v504, %v716
    %v718 = vpop.f32.mrf.mxu0
    %v719 = vadd.f32 %v506, %v718
    %v720 = vpop.f32.mrf.mxu0
    %v721 = vadd.f32 %v508, %v720
    %722 = vmatprep.mubr.bf16.mxu0 0
    %723 = vmatmul.mubr.bf16.gmra.mxu0 %v572
    %v724 = vpop.f32.mrf.mxu0
    %v725 = vadd.f32 %v512, %v724
    %v726 = vpop.f32.mrf.mxu0
    %v727 = vadd.f32 %v514, %v726
    %v728 = vpop.f32.mrf.mxu0
    %v729 = vadd.f32 %v516, %v728
    %v730 = vpop.f32.mrf.mxu0
    %v731 = vadd.f32 %v518, %v730
    %732 = vdwg.mxu0
    %v733 = vrot.slane %v127, 2
    %v734 = vrot.slane %v128, 2
    %v735 = vsel %vm360, %v733, %v734
    %v736 = vrot.slane %v129, 2
    %v737 = vsel %vm360, %v734, %v736
    %v738 = vrot.slane %v130, 2
    %v739 = vsel %vm360, %v736, %v738
    %v740 = vrot.slane %v131, 2
    %v741 = vrot.slane %v132, 2
    %v742 = vsel %vm360, %v740, %v741
    %v743 = vrot.slane %v133, 2
    %v744 = vsel %vm360, %v741, %v743
    %v745 = vrot.slane %v134, 2
    %v746 = vsel %vm360, %v743, %v745
    %v747 = vrot.slane %v135, 2
    %v748 = vrot.slane %v136, 2
    %v749 = vsel %vm360, %v747, %v748
    %v750 = vrot.slane %v137, 2
    %v751 = vsel %vm360, %v748, %v750
    %v752 = vrot.slane %v138, 2
    %v753 = vsel %vm360, %v750, %v752
    %v754 = vrot.slane %v139, 2
    %v755 = vrot.slane %v140, 2
    %v756 = vsel %vm360, %v754, %v755
    %v757 = vrot.slane %v141, 2
    %v758 = vsel %vm360, %v755, %v757
    %v759 = vrot.slane %v142, 2
    %v760 = vsel %vm360, %v757, %v759
    %v761 = vrot.slane %v143, 2
    %v762 = vrot.slane %v144, 2
    %v763 = vsel %vm360, %v761, %v762
    %v764 = vrot.slane %v145, 2
    %v765 = vsel %vm360, %v762, %v764
    %v766 = vrot.slane %v146, 2
    %v767 = vsel %vm360, %v764, %v766
    %v768 = vrot.slane %v147, 2
    %v769 = vrot.slane %v148, 2
    %v770 = vsel %vm360, %v768, %v769
    %v771 = vrot.slane %v149, 2
    %v772 = vsel %vm360, %v769, %v771
    %v773 = vrot.slane %v150, 2
    %v774 = vsel %vm360, %v771, %v773
    %v775 = vrot.slane %v151, 2
    %v776 = vrot.slane %v152, 2
    %v777 = vsel %vm360, %v775, %v776
    %v778 = vrot.slane %v153, 2
    %v779 = vsel %vm360, %v776, %v778
    %v780 = vrot.slane %v154, 2
    %v781 = vsel %vm360, %v778, %v780
    %v782 = vrot.slane %v155, 2
    %v783 = vrot.slane %v156, 2
    %v784 = vsel %vm360, %v782, %v783
    %v785 = vrot.slane %v157, 2
    %v786 = vsel %vm360, %v783, %v785
    %v787 = vrot.slane %v158, 2
    %v788 = vsel %vm360, %v785, %v787
    %v813 = vpack.c.bf16 %v737, %v735
    %v814 = vpack.c.bf16 %v742, %v739
    %v815 = vpack.c.bf16 %v746, %v744
    %v816 = vpack.c.bf16 %v751, %v749
    %v817 = vpack.c.bf16 %v756, %v753
    %v818 = vpack.c.bf16 %v760, %v758
    %v819 = vpack.c.bf16 %v765, %v763
    %v820 = vpack.c.bf16 %v770, %v767
    %v821 = vpack.c.bf16 %v774, %v772
    %v822 = vpack.c.bf16 %v779, %v777
    %v823 = vpack.c.bf16 %v784, %v781
    %v824 = vpack.c.bf16 %v788, %v786
    %s825 = scalar_lea.vmem [#allocation2], 64
    %v826 = vld [vmem:[%s825] sm:$0xff]
    %v827 = vld [vmem:[%s825 + $0x8] sm:$0xff]
    %v828 = vld [vmem:[%s825 + $0x10] sm:$0xff]
    %v829 = vld [vmem:[%s825 + $0x18] sm:$0x33]
    %v834 = vunpack.c.l.b16 %v826
    %v835 = vunpack.c.h.b16 %v826
    %v836 = vunpack.c.l.b16 %v827
    %v837 = vunpack.c.h.b16 %v827
    %v838 = vunpack.c.l.b16 %v828
    %v839 = vunpack.c.h.b16 %v828
    %v840 = vunpack.c.l.b16 %v829
    %v841 = vunpack.c.h.b16 %v829
    %v842 = vpack.c.b16 %v836, %v834
    %v843 = vpack.c.b16 %v837, %v835
    %v844 = vpack.c.b16 %v840, %v838
    %v845 = vpack.c.b16 %v841, %v839
    %v849 = vsel %vm323, %v813, 0
    %v852 = vsel %vm323, %v814, 0
    %v855 = vsel %vm323, %v815, 0
    %v858 = vsel %vm323, %v816, 0
    %v861 = vsel %vm323, %v817, 0
    %v864 = vsel %vm323, %v818, 0
    %v867 = vsel %vm323, %v819, 0
    %v870 = vsel %vm323, %v820, 0
    %v873 = vsel %vm323, %v821, 0
    %v876 = vsel %vm323, %v822, 0
    %v879 = vsel %vm323, %v823, 0
    %v882 = vsel %vm323, %v824, 0
    %v885 = vsel %vm360, %v844, 0
    %v888 = vsel %vm360, %v845, 0
    %890 = vmatprep.subr.bf16.mxu0 0
    %891 = vmatpush1.bf16.msra.mxu0 0
    %892 = vmatprep.subr.bf16.mxu0 0
    %893 = vmatpush1.bf16.msra.mxu0 0
    %894 = vmatprep.subr.bf16.mxu0 0
    %895 = vmatpush1.bf16.msra.mxu0 0
    %896 = vmatprep.subr.bf16.mxu0 0
    %897 = vmatpush1.bf16.msra.mxu0 0
    %898 = vmatprep.subr.bf16.mxu0 0
    %899 = vmatpush1.bf16.msra.mxu0 0
    %900 = vmatprep.subr.bf16.mxu0 0
    %901 = vmatpush1.bf16.msra.mxu0 0
    %902 = vmatprep.subr.bf16.mxu0 %v888
    %903 = vmatpush1.bf16.msra.mxu0 %v885
    %904 = vmatprep.subr.bf16.mxu0 %v843
    %905 = vmatpush1.bf16.msra.mxu0 %v842
    %906 = vmatprep.subr.bf16.mxu0 0
    %907 = vmatpush2.bf16.msra.mxu0 0
    %908 = vmatprep.subr.bf16.mxu0 0
    %909 = vmatpush2.bf16.msra.mxu0 0
    %910 = vmatprep.subr.bf16.mxu0 0
    %911 = vmatpush2.bf16.msra.mxu0 0
    %912 = vmatprep.subr.bf16.mxu0 0
    %913 = vmatpush2.bf16.msra.mxu0 0
    %914 = vmatprep.subr.bf16.mxu0 0
    %915 = vmatpush2.bf16.msra.mxu0 0
    %916 = vmatprep.subr.bf16.mxu0 0
    %917 = vmatpush2.bf16.msra.mxu0 0
    %918 = vmatprep.subr.bf16.mxu0 0
    %919 = vmatpush2.bf16.msra.mxu0 0
    %920 = vmatprep.subr.bf16.mxu0 0
    %921 = vmatpush2.bf16.msra.mxu0 0
    %922 = vmatprep.mubr.bf16.mxu0 0
    %923 = vmatmul.mubr.bf16.gmra.mxu0 %v849
    %v924 = vpop.f32.mrf.mxu0
    %v925 = vadd.f32 0.0, %v924
    %v926 = vpop.f32.mrf.mxu0
    %v927 = vadd.f32 0.0, %v926
    %v928 = vpop.f32.mrf.mxu0
    %v929 = vadd.f32 0.0, %v928
    %v930 = vpop.f32.mrf.mxu0
    %v931 = vadd.f32 0.0, %v930
    %932 = vmatprep.mubr.bf16.mxu0 0
    %933 = vmatmul.mubr.bf16.gmra.mxu0 %v852
    %v934 = vpop.f32.mrf.mxu0
    %v935 = vadd.f32 0.0, %v934
    %v936 = vpop.f32.mrf.mxu0
    %v937 = vadd.f32 0.0, %v936
    %v938 = vpop.f32.mrf.mxu0
    %v939 = vadd.f32 0.0, %v938
    %v940 = vpop.f32.mrf.mxu0
    %v941 = vadd.f32 0.0, %v940
    %942 = vmatprep.mubr.bf16.mxu0 0
    %943 = vmatmul.mubr.bf16.gmra.mxu0 %v855
    %v944 = vpop.f32.mrf.mxu0
    %v945 = vadd.f32 0.0, %v944
    %v946 = vpop.f32.mrf.mxu0
    %v947 = vadd.f32 0.0, %v946
    %v948 = vpop.f32.mrf.mxu0
    %v949 = vadd.f32 0.0, %v948
    %v950 = vpop.f32.mrf.mxu0
    %v951 = vadd.f32 0.0, %v950
    %952 = vmatprep.mubr.bf16.mxu0 0
    %953 = vmatmul.mubr.bf16.gmra.mxu0 %v858
    %v954 = vpop.f32.mrf.mxu0
    %v955 = vadd.f32 0.0, %v954
    %v956 = vpop.f32.mrf.mxu0
    %v957 = vadd.f32 0.0, %v956
    %v958 = vpop.f32.mrf.mxu0
    %v959 = vadd.f32 0.0, %v958
    %v960 = vpop.f32.mrf.mxu0
    %v961 = vadd.f32 0.0, %v960
    %962 = vmatprep.mubr.bf16.mxu0 0
    %963 = vmatmul.mubr.bf16.gmra.mxu0 %v861
    %v964 = vpop.f32.mrf.mxu0
    %v965 = vadd.f32 0.0, %v964
    %v966 = vpop.f32.mrf.mxu0
    %v967 = vadd.f32 0.0, %v966
    %v968 = vpop.f32.mrf.mxu0
    %v969 = vadd.f32 0.0, %v968
    %v970 = vpop.f32.mrf.mxu0
    %v971 = vadd.f32 0.0, %v970
    %972 = vmatprep.mubr.bf16.mxu0 0
    %973 = vmatmul.mubr.bf16.gmra.mxu0 %v864
    %v974 = vpop.f32.mrf.mxu0
    %v975 = vadd.f32 0.0, %v974
    %v976 = vpop.f32.mrf.mxu0
    %v977 = vadd.f32 0.0, %v976
    %v978 = vpop.f32.mrf.mxu0
    %v979 = vadd.f32 0.0, %v978
    %v980 = vpop.f32.mrf.mxu0
    %v981 = vadd.f32 0.0, %v980
    %982 = vmatprep.mubr.bf16.mxu0 0
    %983 = vmatmul.mubr.bf16.gmra.mxu0 %v867
    %v984 = vpop.f32.mrf.mxu0
    %v985 = vadd.f32 0.0, %v984
    %v986 = vpop.f32.mrf.mxu0
    %v987 = vadd.f32 0.0, %v986
    %v988 = vpop.f32.mrf.mxu0
    %v989 = vadd.f32 0.0, %v988
    %v990 = vpop.f32.mrf.mxu0
    %v991 = vadd.f32 0.0, %v990
    %992 = vmatprep.mubr.bf16.mxu0 0
    %993 = vmatmul.mubr.bf16.gmra.mxu0 %v870
    %v994 = vpop.f32.mrf.mxu0
    %v995 = vadd.f32 0.0, %v994
    %v996 = vpop.f32.mrf.mxu0
    %v997 = vadd.f32 0.0, %v996
    %v998 = vpop.f32.mrf.mxu0
    %v999 = vadd.f32 0.0, %v998
    %v1000 = vpop.f32.mrf.mxu0
    %v1001 = vadd.f32 0.0, %v1000
    %1002 = vmatprep.mubr.bf16.mxu0 0
    %1003 = vmatmul.mubr.bf16.gmra.mxu0 %v873
    %v1004 = vpop.f32.mrf.mxu0
    %v1005 = vadd.f32 0.0, %v1004
    %v1006 = vpop.f32.mrf.mxu0
    %v1007 = vadd.f32 0.0, %v1006
    %v1008 = vpop.f32.mrf.mxu0
    %v1009 = vadd.f32 0.0, %v1008
    %v1010 = vpop.f32.mrf.mxu0
    %v1011 = vadd.f32 0.0, %v1010
    %1012 = vmatprep.mubr.bf16.mxu0 0
    %1013 = vmatmul.mubr.bf16.gmra.mxu0 %v876
    %v1014 = vpop.f32.mrf.mxu0
    %v1015 = vadd.f32 0.0, %v1014
    %v1016 = vpop.f32.mrf.mxu0
    %v1017 = vadd.f32 0.0, %v1016
    %v1018 = vpop.f32.mrf.mxu0
    %v1019 = vadd.f32 0.0, %v1018
    %v1020 = vpop.f32.mrf.mxu0
    %v1021 = vadd.f32 0.0, %v1020
    %1022 = vmatprep.mubr.bf16.mxu0 0
    %1023 = vmatmul.mubr.bf16.gmra.mxu0 %v879
    %v1024 = vpop.f32.mrf.mxu0
    %v1025 = vadd.f32 0.0, %v1024
    %v1026 = vpop.f32.mrf.mxu0
    %v1027 = vadd.f32 0.0, %v1026
    %v1028 = vpop.f32.mrf.mxu0
    %v1029 = vadd.f32 0.0, %v1028
    %v1030 = vpop.f32.mrf.mxu0
    %v1031 = vadd.f32 0.0, %v1030
    %1032 = vmatprep.mubr.bf16.mxu0 0
    %1033 = vmatmul.mubr.bf16.gmra.mxu0 %v882
    %v1034 = vpop.f32.mrf.mxu0
    %v1035 = vadd.f32 0.0, %v1034
    %v1036 = vpop.f32.mrf.mxu0
    %v1037 = vadd.f32 0.0, %v1036
    %v1038 = vpop.f32.mrf.mxu0
    %v1039 = vadd.f32 0.0, %v1038
    %v1040 = vpop.f32.mrf.mxu0
    %v1041 = vadd.f32 0.0, %v1040
    %1042 = vdwg.mxu0
    %v1043 = vadd.f32 %v615, %v925
    %v1044 = vadd.f32 %v617, %v927
    %v1045 = vadd.f32 %v619, %v929
    %v1046 = vadd.f32 %v621, %v931
    %v1047 = vadd.f32 %v625, %v935
    %v1048 = vadd.f32 %v627, %v937
    %v1049 = vadd.f32 %v629, %v939
    %v1050 = vadd.f32 %v631, %v941
    %v1051 = vadd.f32 %v635, %v945
    %v1052 = vadd.f32 %v637, %v947
    %v1053 = vadd.f32 %v639, %v949
    %v1054 = vadd.f32 %v641, %v951
    %v1055 = vadd.f32 %v645, %v955
    %v1056 = vadd.f32 %v647, %v957
    %v1057 = vadd.f32 %v649, %v959
    %v1058 = vadd.f32 %v651, %v961
    %v1059 = vadd.f32 %v655, %v965
    %v1060 = vadd.f32 %v657, %v967
    %v1061 = vadd.f32 %v659, %v969
    %v1062 = vadd.f32 %v661, %v971
    %v1063 = vadd.f32 %v665, %v975
    %v1064 = vadd.f32 %v667, %v977
    %v1065 = vadd.f32 %v669, %v979
    %v1066 = vadd.f32 %v671, %v981
    %v1067 = vadd.f32 %v675, %v985
    %v1068 = vadd.f32 %v677, %v987
    %v1069 = vadd.f32 %v679, %v989
    %v1070 = vadd.f32 %v681, %v991
    %v1071 = vadd.f32 %v685, %v995
    %v1072 = vadd.f32 %v687, %v997
    %v1073 = vadd.f32 %v689, %v999
    %v1074 = vadd.f32 %v691, %v1001
    %v1075 = vadd.f32 %v695, %v1005
    %v1076 = vadd.f32 %v697, %v1007
    %v1077 = vadd.f32 %v699, %v1009
    %v1078 = vadd.f32 %v701, %v1011
    %v1079 = vadd.f32 %v705, %v1015
    %v1080 = vadd.f32 %v707, %v1017
    %v1081 = vadd.f32 %v709, %v1019
    %v1082 = vadd.f32 %v711, %v1021
    %v1083 = vadd.f32 %v715, %v1025
    %v1084 = vadd.f32 %v717, %v1027
    %v1085 = vadd.f32 %v719, %v1029
    %v1086 = vadd.f32 %v721, %v1031
    %v1087 = vadd.f32 %v725, %v1035
    %v1088 = vadd.f32 %v727, %v1037
    %v1089 = vadd.f32 %v729, %v1039
    %v1090 = vadd.f32 %v731, %v1041
    %vm1091 = vcmask 1044480
    %v1092 = vrot.slane %v127, 3
    %v1093 = vrot.slane %v128, 3
    %v1094 = vsel %vm1091, %v1092, %v1093
    %v1095 = vrot.slane %v129, 3
    %v1096 = vsel %vm1091, %v1093, %v1095
    %v1097 = vrot.slane %v130, 3
    %v1098 = vsel %vm1091, %v1095, %v1097
    %v1099 = vrot.slane %v131, 3
    %v1100 = vrot.slane %v132, 3
    %v1101 = vsel %vm1091, %v1099, %v1100
    %v1102 = vrot.slane %v133, 3
    %v1103 = vsel %vm1091, %v1100, %v1102
    %v1104 = vrot.slane %v134, 3
    %v1105 = vsel %vm1091, %v1102, %v1104
    %v1106 = vrot.slane %v135, 3
    %v1107 = vrot.slane %v136, 3
    %v1108 = vsel %vm1091, %v1106, %v1107
    %v1109 = vrot.slane %v137, 3
    %v1110 = vsel %vm1091, %v1107, %v1109
    %v1111 = vrot.slane %v138, 3
    %v1112 = vsel %vm1091, %v1109, %v1111
    %v1113 = vrot.slane %v139, 3
    %v1114 = vrot.slane %v140, 3
    %v1115 = vsel %vm1091, %v1113, %v1114
    %v1116 = vrot.slane %v141, 3
    %v1117 = vsel %vm1091, %v1114, %v1116
    %v1118 = vrot.slane %v142, 3
    %v1119 = vsel %vm1091, %v1116, %v1118
    %v1120 = vrot.slane %v143, 3
    %v1121 = vrot.slane %v144, 3
    %v1122 = vsel %vm1091, %v1120, %v1121
    %v1123 = vrot.slane %v145, 3
    %v1124 = vsel %vm1091, %v1121, %v1123
    %v1125 = vrot.slane %v146, 3
    %v1126 = vsel %vm1091, %v1123, %v1125
    %v1127 = vrot.slane %v147, 3
    %v1128 = vrot.slane %v148, 3
    %v1129 = vsel %vm1091, %v1127, %v1128
    %v1130 = vrot.slane %v149, 3
    %v1131 = vsel %vm1091, %v1128, %v1130
    %v1132 = vrot.slane %v150, 3
    %v1133 = vsel %vm1091, %v1130, %v1132
    %v1134 = vrot.slane %v151, 3
    %v1135 = vrot.slane %v152, 3
    %v1136 = vsel %vm1091, %v1134, %v1135
    %v1137 = vrot.slane %v153, 3
    %v1138 = vsel %vm1091, %v1135, %v1137
    %v1139 = vrot.slane %v154, 3
    %v1140 = vsel %vm1091, %v1137, %v1139
    %v1141 = vrot.slane %v155, 3
    %v1142 = vrot.slane %v156, 3
    %v1143 = vsel %vm1091, %v1141, %v1142
    %v1144 = vrot.slane %v157, 3
    %v1145 = vsel %vm1091, %v1142, %v1144
    %v1146 = vrot.slane %v158, 3
    %v1147 = vsel %vm1091, %v1144, %v1146
    %v1172 = vpack.c.bf16 %v1096, %v1094
    %v1173 = vpack.c.bf16 %v1101, %v1098
    %v1174 = vpack.c.bf16 %v1105, %v1103
    %v1175 = vpack.c.bf16 %v1110, %v1108
    %v1176 = vpack.c.bf16 %v1115, %v1112
    %v1177 = vpack.c.bf16 %v1119, %v1117
    %v1178 = vpack.c.bf16 %v1124, %v1122
    %v1179 = vpack.c.bf16 %v1129, %v1126
    %v1180 = vpack.c.bf16 %v1133, %v1131
    %v1181 = vpack.c.bf16 %v1138, %v1136
    %v1182 = vpack.c.bf16 %v1143, %v1140
    %v1183 = vpack.c.bf16 %v1147, %v1145
    %s1184 = scalar_lea.vmem [#allocation2], 96
    %v1185 = vld [vmem:[%s1184] sm:$0xff]
    %v1186 = vld [vmem:[%s1184 + $0x8] sm:$0xff]
    %v1187 = vld [vmem:[%s1184 + $0x10] sm:$0xff]
    %v1188 = vld [vmem:[%s1184 + $0x18] sm:$0x33]
    %v1193 = vunpack.c.l.b16 %v1185
    %v1194 = vunpack.c.h.b16 %v1185
    %v1195 = vunpack.c.l.b16 %v1186
    %v1196 = vunpack.c.h.b16 %v1186
    %v1197 = vunpack.c.l.b16 %v1187
    %v1198 = vunpack.c.h.b16 %v1187
    %v1199 = vunpack.c.l.b16 %v1188
    %v1200 = vunpack.c.h.b16 %v1188
    %v1201 = vpack.c.b16 %v1195, %v1193
    %v1202 = vpack.c.b16 %v1196, %v1194
    %v1203 = vpack.c.b16 %v1199, %v1197
    %v1204 = vpack.c.b16 %v1200, %v1198
    %v1208 = vsel %vm323, %v1172, 0
    %v1211 = vsel %vm323, %v1173, 0
    %v1214 = vsel %vm323, %v1174, 0
    %v1217 = vsel %vm323, %v1175, 0
    %v1220 = vsel %vm323, %v1176, 0
    %v1223 = vsel %vm323, %v1177, 0
    %v1226 = vsel %vm323, %v1178, 0
    %v1229 = vsel %vm323, %v1179, 0
    %v1232 = vsel %vm323, %v1180, 0
    %v1235 = vsel %vm323, %v1181, 0
    %v1238 = vsel %vm323, %v1182, 0
    %v1241 = vsel %vm323, %v1183, 0
    %v1244 = vsel %vm360, %v1203, 0
    %v1247 = vsel %vm360, %v1204, 0
    %1249 = vmatprep.subr.bf16.mxu0 0
    %1250 = vmatpush1.bf16.msra.mxu0 0
    %1251 = vmatprep.subr.bf16.mxu0 0
    %1252 = vmatpush1.bf16.msra.mxu0 0
    %1253 = vmatprep.subr.bf16.mxu0 0
    %1254 = vmatpush1.bf16.msra.mxu0 0
    %1255 = vmatprep.subr.bf16.mxu0 0
    %1256 = vmatpush1.bf16.msra.mxu0 0
    %1257 = vmatprep.subr.bf16.mxu0 0
    %1258 = vmatpush1.bf16.msra.mxu0 0
    %1259 = vmatprep.subr.bf16.mxu0 0
    %1260 = vmatpush1.bf16.msra.mxu0 0
    %1261 = vmatprep.subr.bf16.mxu0 %v1247
    %1262 = vmatpush1.bf16.msra.mxu0 %v1244
    %1263 = vmatprep.subr.bf16.mxu0 %v1202
    %1264 = vmatpush1.bf16.msra.mxu0 %v1201
    %1265 = vmatprep.subr.bf16.mxu0 0
    %1266 = vmatpush2.bf16.msra.mxu0 0
    %1267 = vmatprep.subr.bf16.mxu0 0
    %1268 = vmatpush2.bf16.msra.mxu0 0
    %1269 = vmatprep.subr.bf16.mxu0 0
    %1270 = vmatpush2.bf16.msra.mxu0 0
    %1271 = vmatprep.subr.bf16.mxu0 0
    %1272 = vmatpush2.bf16.msra.mxu0 0
    %1273 = vmatprep.subr.bf16.mxu0 0
    %1274 = vmatpush2.bf16.msra.mxu0 0
    %1275 = vmatprep.subr.bf16.mxu0 0
    %1276 = vmatpush2.bf16.msra.mxu0 0
    %1277 = vmatprep.subr.bf16.mxu0 0
    %1278 = vmatpush2.bf16.msra.mxu0 0
    %1279 = vmatprep.subr.bf16.mxu0 0
    %1280 = vmatpush2.bf16.msra.mxu0 0
    %1281 = vmatprep.mubr.bf16.mxu0 0
    %1282 = vmatmul.mubr.bf16.gmra.mxu0 %v1208
    %v1283 = vpop.f32.mrf.mxu0
    %v1284 = vadd.f32 0.0, %v1283
    %v1285 = vpop.f32.mrf.mxu0
    %v1286 = vadd.f32 0.0, %v1285
    %v1287 = vpop.f32.mrf.mxu0
    %v1288 = vadd.f32 0.0, %v1287
    %v1289 = vpop.f32.mrf.mxu0
    %v1290 = vadd.f32 0.0, %v1289
    %1291 = vmatprep.mubr.bf16.mxu0 0
    %1292 = vmatmul.mubr.bf16.gmra.mxu0 %v1211
    %v1293 = vpop.f32.mrf.mxu0
    %v1294 = vadd.f32 0.0, %v1293
    %v1295 = vpop.f32.mrf.mxu0
    %v1296 = vadd.f32 0.0, %v1295
    %v1297 = vpop.f32.mrf.mxu0
    %v1298 = vadd.f32 0.0, %v1297
    %v1299 = vpop.f32.mrf.mxu0
    %v1300 = vadd.f32 0.0, %v1299
    %1301 = vmatprep.mubr.bf16.mxu0 0
    %1302 = vmatmul.mubr.bf16.gmra.mxu0 %v1214
    %v1303 = vpop.f32.mrf.mxu0
    %v1304 = vadd.f32 0.0, %v1303
    %v1305 = vpop.f32.mrf.mxu0
    %v1306 = vadd.f32 0.0, %v1305
    %v1307 = vpop.f32.mrf.mxu0
    %v1308 = vadd.f32 0.0, %v1307
    %v1309 = vpop.f32.mrf.mxu0
    %v1310 = vadd.f32 0.0, %v1309
    %1311 = vmatprep.mubr.bf16.mxu0 0
    %1312 = vmatmul.mubr.bf16.gmra.mxu0 %v1217
    %v1313 = vpop.f32.mrf.mxu0
    %v1314 = vadd.f32 0.0, %v1313
    %v1315 = vpop.f32.mrf.mxu0
    %v1316 = vadd.f32 0.0, %v1315
    %v1317 = vpop.f32.mrf.mxu0
    %v1318 = vadd.f32 0.0, %v1317
    %v1319 = vpop.f32.mrf.mxu0
    %v1320 = vadd.f32 0.0, %v1319
    %1321 = vmatprep.mubr.bf16.mxu0 0
    %1322 = vmatmul.mubr.bf16.gmra.mxu0 %v1220
    %v1323 = vpop.f32.mrf.mxu0
    %v1324 = vadd.f32 0.0, %v1323
    %v1325 = vpop.f32.mrf.mxu0
    %v1326 = vadd.f32 0.0, %v1325
    %v1327 = vpop.f32.mrf.mxu0
    %v1328 = vadd.f32 0.0, %v1327
    %v1329 = vpop.f32.mrf.mxu0
    %v1330 = vadd.f32 0.0, %v1329
    %1331 = vmatprep.mubr.bf16.mxu0 0
    %1332 = vmatmul.mubr.bf16.gmra.mxu0 %v1223
    %v1333 = vpop.f32.mrf.mxu0
    %v1334 = vadd.f32 0.0, %v1333
    %v1335 = vpop.f32.mrf.mxu0
    %v1336 = vadd.f32 0.0, %v1335
    %v1337 = vpop.f32.mrf.mxu0
    %v1338 = vadd.f32 0.0, %v1337
    %v1339 = vpop.f32.mrf.mxu0
    %v1340 = vadd.f32 0.0, %v1339
    %1341 = vmatprep.mubr.bf16.mxu0 0
    %1342 = vmatmul.mubr.bf16.gmra.mxu0 %v1226
    %v1343 = vpop.f32.mrf.mxu0
    %v1344 = vadd.f32 0.0, %v1343
    %v1345 = vpop.f32.mrf.mxu0
    %v1346 = vadd.f32 0.0, %v1345
    %v1347 = vpop.f32.mrf.mxu0
    %v1348 = vadd.f32 0.0, %v1347
    %v1349 = vpop.f32.mrf.mxu0
    %v1350 = vadd.f32 0.0, %v1349
    %1351 = vmatprep.mubr.bf16.mxu0 0
    %1352 = vmatmul.mubr.bf16.gmra.mxu0 %v1229
    %v1353 = vpop.f32.mrf.mxu0
    %v1354 = vadd.f32 0.0, %v1353
    %v1355 = vpop.f32.mrf.mxu0
    %v1356 = vadd.f32 0.0, %v1355
    %v1357 = vpop.f32.mrf.mxu0
    %v1358 = vadd.f32 0.0, %v1357
    %v1359 = vpop.f32.mrf.mxu0
    %v1360 = vadd.f32 0.0, %v1359
    %1361 = vmatprep.mubr.bf16.mxu0 0
    %1362 = vmatmul.mubr.bf16.gmra.mxu0 %v1232
    %v1363 = vpop.f32.mrf.mxu0
    %v1364 = vadd.f32 0.0, %v1363
    %v1365 = vpop.f32.mrf.mxu0
    %v1366 = vadd.f32 0.0, %v1365
    %v1367 = vpop.f32.mrf.mxu0
    %v1368 = vadd.f32 0.0, %v1367
    %v1369 = vpop.f32.mrf.mxu0
    %v1370 = vadd.f32 0.0, %v1369
    %1371 = vmatprep.mubr.bf16.mxu0 0
    %1372 = vmatmul.mubr.bf16.gmra.mxu0 %v1235
    %v1373 = vpop.f32.mrf.mxu0
    %v1374 = vadd.f32 0.0, %v1373
    %v1375 = vpop.f32.mrf.mxu0
    %v1376 = vadd.f32 0.0, %v1375
    %v1377 = vpop.f32.mrf.mxu0
    %v1378 = vadd.f32 0.0, %v1377
    %v1379 = vpop.f32.mrf.mxu0
    %v1380 = vadd.f32 0.0, %v1379
    %1381 = vmatprep.mubr.bf16.mxu0 0
    %1382 = vmatmul.mubr.bf16.gmra.mxu0 %v1238
    %v1383 = vpop.f32.mrf.mxu0
    %v1384 = vadd.f32 0.0, %v1383
    %v1385 = vpop.f32.mrf.mxu0
    %v1386 = vadd.f32 0.0, %v1385
    %v1387 = vpop.f32.mrf.mxu0
    %v1388 = vadd.f32 0.0, %v1387
    %v1389 = vpop.f32.mrf.mxu0
    %v1390 = vadd.f32 0.0, %v1389
    %1391 = vmatprep.mubr.bf16.mxu0 0
    %1392 = vmatmul.mubr.bf16.gmra.mxu0 %v1241
    %v1393 = vpop.f32.mrf.mxu0
    %v1394 = vadd.f32 0.0, %v1393
    %v1395 = vpop.f32.mrf.mxu0
    %v1396 = vadd.f32 0.0, %v1395
    %v1397 = vpop.f32.mrf.mxu0
    %v1398 = vadd.f32 0.0, %v1397
    %v1399 = vpop.f32.mrf.mxu0
    %v1400 = vadd.f32 0.0, %v1399
    %1401 = vdwg.mxu0
    %v1402 = vadd.f32 %v1043, %v1284
    %v1403 = vadd.f32 %v1044, %v1286
    %v1404 = vadd.f32 %v1045, %v1288
    %v1405 = vadd.f32 %v1046, %v1290
    %v1406 = vadd.f32 %v1047, %v1294
    %v1407 = vadd.f32 %v1048, %v1296
    %v1408 = vadd.f32 %v1049, %v1298
    %v1409 = vadd.f32 %v1050, %v1300
    %v1410 = vadd.f32 %v1051, %v1304
    %v1411 = vadd.f32 %v1052, %v1306
    %v1412 = vadd.f32 %v1053, %v1308
    %v1413 = vadd.f32 %v1054, %v1310
    %v1414 = vadd.f32 %v1055, %v1314
    %v1415 = vadd.f32 %v1056, %v1316
    %v1416 = vadd.f32 %v1057, %v1318
    %v1417 = vadd.f32 %v1058, %v1320
    %v1418 = vadd.f32 %v1059, %v1324
    %v1419 = vadd.f32 %v1060, %v1326
    %v1420 = vadd.f32 %v1061, %v1328
    %v1421 = vadd.f32 %v1062, %v1330
    %v1422 = vadd.f32 %v1063, %v1334
    %v1423 = vadd.f32 %v1064, %v1336
    %v1424 = vadd.f32 %v1065, %v1338
    %v1425 = vadd.f32 %v1066, %v1340
    %v1426 = vadd.f32 %v1067, %v1344
    %v1427 = vadd.f32 %v1068, %v1346
    %v1428 = vadd.f32 %v1069, %v1348
    %v1429 = vadd.f32 %v1070, %v1350
    %v1430 = vadd.f32 %v1071, %v1354
    %v1431 = vadd.f32 %v1072, %v1356
    %v1432 = vadd.f32 %v1073, %v1358
    %v1433 = vadd.f32 %v1074, %v1360
    %v1434 = vadd.f32 %v1075, %v1364
    %v1435 = vadd.f32 %v1076, %v1366
    %v1436 = vadd.f32 %v1077, %v1368
    %v1437 = vadd.f32 %v1078, %v1370
    %v1438 = vadd.f32 %v1079, %v1374
    %v1439 = vadd.f32 %v1080, %v1376
    %v1440 = vadd.f32 %v1081, %v1378
    %v1441 = vadd.f32 %v1082, %v1380
    %v1442 = vadd.f32 %v1083, %v1384
    %v1443 = vadd.f32 %v1084, %v1386
    %v1444 = vadd.f32 %v1085, %v1388
    %v1445 = vadd.f32 %v1086, %v1390
    %v1446 = vadd.f32 %v1087, %v1394
    %v1447 = vadd.f32 %v1088, %v1396
    %v1448 = vadd.f32 %v1089, %v1398
    %v1449 = vadd.f32 %v1090, %v1400
    %vm1450 = vcmask 1043456
    %v1451 = vrot.slane %v127, 4
    %v1452 = vrot.slane %v128, 4
    %v1453 = vsel %vm1450, %v1451, %v1452
    %v1454 = vrot.slane %v129, 4
    %v1455 = vsel %vm1450, %v1452, %v1454
    %v1456 = vrot.slane %v130, 4
    %v1457 = vsel %vm1450, %v1454, %v1456
    %v1458 = vrot.slane %v131, 4
    %v1459 = vrot.slane %v132, 4
    %v1460 = vsel %vm1450, %v1458, %v1459
    %v1461 = vrot.slane %v133, 4
    %v1462 = vsel %vm1450, %v1459, %v1461
    %v1463 = vrot.slane %v134, 4
    %v1464 = vsel %vm1450, %v1461, %v1463
    %v1465 = vrot.slane %v135, 4
    %v1466 = vrot.slane %v136, 4
    %v1467 = vsel %vm1450, %v1465, %v1466
    %v1468 = vrot.slane %v137, 4
    %v1469 = vsel %vm1450, %v1466, %v1468
    %v1470 = vrot.slane %v138, 4
    %v1471 = vsel %vm1450, %v1468, %v1470
    %v1472 = vrot.slane %v139, 4
    %v1473 = vrot.slane %v140, 4
    %v1474 = vsel %vm1450, %v1472, %v1473
    %v1475 = vrot.slane %v141, 4
    %v1476 = vsel %vm1450, %v1473, %v1475
    %v1477 = vrot.slane %v142, 4
    %v1478 = vsel %vm1450, %v1475, %v1477
    %v1479 = vrot.slane %v143, 4
    %v1480 = vrot.slane %v144, 4
    %v1481 = vsel %vm1450, %v1479, %v1480
    %v1482 = vrot.slane %v145, 4
    %v1483 = vsel %vm1450, %v1480, %v1482
    %v1484 = vrot.slane %v146, 4
    %v1485 = vsel %vm1450, %v1482, %v1484
    %v1486 = vrot.slane %v147, 4
    %v1487 = vrot.slane %v148, 4
    %v1488 = vsel %vm1450, %v1486, %v1487
    %v1489 = vrot.slane %v149, 4
    %v1490 = vsel %vm1450, %v1487, %v1489
    %v1491 = vrot.slane %v150, 4
    %v1492 = vsel %vm1450, %v1489, %v1491
    %v1493 = vrot.slane %v151, 4
    %v1494 = vrot.slane %v152, 4
    %v1495 = vsel %vm1450, %v1493, %v1494
    %v1496 = vrot.slane %v153, 4
    %v1497 = vsel %vm1450, %v1494, %v1496
    %v1498 = vrot.slane %v154, 4
    %v1499 = vsel %vm1450, %v1496, %v1498
    %v1500 = vrot.slane %v155, 4
    %v1501 = vrot.slane %v156, 4
    %v1502 = vsel %vm1450, %v1500, %v1501
    %v1503 = vrot.slane %v157, 4
    %v1504 = vsel %vm1450, %v1501, %v1503
    %v1505 = vrot.slane %v158, 4
    %v1506 = vsel %vm1450, %v1503, %v1505
    %v1531 = vpack.c.bf16 %v1455, %v1453
    %v1532 = vpack.c.bf16 %v1460, %v1457
    %v1533 = vpack.c.bf16 %v1464, %v1462
    %v1534 = vpack.c.bf16 %v1469, %v1467
    %v1535 = vpack.c.bf16 %v1474, %v1471
    %v1536 = vpack.c.bf16 %v1478, %v1476
    %v1537 = vpack.c.bf16 %v1483, %v1481
    %v1538 = vpack.c.bf16 %v1488, %v1485
    %v1539 = vpack.c.bf16 %v1492, %v1490
    %v1540 = vpack.c.bf16 %v1497, %v1495
    %v1541 = vpack.c.bf16 %v1502, %v1499
    %v1542 = vpack.c.bf16 %v1506, %v1504
    %s1543 = scalar_lea.vmem [#allocation2], 128
    %v1544 = vld [vmem:[%s1543] sm:$0xff]
    %v1545 = vld [vmem:[%s1543 + $0x8] sm:$0xff]
    %v1546 = vld [vmem:[%s1543 + $0x10] sm:$0xff]
    %v1547 = vld [vmem:[%s1543 + $0x18] sm:$0x33]
    %v1552 = vunpack.c.l.b16 %v1544
    %v1553 = vunpack.c.h.b16 %v1544
    %v1554 = vunpack.c.l.b16 %v1545
    %v1555 = vunpack.c.h.b16 %v1545
    %v1556 = vunpack.c.l.b16 %v1546
    %v1557 = vunpack.c.h.b16 %v1546
    %v1558 = vunpack.c.l.b16 %v1547
    %v1559 = vunpack.c.h.b16 %v1547
    %v1560 = vpack.c.b16 %v1554, %v1552
    %v1561 = vpack.c.b16 %v1555, %v1553
    %v1562 = vpack.c.b16 %v1558, %v1556
    %v1563 = vpack.c.b16 %v1559, %v1557
    %v1567 = vsel %vm323, %v1531, 0
    %v1570 = vsel %vm323, %v1532, 0
    %v1573 = vsel %vm323, %v1533, 0
    %v1576 = vsel %vm323, %v1534, 0
    %v1579 = vsel %vm323, %v1535, 0
    %v1582 = vsel %vm323, %v1536, 0
    %v1585 = vsel %vm323, %v1537, 0
    %v1588 = vsel %vm323, %v1538, 0
    %v1591 = vsel %vm323, %v1539, 0
    %v1594 = vsel %vm323, %v1540, 0
    %v1597 = vsel %vm323, %v1541, 0
    %v1600 = vsel %vm323, %v1542, 0
    %v1603 = vsel %vm360, %v1562, 0
    %v1606 = vsel %vm360, %v1563, 0
    %1608 = vmatprep.subr.bf16.mxu0 0
    %1609 = vmatpush1.bf16.msra.mxu0 0
    %1610 = vmatprep.subr.bf16.mxu0 0
    %1611 = vmatpush1.bf16.msra.mxu0 0
    %1612 = vmatprep.subr.bf16.mxu0 0
    %1613 = vmatpush1.bf16.msra.mxu0 0
    %1614 = vmatprep.subr.bf16.mxu0 0
    %1615 = vmatpush1.bf16.msra.mxu0 0
    %1616 = vmatprep.subr.bf16.mxu0 0
    %1617 = vmatpush1.bf16.msra.mxu0 0
    %1618 = vmatprep.subr.bf16.mxu0 0
    %1619 = vmatpush1.bf16.msra.mxu0 0
    %1620 = vmatprep.subr.bf16.mxu0 %v1606
    %1621 = vmatpush1.bf16.msra.mxu0 %v1603
    %1622 = vmatprep.subr.bf16.mxu0 %v1561
    %1623 = vmatpush1.bf16.msra.mxu0 %v1560
    %1624 = vmatprep.subr.bf16.mxu0 0
    %1625 = vmatpush2.bf16.msra.mxu0 0
    %1626 = vmatprep.subr.bf16.mxu0 0
    %1627 = vmatpush2.bf16.msra.mxu0 0
    %1628 = vmatprep.subr.bf16.mxu0 0
    %1629 = vmatpush2.bf16.msra.mxu0 0
    %1630 = vmatprep.subr.bf16.mxu0 0
    %1631 = vmatpush2.bf16.msra.mxu0 0
    %1632 = vmatprep.subr.bf16.mxu0 0
    %1633 = vmatpush2.bf16.msra.mxu0 0
    %1634 = vmatprep.subr.bf16.mxu0 0
    %1635 = vmatpush2.bf16.msra.mxu0 0
    %1636 = vmatprep.subr.bf16.mxu0 0
    %1637 = vmatpush2.bf16.msra.mxu0 0
    %1638 = vmatprep.subr.bf16.mxu0 0
    %1639 = vmatpush2.bf16.msra.mxu0 0
    %1640 = vmatprep.mubr.bf16.mxu0 0
    %1641 = vmatmul.mubr.bf16.gmra.mxu0 %v1567
    %v1642 = vpop.f32.mrf.mxu0
    %v1643 = vadd.f32 0.0, %v1642
    %v1644 = vpop.f32.mrf.mxu0
    %v1645 = vadd.f32 0.0, %v1644
    %v1646 = vpop.f32.mrf.mxu0
    %v1647 = vadd.f32 0.0, %v1646
    %v1648 = vpop.f32.mrf.mxu0
    %v1649 = vadd.f32 0.0, %v1648
    %1650 = vmatprep.mubr.bf16.mxu0 0
    %1651 = vmatmul.mubr.bf16.gmra.mxu0 %v1570
    %v1652 = vpop.f32.mrf.mxu0
    %v1653 = vadd.f32 0.0, %v1652
    %v1654 = vpop.f32.mrf.mxu0
    %v1655 = vadd.f32 0.0, %v1654
    %v1656 = vpop.f32.mrf.mxu0
    %v1657 = vadd.f32 0.0, %v1656
    %v1658 = vpop.f32.mrf.mxu0
    %v1659 = vadd.f32 0.0, %v1658
    %1660 = vmatprep.mubr.bf16.mxu0 0
    %1661 = vmatmul.mubr.bf16.gmra.mxu0 %v1573
    %v1662 = vpop.f32.mrf.mxu0
    %v1663 = vadd.f32 0.0, %v1662
    %v1664 = vpop.f32.mrf.mxu0
    %v1665 = vadd.f32 0.0, %v1664
    %v1666 = vpop.f32.mrf.mxu0
    %v1667 = vadd.f32 0.0, %v1666
    %v1668 = vpop.f32.mrf.mxu0
    %v1669 = vadd.f32 0.0, %v1668
    %1670 = vmatprep.mubr.bf16.mxu0 0
    %1671 = vmatmul.mubr.bf16.gmra.mxu0 %v1576
    %v1672 = vpop.f32.mrf.mxu0
    %v1673 = vadd.f32 0.0, %v1672
    %v1674 = vpop.f32.mrf.mxu0
    %v1675 = vadd.f32 0.0, %v1674
    %v1676 = vpop.f32.mrf.mxu0
    %v1677 = vadd.f32 0.0, %v1676
    %v1678 = vpop.f32.mrf.mxu0
    %v1679 = vadd.f32 0.0, %v1678
    %1680 = vmatprep.mubr.bf16.mxu0 0
    %1681 = vmatmul.mubr.bf16.gmra.mxu0 %v1579
    %v1682 = vpop.f32.mrf.mxu0
    %v1683 = vadd.f32 0.0, %v1682
    %v1684 = vpop.f32.mrf.mxu0
    %v1685 = vadd.f32 0.0, %v1684
    %v1686 = vpop.f32.mrf.mxu0
    %v1687 = vadd.f32 0.0, %v1686
    %v1688 = vpop.f32.mrf.mxu0
    %v1689 = vadd.f32 0.0, %v1688
    %1690 = vmatprep.mubr.bf16.mxu0 0
    %1691 = vmatmul.mubr.bf16.gmra.mxu0 %v1582
    %v1692 = vpop.f32.mrf.mxu0
    %v1693 = vadd.f32 0.0, %v1692
    %v1694 = vpop.f32.mrf.mxu0
    %v1695 = vadd.f32 0.0, %v1694
    %v1696 = vpop.f32.mrf.mxu0
    %v1697 = vadd.f32 0.0, %v1696
    %v1698 = vpop.f32.mrf.mxu0
    %v1699 = vadd.f32 0.0, %v1698
    %1700 = vmatprep.mubr.bf16.mxu0 0
    %1701 = vmatmul.mubr.bf16.gmra.mxu0 %v1585
    %v1702 = vpop.f32.mrf.mxu0
    %v1703 = vadd.f32 0.0, %v1702
    %v1704 = vpop.f32.mrf.mxu0
    %v1705 = vadd.f32 0.0, %v1704
    %v1706 = vpop.f32.mrf.mxu0
    %v1707 = vadd.f32 0.0, %v1706
    %v1708 = vpop.f32.mrf.mxu0
    %v1709 = vadd.f32 0.0, %v1708
    %1710 = vmatprep.mubr.bf16.mxu0 0
    %1711 = vmatmul.mubr.bf16.gmra.mxu0 %v1588
    %v1712 = vpop.f32.mrf.mxu0
    %v1713 = vadd.f32 0.0, %v1712
    %v1714 = vpop.f32.mrf.mxu0
    %v1715 = vadd.f32 0.0, %v1714
    %v1716 = vpop.f32.mrf.mxu0
    %v1717 = vadd.f32 0.0, %v1716
    %v1718 = vpop.f32.mrf.mxu0
    %v1719 = vadd.f32 0.0, %v1718
    %1720 = vmatprep.mubr.bf16.mxu0 0
    %1721 = vmatmul.mubr.bf16.gmra.mxu0 %v1591
    %v1722 = vpop.f32.mrf.mxu0
    %v1723 = vadd.f32 0.0, %v1722
    %v1724 = vpop.f32.mrf.mxu0
    %v1725 = vadd.f32 0.0, %v1724
    %v1726 = vpop.f32.mrf.mxu0
    %v1727 = vadd.f32 0.0, %v1726
    %v1728 = vpop.f32.mrf.mxu0
    %v1729 = vadd.f32 0.0, %v1728
    %1730 = vmatprep.mubr.bf16.mxu0 0
    %1731 = vmatmul.mubr.bf16.gmra.mxu0 %v1594
    %v1732 = vpop.f32.mrf.mxu0
    %v1733 = vadd.f32 0.0, %v1732
    %v1734 = vpop.f32.mrf.mxu0
    %v1735 = vadd.f32 0.0, %v1734
    %v1736 = vpop.f32.mrf.mxu0
    %v1737 = vadd.f32 0.0, %v1736
    %v1738 = vpop.f32.mrf.mxu0
    %v1739 = vadd.f32 0.0, %v1738
    %1740 = vmatprep.mubr.bf16.mxu0 0
    %1741 = vmatmul.mubr.bf16.gmra.mxu0 %v1597
    %v1742 = vpop.f32.mrf.mxu0
    %v1743 = vadd.f32 0.0, %v1742
    %v1744 = vpop.f32.mrf.mxu0
    %v1745 = vadd.f32 0.0, %v1744
    %v1746 = vpop.f32.mrf.mxu0
    %v1747 = vadd.f32 0.0, %v1746
    %v1748 = vpop.f32.mrf.mxu0
    %v1749 = vadd.f32 0.0, %v1748
    %1750 = vmatprep.mubr.bf16.mxu0 0
    %1751 = vmatmul.mubr.bf16.gmra.mxu0 %v1600
    %v1752 = vpop.f32.mrf.mxu0
    %v1753 = vadd.f32 0.0, %v1752
    %v1754 = vpop.f32.mrf.mxu0
    %v1755 = vadd.f32 0.0, %v1754
    %v1756 = vpop.f32.mrf.mxu0
    %v1757 = vadd.f32 0.0, %v1756
    %v1758 = vpop.f32.mrf.mxu0
    %v1759 = vadd.f32 0.0, %v1758
    %1760 = vdwg.mxu0
    %v1761 = vadd.f32 %v1402, %v1643
    %v1762 = vadd.f32 %v1403, %v1645
    %v1763 = vadd.f32 %v1404, %v1647
    %v1764 = vadd.f32 %v1405, %v1649
    %v1765 = vadd.f32 %v1406, %v1653
    %v1766 = vadd.f32 %v1407, %v1655
    %v1767 = vadd.f32 %v1408, %v1657
    %v1768 = vadd.f32 %v1409, %v1659
    %v1769 = vadd.f32 %v1410, %v1663
    %v1770 = vadd.f32 %v1411, %v1665
    %v1771 = vadd.f32 %v1412, %v1667
    %v1772 = vadd.f32 %v1413, %v1669
    %v1773 = vadd.f32 %v1414, %v1673
    %v1774 = vadd.f32 %v1415, %v1675
    %v1775 = vadd.f32 %v1416, %v1677
    %v1776 = vadd.f32 %v1417, %v1679
    %v1777 = vadd.f32 %v1418, %v1683
    %v1778 = vadd.f32 %v1419, %v1685
    %v1779 = vadd.f32 %v1420, %v1687
    %v1780 = vadd.f32 %v1421, %v1689
    %v1781 = vadd.f32 %v1422, %v1693
    %v1782 = vadd.f32 %v1423, %v1695
    %v1783 = vadd.f32 %v1424, %v1697
    %v1784 = vadd.f32 %v1425, %v1699
    %v1785 = vadd.f32 %v1426, %v1703
    %v1786 = vadd.f32 %v1427, %v1705
    %v1787 = vadd.f32 %v1428, %v1707
    %v1788 = vadd.f32 %v1429, %v1709
    %v1789 = vadd.f32 %v1430, %v1713
    %v1790 = vadd.f32 %v1431, %v1715
    %v1791 = vadd.f32 %v1432, %v1717
    %v1792 = vadd.f32 %v1433, %v1719
    %v1793 = vadd.f32 %v1434, %v1723
    %v1794 = vadd.f32 %v1435, %v1725
    %v1795 = vadd.f32 %v1436, %v1727
    %v1796 = vadd.f32 %v1437, %v1729
    %v1797 = vadd.f32 %v1438, %v1733
    %v1798 = vadd.f32 %v1439, %v1735
    %v1799 = vadd.f32 %v1440, %v1737
    %v1800 = vadd.f32 %v1441, %v1739
    %v1801 = vadd.f32 %v1442, %v1743
    %v1802 = vadd.f32 %v1443, %v1745
    %v1803 = vadd.f32 %v1444, %v1747
    %v1804 = vadd.f32 %v1445, %v1749
    %v1805 = vadd.f32 %v1446, %v1753
    %v1806 = vadd.f32 %v1447, %v1755
    %v1807 = vadd.f32 %v1448, %v1757
    %v1808 = vadd.f32 %v1449, %v1759
    %v1809 = vld [vmem:[%s2] sm:$0x3]
    %v1811 = vlaneseq
    %v1812 = vshrl.u32 %v1811, 7
    %v1813 = vsub.s32 0, %v1812
    %v1814 = vrot.slane %v1809, %v1813
    %v1815 = vlaneseq
    %v1816 = vshrl.u32 %v1815, 7
    %v1817 = vsub.s32 1, %v1816
    %v1818 = vrot.slane %v1809, %v1817
    %v1821 = vadd.f32 %v1761, %v1814
    %v1822 = vadd.f32 %v1762, %v1818
    %v1823 = vadd.f32 %v1763, %v1814
    %v1824 = vadd.f32 %v1764, %v1818
    %v1825 = vadd.f32 %v1765, %v1814
    %v1826 = vadd.f32 %v1766, %v1818
    %v1827 = vadd.f32 %v1767, %v1814
    %v1828 = vadd.f32 %v1768, %v1818
    %v1829 = vadd.f32 %v1769, %v1814
    %v1830 = vadd.f32 %v1770, %v1818
    %v1831 = vadd.f32 %v1771, %v1814
    %v1832 = vadd.f32 %v1772, %v1818
    %v1833 = vadd.f32 %v1773, %v1814
    %v1834 = vadd.f32 %v1774, %v1818
    %v1835 = vadd.f32 %v1775, %v1814
    %v1836 = vadd.f32 %v1776, %v1818
    %v1837 = vadd.f32 %v1777, %v1814
    %v1838 = vadd.f32 %v1778, %v1818
    %v1839 = vadd.f32 %v1779, %v1814
    %v1840 = vadd.f32 %v1780, %v1818
    %v1841 = vadd.f32 %v1781, %v1814
    %v1842 = vadd.f32 %v1782, %v1818
    %v1843 = vadd.f32 %v1783, %v1814
    %v1844 = vadd.f32 %v1784, %v1818
    %v1845 = vadd.f32 %v1785, %v1814
    %v1846 = vadd.f32 %v1786, %v1818
    %v1847 = vadd.f32 %v1787, %v1814
    %v1848 = vadd.f32 %v1788, %v1818
    %v1849 = vadd.f32 %v1789, %v1814
    %v1850 = vadd.f32 %v1790, %v1818
    %v1851 = vadd.f32 %v1791, %v1814
    %v1852 = vadd.f32 %v1792, %v1818
    %v1853 = vadd.f32 %v1793, %v1814
    %v1854 = vadd.f32 %v1794, %v1818
    %v1855 = vadd.f32 %v1795, %v1814
    %v1856 = vadd.f32 %v1796, %v1818
    %v1857 = vadd.f32 %v1797, %v1814
    %v1858 = vadd.f32 %v1798, %v1818
    %v1859 = vadd.f32 %v1799, %v1814
    %v1860 = vadd.f32 %v1800, %v1818
    %v1861 = vadd.f32 %v1801, %v1814
    %v1862 = vadd.f32 %v1802, %v1818
    %v1863 = vadd.f32 %v1803, %v1814
    %v1864 = vadd.f32 %v1804, %v1818
    %v1865 = vadd.f32 %v1805, %v1814
    %v1866 = vadd.f32 %v1806, %v1818
    %v1867 = vadd.f32 %v1807, %v1814
    %v1868 = vadd.f32 %v1808, %v1818
    %v1869 = vld [vmem:[#allocation4] sm:$0xff]
    %v1870 = vld [vmem:[#allocation4 + $0x8] sm:$0xff]
    %v1871 = vld [vmem:[#allocation4 + $0x10] sm:$0xff]
    %v1872 = vld [vmem:[#allocation4 + $0x18] sm:$0xff]
    %v1873 = vld [vmem:[#allocation4 + $0x20] sm:$0xff]
    %v1874 = vld [vmem:[#allocation4 + $0x28] sm:$0xff]
    %v1875 = vld [vmem:[#allocation4 + $0x30] sm:$0xff]
    %v1876 = vld [vmem:[#allocation4 + $0x38] sm:$0xff]
    %v1877 = vld [vmem:[#allocation4 + $0x40] sm:$0xff]
    %v1878 = vld [vmem:[#allocation4 + $0x48] sm:$0xff]
    %v1879 = vld [vmem:[#allocation4 + $0x50] sm:$0xff]
    %v1880 = vld [vmem:[#allocation4 + $0x58] sm:$0xff]
    %v1881 = vld [vmem:[#allocation4 + $0x60] sm:$0xff]
    %v1882 = vld [vmem:[#allocation4 + $0x68] sm:$0xff]
    %v1883 = vld [vmem:[#allocation4 + $0x70] sm:$0xff]
    %v1884 = vld [vmem:[#allocation4 + $0x78] sm:$0xff]
    %v1885 = vld [vmem:[#allocation4 + $0x80] sm:$0xff]
    %v1886 = vld [vmem:[#allocation4 + $0x88] sm:$0xff]
    %v1887 = vld [vmem:[#allocation4 + $0x90] sm:$0xff]
    %v1888 = vld [vmem:[#allocation4 + $0x98] sm:$0xff]
    %v1889 = vld [vmem:[#allocation4 + $0xa0] sm:$0xff]
    %v1890 = vld [vmem:[#allocation4 + $0xa8] sm:$0xff]
    %v1891 = vld [vmem:[#allocation4 + $0xb0] sm:$0xff]
    %v1892 = vld [vmem:[#allocation4 + $0xb8] sm:$0xff]
    %vm1893 = vcmask 523264
    %v1895 = vsel %vm1893, %v1870, 0
    %v1898 = vsel %vm1893, %v1872, 0
    %v1901 = vsel %vm1893, %v1874, 0
    %v1904 = vsel %vm1893, %v1876, 0
    %v1907 = vsel %vm1893, %v1878, 0
    %v1910 = vsel %vm1893, %v1880, 0
    %v1913 = vsel %vm1893, %v1882, 0
    %v1916 = vsel %vm1893, %v1884, 0
    %v1919 = vsel %vm1893, %v1886, 0
    %v1922 = vsel %vm1893, %v1888, 0
    %v1925 = vsel %vm1893, %v1890, 0
    %v1928 = vsel %vm1893, %v1892, 0
    %1930 = vmatprep.subr.mxu0 %v1852
    %1931 = vmatpush1.msra.mxu0 %v1851
    %1932 = vmatprep.subr.mxu0 %v1850
    %1933 = vmatpush1.msra.mxu0 %v1849
    %1934 = vmatprep.subr.mxu0 %v1848
    %1935 = vmatpush1.msra.mxu0 %v1847
    %1936 = vmatprep.subr.mxu0 %v1846
    %1937 = vmatpush1.msra.mxu0 %v1845
    %1938 = vmatprep.subr.mxu0 %v1844
    %1939 = vmatpush1.msra.mxu0 %v1843
    %1940 = vmatprep.subr.mxu0 %v1842
    %1941 = vmatpush1.msra.mxu0 %v1841
    %1942 = vmatprep.subr.mxu0 %v1840
    %1943 = vmatpush1.msra.mxu0 %v1839
    %1944 = vmatprep.subr.mxu0 %v1838
    %1945 = vmatpush1.msra.mxu0 %v1837
    %1946 = vmatprep.subr.mxu0 %v1836
    %1947 = vmatpush1.msra.mxu0 %v1835
    %1948 = vmatprep.subr.mxu0 %v1834
    %1949 = vmatpush1.msra.mxu0 %v1833
    %1950 = vmatprep.subr.mxu0 %v1832
    %1951 = vmatpush1.msra.mxu0 %v1831
    %1952 = vmatprep.subr.mxu0 %v1830
    %1953 = vmatpush1.msra.mxu0 %v1829
    %1954 = vmatprep.subr.mxu0 %v1828
    %1955 = vmatpush1.msra.mxu0 %v1827
    %1956 = vmatprep.subr.mxu0 %v1826
    %1957 = vmatpush1.msra.mxu0 %v1825
    %1958 = vmatprep.subr.mxu0 %v1824
    %1959 = vmatpush1.msra.mxu0 %v1823
    %1960 = vmatprep.subr.mxu0 %v1822
    %1961 = vmatpush1.msra.mxu0 %v1821
    %1962 = vmatprep.subr.mxu0 0.0
    %1963 = vmatpush2.msra.mxu0 0.0
    %1964 = vmatprep.subr.mxu0 0.0
    %1965 = vmatpush2.msra.mxu0 0.0
    %1966 = vmatprep.subr.mxu0 0.0
    %1967 = vmatpush2.msra.mxu0 0.0
    %1968 = vmatprep.subr.mxu0 0.0
    %1969 = vmatpush2.msra.mxu0 0.0
    %1970 = vmatprep.subr.mxu0 0.0
    %1971 = vmatpush2.msra.mxu0 0.0
    %1972 = vmatprep.subr.mxu0 0.0
    %1973 = vmatpush2.msra.mxu0 0.0
    %1974 = vmatprep.subr.mxu0 0.0
    %1975 = vmatpush2.msra.mxu0 0.0
    %1976 = vmatprep.subr.mxu0 0.0
    %1977 = vmatpush2.msra.mxu0 0.0
    %1978 = vmatprep.subr.mxu0 %v1868
    %1979 = vmatpush2.msra.mxu0 %v1867
    %1980 = vmatprep.subr.mxu0 %v1866
    %1981 = vmatpush2.msra.mxu0 %v1865
    %1982 = vmatprep.subr.mxu0 %v1864
    %1983 = vmatpush2.msra.mxu0 %v1863
    %1984 = vmatprep.subr.mxu0 %v1862
    %1985 = vmatpush2.msra.mxu0 %v1861
    %1986 = vmatprep.subr.mxu0 %v1860
    %1987 = vmatpush2.msra.mxu0 %v1859
    %1988 = vmatprep.subr.mxu0 %v1858
    %1989 = vmatpush2.msra.mxu0 %v1857
    %1990 = vmatprep.subr.mxu0 %v1856
    %1991 = vmatpush2.msra.mxu0 %v1855
    %1992 = vmatprep.subr.mxu0 %v1854
    %1993 = vmatpush2.msra.mxu0 %v1853
    %1994 = vmatprep.mubr.f32.mxu0 %v1895
    %1995 = vmatmul.mubr.f32.gmra.mxu0 %v1869
    %v1996 = vpop.f32.mrf.mxu0
    %v1997 = vadd.f32 0.0, %v1996
    %v1998 = vpop.f32.mrf.mxu0
    %v1999 = vadd.f32 0.0, %v1998
    %2000 = vmatprep.mubr.f32.mxu0 %v1898
    %2001 = vmatmul.mubr.f32.gmra.mxu0 %v1871
    %v2002 = vpop.f32.mrf.mxu0
    %v2003 = vadd.f32 0.0, %v2002
    %v2004 = vpop.f32.mrf.mxu0
    %v2005 = vadd.f32 0.0, %v2004
    %2006 = vmatprep.mubr.f32.mxu0 %v1901
    %2007 = vmatmul.mubr.f32.gmra.mxu0 %v1873
    %v2008 = vpop.f32.mrf.mxu0
    %v2009 = vadd.f32 0.0, %v2008
    %v2010 = vpop.f32.mrf.mxu0
    %v2011 = vadd.f32 0.0, %v2010
    %2012 = vmatprep.mubr.f32.mxu0 %v1904
    %2013 = vmatmul.mubr.f32.gmra.mxu0 %v1875
    %v2014 = vpop.f32.mrf.mxu0
    %v2015 = vadd.f32 0.0, %v2014
    %v2016 = vpop.f32.mrf.mxu0
    %v2017 = vadd.f32 0.0, %v2016
    %2018 = vmatprep.mubr.f32.mxu0 %v1907
    %2019 = vmatmul.mubr.f32.gmra.mxu0 %v1877
    %v2020 = vpop.f32.mrf.mxu0
    %v2021 = vadd.f32 0.0, %v2020
    %v2022 = vpop.f32.mrf.mxu0
    %v2023 = vadd.f32 0.0, %v2022
    %2024 = vmatprep.mubr.f32.mxu0 %v1910
    %2025 = vmatmul.mubr.f32.gmra.mxu0 %v1879
    %v2026 = vpop.f32.mrf.mxu0
    %v2027 = vadd.f32 0.0, %v2026
    %v2028 = vpop.f32.mrf.mxu0
    %v2029 = vadd.f32 0.0, %v2028
    %2030 = vmatprep.mubr.f32.mxu0 %v1913
    %2031 = vmatmul.mubr.f32.gmra.mxu0 %v1881
    %v2032 = vpop.f32.mrf.mxu0
    %v2033 = vadd.f32 0.0, %v2032
    %v2034 = vpop.f32.mrf.mxu0
    %v2035 = vadd.f32 0.0, %v2034
    %2036 = vmatprep.mubr.f32.mxu0 %v1916
    %2037 = vmatmul.mubr.f32.gmra.mxu0 %v1883
    %v2038 = vpop.f32.mrf.mxu0
    %v2039 = vadd.f32 0.0, %v2038
    %v2040 = vpop.f32.mrf.mxu0
    %v2041 = vadd.f32 0.0, %v2040
    %2042 = vmatprep.mubr.f32.mxu0 %v1919
    %2043 = vmatmul.mubr.f32.gmra.mxu0 %v1885
    %v2044 = vpop.f32.mrf.mxu0
    %v2045 = vadd.f32 0.0, %v2044
    %v2046 = vpop.f32.mrf.mxu0
    %v2047 = vadd.f32 0.0, %v2046
    %2048 = vmatprep.mubr.f32.mxu0 %v1922
    %2049 = vmatmul.mubr.f32.gmra.mxu0 %v1887
    %v2050 = vpop.f32.mrf.mxu0
    %v2051 = vadd.f32 0.0, %v2050
    %v2052 = vpop.f32.mrf.mxu0
    %v2053 = vadd.f32 0.0, %v2052
    %2054 = vmatprep.mubr.f32.mxu0 %v1925
    %2055 = vmatmul.mubr.f32.gmra.mxu0 %v1889
    %v2056 = vpop.f32.mrf.mxu0
    %v2057 = vadd.f32 0.0, %v2056
    %v2058 = vpop.f32.mrf.mxu0
    %v2059 = vadd.f32 0.0, %v2058
    %2060 = vmatprep.mubr.f32.mxu0 %v1928
    %2061 = vmatmul.mubr.f32.gmra.mxu0 %v1891
    %v2062 = vpop.f32.mrf.mxu0
    %v2063 = vadd.f32 0.0, %v2062
    %v2064 = vpop.f32.mrf.mxu0
    %v2065 = vadd.f32 0.0, %v2064
    %2066 = vdwg.mxu0
    %s2067 = scalar_lea.vmem [#allocation4], 192
    %v2068 = vld [vmem:[%s2067] sm:$0xff]
    %v2069 = vld [vmem:[%s2067 + $0x8] sm:$0xff]
    %v2070 = vld [vmem:[%s2067 + $0x10] sm:$0xff]
    %v2071 = vld [vmem:[%s2067 + $0x18] sm:$0xff]
    %v2072 = vld [vmem:[%s2067 + $0x20] sm:$0xff]
    %v2073 = vld [vmem:[%s2067 + $0x28] sm:$0xff]
    %v2074 = vld [vmem:[%s2067 + $0x30] sm:$0xff]
    %v2075 = vld [vmem:[%s2067 + $0x38] sm:$0xff]
    %v2076 = vld [vmem:[%s2067 + $0x40] sm:$0xff]
    %v2077 = vld [vmem:[%s2067 + $0x48] sm:$0xff]
    %v2078 = vld [vmem:[%s2067 + $0x50] sm:$0xff]
    %v2079 = vld [vmem:[%s2067 + $0x58] sm:$0xff]
    %v2080 = vld [vmem:[%s2067 + $0x60] sm:$0xff]
    %v2081 = vld [vmem:[%s2067 + $0x68] sm:$0xff]
    %v2082 = vld [vmem:[%s2067 + $0x70] sm:$0xff]
    %v2083 = vld [vmem:[%s2067 + $0x78] sm:$0xff]
    %v2084 = vld [vmem:[%s2067 + $0x80] sm:$0xff]
    %v2085 = vld [vmem:[%s2067 + $0x88] sm:$0xff]
    %v2086 = vld [vmem:[%s2067 + $0x90] sm:$0xff]
    %v2087 = vld [vmem:[%s2067 + $0x98] sm:$0xff]
    %v2088 = vld [vmem:[%s2067 + $0xa0] sm:$0xff]
    %v2089 = vld [vmem:[%s2067 + $0xa8] sm:$0xff]
    %v2090 = vld [vmem:[%s2067 + $0xb0] sm:$0xff]
    %v2091 = vld [vmem:[%s2067 + $0xb8] sm:$0xff]
    %v2093 = vsel %vm1893, %v2069, 0
    %v2096 = vsel %vm1893, %v2071, 0
    %v2099 = vsel %vm1893, %v2073, 0
    %v2102 = vsel %vm1893, %v2075, 0
    %v2105 = vsel %vm1893, %v2077, 0
    %v2108 = vsel %vm1893, %v2079, 0
    %v2111 = vsel %vm1893, %v2081, 0
    %v2114 = vsel %vm1893, %v2083, 0
    %v2117 = vsel %vm1893, %v2085, 0
    %v2120 = vsel %vm1893, %v2087, 0
    %v2123 = vsel %vm1893, %v2089, 0
    %v2126 = vsel %vm1893, %v2091, 0
    %2128 = vmatprep.subr.mxu0 %v1852
    %2129 = vmatpush1.msra.mxu0 %v1851
    %2130 = vmatprep.subr.mxu0 %v1850
    %2131 = vmatpush1.msra.mxu0 %v1849
    %2132 = vmatprep.subr.mxu0 %v1848
    %2133 = vmatpush1.msra.mxu0 %v1847
    %2134 = vmatprep.subr.mxu0 %v1846
    %2135 = vmatpush1.msra.mxu0 %v1845
    %2136 = vmatprep.subr.mxu0 %v1844
    %2137 = vmatpush1.msra.mxu0 %v1843
    %2138 = vmatprep.subr.mxu0 %v1842
    %2139 = vmatpush1.msra.mxu0 %v1841
    %2140 = vmatprep.subr.mxu0 %v1840
    %2141 = vmatpush1.msra.mxu0 %v1839
    %2142 = vmatprep.subr.mxu0 %v1838
    %2143 = vmatpush1.msra.mxu0 %v1837
    %2144 = vmatprep.subr.mxu0 %v1836
    %2145 = vmatpush1.msra.mxu0 %v1835
    %2146 = vmatprep.subr.mxu0 %v1834
    %2147 = vmatpush1.msra.mxu0 %v1833
    %2148 = vmatprep.subr.mxu0 %v1832
    %2149 = vmatpush1.msra.mxu0 %v1831
    %2150 = vmatprep.subr.mxu0 %v1830
    %2151 = vmatpush1.msra.mxu0 %v1829
    %2152 = vmatprep.subr.mxu0 %v1828
    %2153 = vmatpush1.msra.mxu0 %v1827
    %2154 = vmatprep.subr.mxu0 %v1826
    %2155 = vmatpush1.msra.mxu0 %v1825
    %2156 = vmatprep.subr.mxu0 %v1824
    %2157 = vmatpush1.msra.mxu0 %v1823
    %2158 = vmatprep.subr.mxu0 %v1822
    %2159 = vmatpush1.msra.mxu0 %v1821
    %2160 = vmatprep.subr.mxu0 0.0
    %2161 = vmatpush2.msra.mxu0 0.0
    %2162 = vmatprep.subr.mxu0 0.0
    %2163 = vmatpush2.msra.mxu0 0.0
    %2164 = vmatprep.subr.mxu0 0.0
    %2165 = vmatpush2.msra.mxu0 0.0
    %2166 = vmatprep.subr.mxu0 0.0
    %2167 = vmatpush2.msra.mxu0 0.0
    %2168 = vmatprep.subr.mxu0 0.0
    %2169 = vmatpush2.msra.mxu0 0.0
    %2170 = vmatprep.subr.mxu0 0.0
    %2171 = vmatpush2.msra.mxu0 0.0
    %2172 = vmatprep.subr.mxu0 0.0
    %2173 = vmatpush2.msra.mxu0 0.0
    %2174 = vmatprep.subr.mxu0 0.0
    %2175 = vmatpush2.msra.mxu0 0.0
    %2176 = vmatprep.subr.mxu0 %v1868
    %2177 = vmatpush2.msra.mxu0 %v1867
    %2178 = vmatprep.subr.mxu0 %v1866
    %2179 = vmatpush2.msra.mxu0 %v1865
    %2180 = vmatprep.subr.mxu0 %v1864
    %2181 = vmatpush2.msra.mxu0 %v1863
    %2182 = vmatprep.subr.mxu0 %v1862
    %2183 = vmatpush2.msra.mxu0 %v1861
    %2184 = vmatprep.subr.mxu0 %v1860
    %2185 = vmatpush2.msra.mxu0 %v1859
    %2186 = vmatprep.subr.mxu0 %v1858
    %2187 = vmatpush2.msra.mxu0 %v1857
    %2188 = vmatprep.subr.mxu0 %v1856
    %2189 = vmatpush2.msra.mxu0 %v1855
    %2190 = vmatprep.subr.mxu0 %v1854
    %2191 = vmatpush2.msra.mxu0 %v1853
    %2192 = vmatprep.mubr.f32.mxu0 %v2093
    %2193 = vmatmul.mubr.f32.gmra.mxu0 %v2068
    %v2194 = vpop.f32.mrf.mxu0
    %v2195 = vadd.f32 0.0, %v2194
    %v2196 = vpop.f32.mrf.mxu0
    %v2197 = vadd.f32 0.0, %v2196
    %2198 = vmatprep.mubr.f32.mxu0 %v2096
    %2199 = vmatmul.mubr.f32.gmra.mxu0 %v2070
    %v2200 = vpop.f32.mrf.mxu0
    %v2201 = vadd.f32 0.0, %v2200
    %v2202 = vpop.f32.mrf.mxu0
    %v2203 = vadd.f32 0.0, %v2202
    %2204 = vmatprep.mubr.f32.mxu0 %v2099
    %2205 = vmatmul.mubr.f32.gmra.mxu0 %v2072
    %v2206 = vpop.f32.mrf.mxu0
    %v2207 = vadd.f32 0.0, %v2206
    %v2208 = vpop.f32.mrf.mxu0
    %v2209 = vadd.f32 0.0, %v2208
    %2210 = vmatprep.mubr.f32.mxu0 %v2102
    %2211 = vmatmul.mubr.f32.gmra.mxu0 %v2074
    %v2212 = vpop.f32.mrf.mxu0
    %v2213 = vadd.f32 0.0, %v2212
    %v2214 = vpop.f32.mrf.mxu0
    %v2215 = vadd.f32 0.0, %v2214
    %2216 = vmatprep.mubr.f32.mxu0 %v2105
    %2217 = vmatmul.mubr.f32.gmra.mxu0 %v2076
    %v2218 = vpop.f32.mrf.mxu0
    %v2219 = vadd.f32 0.0, %v2218
    %v2220 = vpop.f32.mrf.mxu0
    %v2221 = vadd.f32 0.0, %v2220
    %2222 = vmatprep.mubr.f32.mxu0 %v2108
    %2223 = vmatmul.mubr.f32.gmra.mxu0 %v2078
    %v2224 = vpop.f32.mrf.mxu0
    %v2225 = vadd.f32 0.0, %v2224
    %v2226 = vpop.f32.mrf.mxu0
    %v2227 = vadd.f32 0.0, %v2226
    %2228 = vmatprep.mubr.f32.mxu0 %v2111
    %2229 = vmatmul.mubr.f32.gmra.mxu0 %v2080
    %v2230 = vpop.f32.mrf.mxu0
    %v2231 = vadd.f32 0.0, %v2230
    %v2232 = vpop.f32.mrf.mxu0
    %v2233 = vadd.f32 0.0, %v2232
    %2234 = vmatprep.mubr.f32.mxu0 %v2114
    %2235 = vmatmul.mubr.f32.gmra.mxu0 %v2082
    %v2236 = vpop.f32.mrf.mxu0
    %v2237 = vadd.f32 0.0, %v2236
    %v2238 = vpop.f32.mrf.mxu0
    %v2239 = vadd.f32 0.0, %v2238
    %2240 = vmatprep.mubr.f32.mxu0 %v2117
    %2241 = vmatmul.mubr.f32.gmra.mxu0 %v2084
    %v2242 = vpop.f32.mrf.mxu0
    %v2243 = vadd.f32 0.0, %v2242
    %v2244 = vpop.f32.mrf.mxu0
    %v2245 = vadd.f32 0.0, %v2244
    %2246 = vmatprep.mubr.f32.mxu0 %v2120
    %2247 = vmatmul.mubr.f32.gmra.mxu0 %v2086
    %v2248 = vpop.f32.mrf.mxu0
    %v2249 = vadd.f32 0.0, %v2248
    %v2250 = vpop.f32.mrf.mxu0
    %v2251 = vadd.f32 0.0, %v2250
    %2252 = vmatprep.mubr.f32.mxu0 %v2123
    %2253 = vmatmul.mubr.f32.gmra.mxu0 %v2088
    %v2254 = vpop.f32.mrf.mxu0
    %v2255 = vadd.f32 0.0, %v2254
    %v2256 = vpop.f32.mrf.mxu0
    %v2257 = vadd.f32 0.0, %v2256
    %2258 = vmatprep.mubr.f32.mxu0 %v2126
    %2259 = vmatmul.mubr.f32.gmra.mxu0 %v2090
    %v2260 = vpop.f32.mrf.mxu0
    %v2261 = vadd.f32 0.0, %v2260
    %v2262 = vpop.f32.mrf.mxu0
    %v2263 = vadd.f32 0.0, %v2262
    %2264 = vdwg.mxu0
    %v2265 = vmax.f32 %v1997, %v2195
    %v2266 = vmax.f32 %v1999, %v2197
    %v2267 = vmax.f32 %v2003, %v2201
    %v2268 = vmax.f32 %v2005, %v2203
    %v2269 = vmax.f32 %v2009, %v2207
    %v2270 = vmax.f32 %v2011, %v2209
    %v2271 = vmax.f32 %v2015, %v2213
    %v2272 = vmax.f32 %v2017, %v2215
    %v2273 = vmax.f32 %v2021, %v2219
    %v2274 = vmax.f32 %v2023, %v2221
    %v2275 = vmax.f32 %v2027, %v2225
    %v2276 = vmax.f32 %v2029, %v2227
    %v2277 = vmax.f32 %v2033, %v2231
    %v2278 = vmax.f32 %v2035, %v2233
    %v2279 = vmax.f32 %v2039, %v2237
    %v2280 = vmax.f32 %v2041, %v2239
    %v2281 = vmax.f32 %v2045, %v2243
    %v2282 = vmax.f32 %v2047, %v2245
    %v2283 = vmax.f32 %v2051, %v2249
    %v2284 = vmax.f32 %v2053, %v2251
    %v2285 = vmax.f32 %v2057, %v2255
    %v2286 = vmax.f32 %v2059, %v2257
    %v2287 = vmax.f32 %v2063, %v2261
    %v2288 = vmax.f32 %v2065, %v2263
    %v2289 = vmax.f32 %v2265, %v2266
    %v2290 = vmax.f32 %v2267, %v2268
    %v2291 = vmax.f32 %v2269, %v2270
    %v2292 = vmax.f32 %v2271, %v2272
    %v2293 = vmax.f32 %v2273, %v2274
    %v2294 = vmax.f32 %v2275, %v2276
    %v2295 = vmax.f32 %v2277, %v2278
    %v2296 = vmax.f32 %v2279, %v2280
    %v2297 = vmax.f32 %v2281, %v2282
    %v2298 = vmax.f32 %v2283, %v2284
    %v2299 = vmax.f32 %v2285, %v2286
    %v2300 = vmax.f32 %v2287, %v2288
    %v2301 = vmax.f32 %v2289, 0.0
    %v2302 = vmax.f32 %v2290, 0.0
    %v2303 = vmax.f32 %v2291, 0.0
    %v2304 = vmax.f32 %v2292, 0.0
    %v2305 = vmax.f32 %v2293, 0.0
    %v2306 = vmax.f32 %v2294, 0.0
    %v2307 = vmax.f32 %v2295, 0.0
    %v2308 = vmax.f32 %v2296, 0.0
    %v2309 = vmax.f32 %v2297, 0.0
    %v2310 = vmax.f32 %v2298, 0.0
    %v2311 = vmax.f32 %v2299, 0.0
    %v2312 = vmax.f32 %v2300, 0.0
    %v2313 = vld [vmem:[#allocation6] sm:$0xff]
    %v2314 = vld [vmem:[#allocation6 + $0x8] sm:$0xff]
    %v2315 = vld [vmem:[#allocation6 + $0x10] sm:$0xff]
    %v2316 = vld [vmem:[#allocation6 + $0x18] sm:$0xff]
    %v2317 = vld [vmem:[#allocation6 + $0x20] sm:$0xff]
    %v2318 = vld [vmem:[#allocation6 + $0x28] sm:$0xff]
    %v2319 = vld [vmem:[#allocation6 + $0x30] sm:$0xff]
    %v2320 = vld [vmem:[#allocation6 + $0x38] sm:$0xff]
    %vm2321 = vcmask 785408
    %v2323 = vsel %vm2321, %v2313, 0
    %v2326 = vsel %vm2321, %v2314, 0
    %v2329 = vsel %vm2321, %v2315, 0
    %v2332 = vsel %vm2321, %v2316, 0
    %v2335 = vsel %vm2321, %v2317, 0
    %v2338 = vsel %vm2321, %v2318, 0
    %v2341 = vsel %vm2321, %v2319, 0
    %v2344 = vsel %vm2321, %v2320, 0
    %2346 = vmatprep.subr.mxu0 0.0
    %2347 = vmatpush1.msra.mxu0 0.0
    %2348 = vmatprep.subr.mxu0 0.0
    %2349 = vmatpush1.msra.mxu0 0.0
    %2350 = vmatprep.subr.mxu0 0.0
    %2351 = vmatpush1.msra.mxu0 0.0
    %2352 = vmatprep.subr.mxu0 0.0
    %2353 = vmatpush1.msra.mxu0 0.0
    %2354 = vmatprep.subr.mxu0 0.0
    %2355 = vmatpush1.msra.mxu0 %v2312
    %2356 = vmatprep.subr.mxu0 0.0
    %2357 = vmatpush1.msra.mxu0 %v2311
    %2358 = vmatprep.subr.mxu0 0.0
    %2359 = vmatpush1.msra.mxu0 %v2310
    %2360 = vmatprep.subr.mxu0 0.0
    %2361 = vmatpush1.msra.mxu0 %v2309
    %2362 = vmatprep.subr.mxu0 0.0
    %2363 = vmatpush1.msra.mxu0 %v2308
    %2364 = vmatprep.subr.mxu0 0.0
    %2365 = vmatpush1.msra.mxu0 %v2307
    %2366 = vmatprep.subr.mxu0 0.0
    %2367 = vmatpush1.msra.mxu0 %v2306
    %2368 = vmatprep.subr.mxu0 0.0
    %2369 = vmatpush1.msra.mxu0 %v2305
    %2370 = vmatprep.subr.mxu0 0.0
    %2371 = vmatpush1.msra.mxu0 %v2304
    %2372 = vmatprep.subr.mxu0 0.0
    %2373 = vmatpush1.msra.mxu0 %v2303
    %2374 = vmatprep.subr.mxu0 0.0
    %2375 = vmatpush1.msra.mxu0 %v2302
    %2376 = vmatprep.subr.mxu0 0.0
    %2377 = vmatpush1.msra.mxu0 %v2301
    %2378 = vmatprep.subr.mxu0 0.0
    %2379 = vmatpush2.msra.mxu0 0.0
    %2380 = vmatprep.subr.mxu0 0.0
    %2381 = vmatpush2.msra.mxu0 0.0
    %2382 = vmatprep.subr.mxu0 0.0
    %2383 = vmatpush2.msra.mxu0 0.0
    %2384 = vmatprep.subr.mxu0 0.0
    %2385 = vmatpush2.msra.mxu0 0.0
    %2386 = vmatprep.subr.mxu0 0.0
    %2387 = vmatpush2.msra.mxu0 0.0
    %2388 = vmatprep.subr.mxu0 0.0
    %2389 = vmatpush2.msra.mxu0 0.0
    %2390 = vmatprep.subr.mxu0 0.0
    %2391 = vmatpush2.msra.mxu0 0.0
    %2392 = vmatprep.subr.mxu0 0.0
    %2393 = vmatpush2.msra.mxu0 0.0
    %2394 = vmatprep.subr.mxu0 0.0
    %2395 = vmatpush2.msra.mxu0 0.0
    %2396 = vmatprep.subr.mxu0 0.0
    %2397 = vmatpush2.msra.mxu0 0.0
    %2398 = vmatprep.subr.mxu0 0.0
    %2399 = vmatpush2.msra.mxu0 0.0
    %2400 = vmatprep.subr.mxu0 0.0
    %2401 = vmatpush2.msra.mxu0 0.0
    %2402 = vmatprep.subr.mxu0 0.0
    %2403 = vmatpush2.msra.mxu0 0.0
    %2404 = vmatprep.subr.mxu0 0.0
    %2405 = vmatpush2.msra.mxu0 0.0
    %2406 = vmatprep.subr.mxu0 0.0
    %2407 = vmatpush2.msra.mxu0 0.0
    %2408 = vmatprep.subr.mxu0 0.0
    %2409 = vmatpush2.msra.mxu0 0.0
    %2410 = vmatprep.mubr.f32.mxu0 0.0
    %2411 = vmatmul.mubr.f32.gmra.mxu0 %v2323
    %v2412 = vpop.f32.mrf.mxu0
    %v2413 = vadd.f32 0.0, %v2412
    %v2414 = vpop.f32.mrf.mxu0
    %2415 = vmatprep.mubr.f32.mxu0 0.0
    %2416 = vmatmul.mubr.f32.gmra.mxu0 %v2326
    %v2417 = vpop.f32.mrf.mxu0
    %v2418 = vadd.f32 0.0, %v2417
    %v2419 = vpop.f32.mrf.mxu0
    %2420 = vmatprep.mubr.f32.mxu0 0.0
    %2421 = vmatmul.mubr.f32.gmra.mxu0 %v2329
    %v2422 = vpop.f32.mrf.mxu0
    %v2423 = vadd.f32 0.0, %v2422
    %v2424 = vpop.f32.mrf.mxu0
    %2425 = vmatprep.mubr.f32.mxu0 0.0
    %2426 = vmatmul.mubr.f32.gmra.mxu0 %v2332
    %v2427 = vpop.f32.mrf.mxu0
    %v2428 = vadd.f32 0.0, %v2427
    %v2429 = vpop.f32.mrf.mxu0
    %2430 = vmatprep.mubr.f32.mxu0 0.0
    %2431 = vmatmul.mubr.f32.gmra.mxu0 %v2335
    %v2432 = vpop.f32.mrf.mxu0
    %v2433 = vadd.f32 0.0, %v2432
    %v2434 = vpop.f32.mrf.mxu0
    %2435 = vmatprep.mubr.f32.mxu0 0.0
    %2436 = vmatmul.mubr.f32.gmra.mxu0 %v2338
    %v2437 = vpop.f32.mrf.mxu0
    %v2438 = vadd.f32 0.0, %v2437
    %v2439 = vpop.f32.mrf.mxu0
    %2440 = vmatprep.mubr.f32.mxu0 0.0
    %2441 = vmatmul.mubr.f32.gmra.mxu0 %v2341
    %v2442 = vpop.f32.mrf.mxu0
    %v2443 = vadd.f32 0.0, %v2442
    %v2444 = vpop.f32.mrf.mxu0
    %2445 = vmatprep.mubr.f32.mxu0 0.0
    %2446 = vmatmul.mubr.f32.gmra.mxu0 %v2344
    %v2447 = vpop.f32.mrf.mxu0
    %v2448 = vadd.f32 0.0, %v2447
    %v2449 = vpop.f32.mrf.mxu0
    %2450 = vdwg.mxu0
    %v2451 = vpack.c.bf16 %v2418, %v2413
    %v2452 = vpack.c.bf16 %v2428, %v2423
    %v2453 = vpack.c.bf16 %v2438, %v2433
    %v2454 = vpack.c.bf16 %v2448, %v2443
    %v2455 = vld [vmem:[#allocation7] sm:$0xff]
    %v2456 = vld [vmem:[#allocation7 + $0x8] sm:$0xff]
    %v2457 = vld [vmem:[#allocation7 + $0x10] sm:$0xff]
    %v2458 = vld [vmem:[#allocation7 + $0x18] sm:$0xff]
    %v2459 = vld [vmem:[#allocation7 + $0x20] sm:$0xff]
    %v2460 = vld [vmem:[#allocation7 + $0x28] sm:$0xff]
    %v2461 = vld [vmem:[#allocation7 + $0x30] sm:$0xff]
    %v2462 = vld [vmem:[#allocation7 + $0x38] sm:$0xff]
    %v2463 = vld [vmem:[#allocation7 + $0x40] sm:$0xff]
    %v2464 = vld [vmem:[#allocation7 + $0x48] sm:$0xff]
    %v2465 = vld [vmem:[#allocation7 + $0x50] sm:$0xff]
    %v2466 = vld [vmem:[#allocation7 + $0x58] sm:$0xff]
    %v2467 = vld [vmem:[#allocation7 + $0x60] sm:$0xff]
    %v2468 = vld [vmem:[#allocation7 + $0x68] sm:$0xff]
    %v2469 = vld [vmem:[#allocation7 + $0x70] sm:$0xff]
    %v2470 = vld [vmem:[#allocation7 + $0x78] sm:$0xff]
    %v2471 = vld [vmem:[#allocation7 + $0x80] sm:$0xff]
    %v2472 = vld [vmem:[#allocation7 + $0x88] sm:$0xff]
    %v2473 = vld [vmem:[#allocation7 + $0x90] sm:$0xff]
    %v2474 = vld [vmem:[#allocation7 + $0x98] sm:$0xff]
    %v2475 = vld [vmem:[#allocation7 + $0xa0] sm:$0xff]
    %v2476 = vld [vmem:[#allocation7 + $0xa8] sm:$0xff]
    %v2477 = vld [vmem:[#allocation7 + $0xb0] sm:$0xff]
    %v2478 = vld [vmem:[#allocation7 + $0xb8] sm:$0xff]
    %v2479 = vld [vmem:[#allocation7 + $0xc0] sm:$0xff]
    %v2480 = vld [vmem:[#allocation7 + $0xc8] sm:$0xff]
    %v2481 = vld [vmem:[#allocation7 + $0xd0] sm:$0xff]
    %v2482 = vld [vmem:[#allocation7 + $0xd8] sm:$0xff]
    %v2483 = vld [vmem:[#allocation7 + $0xe0] sm:$0xff]
    %v2484 = vld [vmem:[#allocation7 + $0xe8] sm:$0xff]
    %v2485 = vld [vmem:[#allocation7 + $0xf0] sm:$0xff]
    %v2486 = vld [vmem:[#allocation7 + $0xf8] sm:$0xff]
    %s2487 = scalar_lea.vmem [#allocation6], 64
    %v2488 = vld [vmem:[%s2487] sm:$0xff]
    %v2489 = vld [vmem:[%s2487 + $0x8] sm:$0xff]
    %v2490 = vld [vmem:[%s2487 + $0x10] sm:$0xff]
    %v2491 = vld [vmem:[%s2487 + $0x18] sm:$0xff]
    %v2492 = vld [vmem:[%s2487 + $0x20] sm:$0xff]
    %v2493 = vld [vmem:[%s2487 + $0x28] sm:$0xff]
    %v2494 = vld [vmem:[%s2487 + $0x30] sm:$0xff]
    %v2495 = vld [vmem:[%s2487 + $0x38] sm:$0xff]
    %v2497 = vsel %vm2321, %v2488, 0
    %v2500 = vsel %vm2321, %v2489, 0
    %v2503 = vsel %vm2321, %v2490, 0
    %v2506 = vsel %vm2321, %v2491, 0
    %v2509 = vsel %vm2321, %v2492, 0
    %v2512 = vsel %vm2321, %v2493, 0
    %v2515 = vsel %vm2321, %v2494, 0
    %v2518 = vsel %vm2321, %v2495, 0
    %2520 = vmatprep.subr.mxu0 0.0
    %2521 = vmatpush1.msra.mxu0 0.0
    %2522 = vmatprep.subr.mxu0 0.0
    %2523 = vmatpush1.msra.mxu0 0.0
    %2524 = vmatprep.subr.mxu0 0.0
    %2525 = vmatpush1.msra.mxu0 0.0
    %2526 = vmatprep.subr.mxu0 0.0
    %2527 = vmatpush1.msra.mxu0 0.0
    %2528 = vmatprep.subr.mxu0 0.0
    %2529 = vmatpush1.msra.mxu0 %v2312
    %2530 = vmatprep.subr.mxu0 0.0
    %2531 = vmatpush1.msra.mxu0 %v2311
    %2532 = vmatprep.subr.mxu0 0.0
    %2533 = vmatpush1.msra.mxu0 %v2310
    %2534 = vmatprep.subr.mxu0 0.0
    %2535 = vmatpush1.msra.mxu0 %v2309
    %2536 = vmatprep.subr.mxu0 0.0
    %2537 = vmatpush1.msra.mxu0 %v2308
    %2538 = vmatprep.subr.mxu0 0.0
    %2539 = vmatpush1.msra.mxu0 %v2307
    %2540 = vmatprep.subr.mxu0 0.0
    %2541 = vmatpush1.msra.mxu0 %v2306
    %2542 = vmatprep.subr.mxu0 0.0
    %2543 = vmatpush1.msra.mxu0 %v2305
    %2544 = vmatprep.subr.mxu0 0.0
    %2545 = vmatpush1.msra.mxu0 %v2304
    %2546 = vmatprep.subr.mxu0 0.0
    %2547 = vmatpush1.msra.mxu0 %v2303
    %2548 = vmatprep.subr.mxu0 0.0
    %2549 = vmatpush1.msra.mxu0 %v2302
    %2550 = vmatprep.subr.mxu0 0.0
    %2551 = vmatpush1.msra.mxu0 %v2301
    %2552 = vmatprep.subr.mxu0 0.0
    %2553 = vmatpush2.msra.mxu0 0.0
    %2554 = vmatprep.subr.mxu0 0.0
    %2555 = vmatpush2.msra.mxu0 0.0
    %2556 = vmatprep.subr.mxu0 0.0
    %2557 = vmatpush2.msra.mxu0 0.0
    %2558 = vmatprep.subr.mxu0 0.0
    %2559 = vmatpush2.msra.mxu0 0.0
    %2560 = vmatprep.subr.mxu0 0.0
    %2561 = vmatpush2.msra.mxu0 0.0
    %2562 = vmatprep.subr.mxu0 0.0
    %2563 = vmatpush2.msra.mxu0 0.0
    %2564 = vmatprep.subr.mxu0 0.0
    %2565 = vmatpush2.msra.mxu0 0.0
    %2566 = vmatprep.subr.mxu0 0.0
    %2567 = vmatpush2.msra.mxu0 0.0
    %2568 = vmatprep.subr.mxu0 0.0
    %2569 = vmatpush2.msra.mxu0 0.0
    %2570 = vmatprep.subr.mxu0 0.0
    %2571 = vmatpush2.msra.mxu0 0.0
    %2572 = vmatprep.subr.mxu0 0.0
    %2573 = vmatpush2.msra.mxu0 0.0
    %2574 = vmatprep.subr.mxu0 0.0
    %2575 = vmatpush2.msra.mxu0 0.0
    %2576 = vmatprep.subr.mxu0 0.0
    %2577 = vmatpush2.msra.mxu0 0.0
    %2578 = vmatprep.subr.mxu0 0.0
    %2579 = vmatpush2.msra.mxu0 0.0
    %2580 = vmatprep.subr.mxu0 0.0
    %2581 = vmatpush2.msra.mxu0 0.0
    %2582 = vmatprep.subr.mxu0 0.0
    %2583 = vmatpush2.msra.mxu0 0.0
    %2584 = vmatprep.mubr.f32.mxu0 0.0
    %2585 = vmatmul.mubr.f32.gmra.mxu0 %v2497
    %v2586 = vpop.f32.mrf.mxu0
    %v2587 = vadd.f32 0.0, %v2586
    %v2588 = vpop.f32.mrf.mxu0
    %2589 = vmatprep.mubr.f32.mxu0 0.0
    %2590 = vmatmul.mubr.f32.gmra.mxu0 %v2500
    %v2591 = vpop.f32.mrf.mxu0
    %v2592 = vadd.f32 0.0, %v2591
    %v2593 = vpop.f32.mrf.mxu0
    %2594 = vmatprep.mubr.f32.mxu0 0.0
    %2595 = vmatmul.mubr.f32.gmra.mxu0 %v2503
    %v2596 = vpop.f32.mrf.mxu0
    %v2597 = vadd.f32 0.0, %v2596
    %v2598 = vpop.f32.mrf.mxu0
    %2599 = vmatprep.mubr.f32.mxu0 0.0
    %2600 = vmatmul.mubr.f32.gmra.mxu0 %v2506
    %v2601 = vpop.f32.mrf.mxu0
    %v2602 = vadd.f32 0.0, %v2601
    %v2603 = vpop.f32.mrf.mxu0
    %2604 = vmatprep.mubr.f32.mxu0 0.0
    %2605 = vmatmul.mubr.f32.gmra.mxu0 %v2509
    %v2606 = vpop.f32.mrf.mxu0
    %v2607 = vadd.f32 0.0, %v2606
    %v2608 = vpop.f32.mrf.mxu0
    %2609 = vmatprep.mubr.f32.mxu0 0.0
    %2610 = vmatmul.mubr.f32.gmra.mxu0 %v2512
    %v2611 = vpop.f32.mrf.mxu0
    %v2612 = vadd.f32 0.0, %v2611
    %v2613 = vpop.f32.mrf.mxu0
    %2614 = vmatprep.mubr.f32.mxu0 0.0
    %2615 = vmatmul.mubr.f32.gmra.mxu0 %v2515
    %v2616 = vpop.f32.mrf.mxu0
    %v2617 = vadd.f32 0.0, %v2616
    %v2618 = vpop.f32.mrf.mxu0
    %2619 = vmatprep.mubr.f32.mxu0 0.0
    %2620 = vmatmul.mubr.f32.gmra.mxu0 %v2518
    %v2621 = vpop.f32.mrf.mxu0
    %v2622 = vadd.f32 0.0, %v2621
    %v2623 = vpop.f32.mrf.mxu0
    %2624 = vdwg.mxu0
    %v2625 = vpack.c.bf16 %v2592, %v2587
    %v2626 = vpack.c.bf16 %v2602, %v2597
    %v2627 = vpack.c.bf16 %v2612, %v2607
    %v2628 = vpack.c.bf16 %v2622, %v2617
    %s2629 = scalar_lea.vmem [#allocation7], 256
    %v2630 = vld [vmem:[%s2629] sm:$0xff]
    %v2631 = vld [vmem:[%s2629 + $0x8] sm:$0xff]
    %v2632 = vld [vmem:[%s2629 + $0x10] sm:$0xff]
    %v2633 = vld [vmem:[%s2629 + $0x18] sm:$0xff]
    %v2634 = vld [vmem:[%s2629 + $0x20] sm:$0xff]
    %v2635 = vld [vmem:[%s2629 + $0x28] sm:$0xff]
    %v2636 = vld [vmem:[%s2629 + $0x30] sm:$0xff]
    %v2637 = vld [vmem:[%s2629 + $0x38] sm:$0xff]
    %v2638 = vld [vmem:[%s2629 + $0x40] sm:$0xff]
    %v2639 = vld [vmem:[%s2629 + $0x48] sm:$0xff]
    %v2640 = vld [vmem:[%s2629 + $0x50] sm:$0xff]
    %v2641 = vld [vmem:[%s2629 + $0x58] sm:$0xff]
    %v2642 = vld [vmem:[%s2629 + $0x60] sm:$0xff]
    %v2643 = vld [vmem:[%s2629 + $0x68] sm:$0xff]
    %v2644 = vld [vmem:[%s2629 + $0x70] sm:$0xff]
    %v2645 = vld [vmem:[%s2629 + $0x78] sm:$0xff]
    %v2646 = vld [vmem:[%s2629 + $0x80] sm:$0xff]
    %v2647 = vld [vmem:[%s2629 + $0x88] sm:$0xff]
    %v2648 = vld [vmem:[%s2629 + $0x90] sm:$0xff]
    %v2649 = vld [vmem:[%s2629 + $0x98] sm:$0xff]
    %v2650 = vld [vmem:[%s2629 + $0xa0] sm:$0xff]
    %v2651 = vld [vmem:[%s2629 + $0xa8] sm:$0xff]
    %v2652 = vld [vmem:[%s2629 + $0xb0] sm:$0xff]
    %v2653 = vld [vmem:[%s2629 + $0xb8] sm:$0xff]
    %v2654 = vld [vmem:[%s2629 + $0xc0] sm:$0xff]
    %v2655 = vld [vmem:[%s2629 + $0xc8] sm:$0xff]
    %v2656 = vld [vmem:[%s2629 + $0xd0] sm:$0xff]
    %v2657 = vld [vmem:[%s2629 + $0xd8] sm:$0xff]
    %v2658 = vld [vmem:[%s2629 + $0xe0] sm:$0xff]
    %v2659 = vld [vmem:[%s2629 + $0xe8] sm:$0xff]
    %v2660 = vld [vmem:[%s2629 + $0xf0] sm:$0xff]
    %v2661 = vld [vmem:[%s2629 + $0xf8] sm:$0xff]
    %v2694 = vunpack.c.l.b16 %v2630
    %v2695 = vunpack.c.h.b16 %v2630
    %v2696 = vunpack.c.l.b16 %v2631
    %v2697 = vunpack.c.h.b16 %v2631
    %v2698 = vunpack.c.l.b16 %v2632
    %v2699 = vunpack.c.h.b16 %v2632
    %v2700 = vunpack.c.l.b16 %v2633
    %v2701 = vunpack.c.h.b16 %v2633
    %v2702 = vunpack.c.l.b16 %v2634
    %v2703 = vunpack.c.h.b16 %v2634
    %v2704 = vunpack.c.l.b16 %v2635
    %v2705 = vunpack.c.h.b16 %v2635
    %v2706 = vunpack.c.l.b16 %v2636
    %v2707 = vunpack.c.h.b16 %v2636
    %v2708 = vunpack.c.l.b16 %v2637
    %v2709 = vunpack.c.h.b16 %v2637
    %v2710 = vunpack.c.l.b16 %v2638
    %v2711 = vunpack.c.h.b16 %v2638
    %v2712 = vunpack.c.l.b16 %v2639
    %v2713 = vunpack.c.h.b16 %v2639
    %v2714 = vunpack.c.l.b16 %v2640
    %v2715 = vunpack.c.h.b16 %v2640
    %v2716 = vunpack.c.l.b16 %v2641
    %v2717 = vunpack.c.h.b16 %v2641
    %v2718 = vunpack.c.l.b16 %v2642
    %v2719 = vunpack.c.h.b16 %v2642
    %v2720 = vunpack.c.l.b16 %v2643
    %v2721 = vunpack.c.h.b16 %v2643
    %v2722 = vunpack.c.l.b16 %v2644
    %v2723 = vunpack.c.h.b16 %v2644
    %v2724 = vunpack.c.l.b16 %v2645
    %v2725 = vunpack.c.h.b16 %v2645
    %v2726 = vunpack.c.l.b16 %v2646
    %v2727 = vunpack.c.h.b16 %v2646
    %v2728 = vunpack.c.l.b16 %v2647
    %v2729 = vunpack.c.h.b16 %v2647
    %v2730 = vunpack.c.l.b16 %v2648
    %v2731 = vunpack.c.h.b16 %v2648
    %v2732 = vunpack.c.l.b16 %v2649
    %v2733 = vunpack.c.h.b16 %v2649
    %v2734 = vunpack.c.l.b16 %v2650
    %v2735 = vunpack.c.h.b16 %v2650
    %v2736 = vunpack.c.l.b16 %v2651
    %v2737 = vunpack.c.h.b16 %v2651
    %v2738 = vunpack.c.l.b16 %v2652
    %v2739 = vunpack.c.h.b16 %v2652
    %v2740 = vunpack.c.l.b16 %v2653
    %v2741 = vunpack.c.h.b16 %v2653
    %v2742 = vunpack.c.l.b16 %v2654
    %v2743 = vunpack.c.h.b16 %v2654
    %v2744 = vunpack.c.l.b16 %v2655
    %v2745 = vunpack.c.h.b16 %v2655
    %v2746 = vunpack.c.l.b16 %v2656
    %v2747 = vunpack.c.h.b16 %v2656
    %v2748 = vunpack.c.l.b16 %v2657
    %v2749 = vunpack.c.h.b16 %v2657
    %v2750 = vunpack.c.l.b16 %v2658
    %v2751 = vunpack.c.h.b16 %v2658
    %v2752 = vunpack.c.l.b16 %v2659
    %v2753 = vunpack.c.h.b16 %v2659
    %v2754 = vunpack.c.l.b16 %v2660
    %v2755 = vunpack.c.h.b16 %v2660
    %v2756 = vunpack.c.l.b16 %v2661
    %v2757 = vunpack.c.h.b16 %v2661
    %v2758 = vpack.c.b16 %v2698, %v2694
    %v2759 = vpack.c.b16 %v2699, %v2695
    %v2760 = vpack.c.b16 %v2700, %v2696
    %v2761 = vpack.c.b16 %v2701, %v2697
    %v2762 = vpack.c.b16 %v2706, %v2702
    %v2763 = vpack.c.b16 %v2707, %v2703
    %v2764 = vpack.c.b16 %v2708, %v2704
    %v2765 = vpack.c.b16 %v2709, %v2705
    %v2766 = vpack.c.b16 %v2714, %v2710
    %v2767 = vpack.c.b16 %v2715, %v2711
    %v2768 = vpack.c.b16 %v2716, %v2712
    %v2769 = vpack.c.b16 %v2717, %v2713
    %v2770 = vpack.c.b16 %v2722, %v2718
    %v2771 = vpack.c.b16 %v2723, %v2719
    %v2772 = vpack.c.b16 %v2724, %v2720
    %v2773 = vpack.c.b16 %v2725, %v2721
    %v2774 = vpack.c.b16 %v2730, %v2726
    %v2775 = vpack.c.b16 %v2731, %v2727
    %v2776 = vpack.c.b16 %v2732, %v2728
    %v2777 = vpack.c.b16 %v2733, %v2729
    %v2778 = vpack.c.b16 %v2738, %v2734
    %v2779 = vpack.c.b16 %v2739, %v2735
    %v2780 = vpack.c.b16 %v2740, %v2736
    %v2781 = vpack.c.b16 %v2741, %v2737
    %v2782 = vpack.c.b16 %v2746, %v2742
    %v2783 = vpack.c.b16 %v2747, %v2743
    %v2784 = vpack.c.b16 %v2748, %v2744
    %v2785 = vpack.c.b16 %v2749, %v2745
    %v2786 = vpack.c.b16 %v2754, %v2750
    %v2787 = vpack.c.b16 %v2755, %v2751
    %v2788 = vpack.c.b16 %v2756, %v2752
    %v2789 = vpack.c.b16 %v2757, %v2753
    %2822 = vmatprep.subr.bf16.mxu0 %v2787
    %2823 = vmatpush1.bf16.msra.mxu0 %v2786
    %2824 = vmatprep.subr.bf16.mxu0 %v2783
    %2825 = vmatpush1.bf16.msra.mxu0 %v2782
    %2826 = vmatprep.subr.bf16.mxu0 %v2779
    %2827 = vmatpush1.bf16.msra.mxu0 %v2778
    %2828 = vmatprep.subr.bf16.mxu0 %v2775
    %2829 = vmatpush1.bf16.msra.mxu0 %v2774
    %2830 = vmatprep.subr.bf16.mxu0 %v2771
    %2831 = vmatpush1.bf16.msra.mxu0 %v2770
    %2832 = vmatprep.subr.bf16.mxu0 %v2767
    %2833 = vmatpush1.bf16.msra.mxu0 %v2766
    %2834 = vmatprep.subr.bf16.mxu0 %v2763
    %2835 = vmatpush1.bf16.msra.mxu0 %v2762
    %2836 = vmatprep.subr.bf16.mxu0 %v2759
    %2837 = vmatpush1.bf16.msra.mxu0 %v2758
    %2838 = vmatprep.subr.bf16.mxu0 0
    %2839 = vmatpush2.bf16.msra.mxu0 0
    %2840 = vmatprep.subr.bf16.mxu0 0
    %2841 = vmatpush2.bf16.msra.mxu0 0
    %2842 = vmatprep.subr.bf16.mxu0 0
    %2843 = vmatpush2.bf16.msra.mxu0 0
    %2844 = vmatprep.subr.bf16.mxu0 0
    %2845 = vmatpush2.bf16.msra.mxu0 0
    %2846 = vmatprep.subr.bf16.mxu0 0
    %2847 = vmatpush2.bf16.msra.mxu0 0
    %2848 = vmatprep.subr.bf16.mxu0 0
    %2849 = vmatpush2.bf16.msra.mxu0 0
    %2850 = vmatprep.subr.bf16.mxu0 0
    %2851 = vmatpush2.bf16.msra.mxu0 0
    %2852 = vmatprep.subr.bf16.mxu0 0
    %2853 = vmatpush2.bf16.msra.mxu0 0
    %2854 = vmatprep.mubr.bf16.mxu0 0
    %2855 = vmatmul.mubr.bf16.gmra.mxu0 %v2625
    %v2856 = vpop.f32.mrf.mxu0
    %v2857 = vadd.f32 0.0, %v2856
    %v2858 = vpop.f32.mrf.mxu0
    %v2859 = vadd.f32 0.0, %v2858
    %v2860 = vpop.f32.mrf.mxu0
    %v2861 = vadd.f32 0.0, %v2860
    %v2862 = vpop.f32.mrf.mxu0
    %v2863 = vadd.f32 0.0, %v2862
    %2864 = vmatprep.mubr.bf16.mxu0 0
    %2865 = vmatmul.mubr.bf16.gmra.mxu0 %v2626
    %v2866 = vpop.f32.mrf.mxu0
    %v2867 = vadd.f32 0.0, %v2866
    %v2868 = vpop.f32.mrf.mxu0
    %v2869 = vadd.f32 0.0, %v2868
    %v2870 = vpop.f32.mrf.mxu0
    %v2871 = vadd.f32 0.0, %v2870
    %v2872 = vpop.f32.mrf.mxu0
    %v2873 = vadd.f32 0.0, %v2872
    %2874 = vmatprep.mubr.bf16.mxu0 0
    %2875 = vmatmul.mubr.bf16.gmra.mxu0 %v2627
    %v2876 = vpop.f32.mrf.mxu0
    %v2877 = vadd.f32 0.0, %v2876
    %v2878 = vpop.f32.mrf.mxu0
    %v2879 = vadd.f32 0.0, %v2878
    %v2880 = vpop.f32.mrf.mxu0
    %v2881 = vadd.f32 0.0, %v2880
    %v2882 = vpop.f32.mrf.mxu0
    %v2883 = vadd.f32 0.0, %v2882
    %2884 = vmatprep.mubr.bf16.mxu0 0
    %2885 = vmatmul.mubr.bf16.gmra.mxu0 %v2628
    %v2886 = vpop.f32.mrf.mxu0
    %v2887 = vadd.f32 0.0, %v2886
    %v2888 = vpop.f32.mrf.mxu0
    %v2889 = vadd.f32 0.0, %v2888
    %v2890 = vpop.f32.mrf.mxu0
    %v2891 = vadd.f32 0.0, %v2890
    %v2892 = vpop.f32.mrf.mxu0
    %v2893 = vadd.f32 0.0, %v2892
    %2894 = vdwg.mxu0
    %2895 = vmatprep.subr.bf16.mxu0 %v2789
    %2896 = vmatpush1.bf16.msra.mxu0 %v2788
    %2897 = vmatprep.subr.bf16.mxu0 %v2785
    %2898 = vmatpush1.bf16.msra.mxu0 %v2784
    %2899 = vmatprep.subr.bf16.mxu0 %v2781
    %2900 = vmatpush1.bf16.msra.mxu0 %v2780
    %2901 = vmatprep.subr.bf16.mxu0 %v2777
    %2902 = vmatpush1.bf16.msra.mxu0 %v2776
    %2903 = vmatprep.subr.bf16.mxu0 %v2773
    %2904 = vmatpush1.bf16.msra.mxu0 %v2772
    %2905 = vmatprep.subr.bf16.mxu0 %v2769
    %2906 = vmatpush1.bf16.msra.mxu0 %v2768
    %2907 = vmatprep.subr.bf16.mxu0 %v2765
    %2908 = vmatpush1.bf16.msra.mxu0 %v2764
    %2909 = vmatprep.subr.bf16.mxu0 %v2761
    %2910 = vmatpush1.bf16.msra.mxu0 %v2760
    %2911 = vmatprep.subr.bf16.mxu0 0
    %2912 = vmatpush2.bf16.msra.mxu0 0
    %2913 = vmatprep.subr.bf16.mxu0 0
    %2914 = vmatpush2.bf16.msra.mxu0 0
    %2915 = vmatprep.subr.bf16.mxu0 0
    %2916 = vmatpush2.bf16.msra.mxu0 0
    %2917 = vmatprep.subr.bf16.mxu0 0
    %2918 = vmatpush2.bf16.msra.mxu0 0
    %2919 = vmatprep.subr.bf16.mxu0 0
    %2920 = vmatpush2.bf16.msra.mxu0 0
    %2921 = vmatprep.subr.bf16.mxu0 0
    %2922 = vmatpush2.bf16.msra.mxu0 0
    %2923 = vmatprep.subr.bf16.mxu0 0
    %2924 = vmatpush2.bf16.msra.mxu0 0
    %2925 = vmatprep.subr.bf16.mxu0 0
    %2926 = vmatpush2.bf16.msra.mxu0 0
    %2927 = vmatprep.mubr.bf16.mxu0 0
    %2928 = vmatmul.mubr.bf16.gmra.mxu0 %v2625
    %v2929 = vpop.f32.mrf.mxu0
    %v2930 = vadd.f32 0.0, %v2929
    %v2931 = vpop.f32.mrf.mxu0
    %v2932 = vadd.f32 0.0, %v2931
    %v2933 = vpop.f32.mrf.mxu0
    %v2934 = vadd.f32 0.0, %v2933
    %v2935 = vpop.f32.mrf.mxu0
    %v2936 = vadd.f32 0.0, %v2935
    %2937 = vmatprep.mubr.bf16.mxu0 0
    %2938 = vmatmul.mubr.bf16.gmra.mxu0 %v2626
    %v2939 = vpop.f32.mrf.mxu0
    %v2940 = vadd.f32 0.0, %v2939
    %v2941 = vpop.f32.mrf.mxu0
    %v2942 = vadd.f32 0.0, %v2941
    %v2943 = vpop.f32.mrf.mxu0
    %v2944 = vadd.f32 0.0, %v2943
    %v2945 = vpop.f32.mrf.mxu0
    %v2946 = vadd.f32 0.0, %v2945
    %2947 = vmatprep.mubr.bf16.mxu0 0
    %2948 = vmatmul.mubr.bf16.gmra.mxu0 %v2627
    %v2949 = vpop.f32.mrf.mxu0
    %v2950 = vadd.f32 0.0, %v2949
    %v2951 = vpop.f32.mrf.mxu0
    %v2952 = vadd.f32 0.0, %v2951
    %v2953 = vpop.f32.mrf.mxu0
    %v2954 = vadd.f32 0.0, %v2953
    %v2955 = vpop.f32.mrf.mxu0
    %v2956 = vadd.f32 0.0, %v2955
    %2957 = vmatprep.mubr.bf16.mxu0 0
    %2958 = vmatmul.mubr.bf16.gmra.mxu0 %v2628
    %v2959 = vpop.f32.mrf.mxu0
    %v2960 = vadd.f32 0.0, %v2959
    %v2961 = vpop.f32.mrf.mxu0
    %v2962 = vadd.f32 0.0, %v2961
    %v2963 = vpop.f32.mrf.mxu0
    %v2964 = vadd.f32 0.0, %v2963
    %v2965 = vpop.f32.mrf.mxu0
    %v2966 = vadd.f32 0.0, %v2965
    %2967 = vdwg.mxu0
    %v3000 = vunpack.c.l.b16 %v2455
    %v3001 = vunpack.c.h.b16 %v2455
    %v3002 = vunpack.c.l.b16 %v2456
    %v3003 = vunpack.c.h.b16 %v2456
    %v3004 = vunpack.c.l.b16 %v2457
    %v3005 = vunpack.c.h.b16 %v2457
    %v3006 = vunpack.c.l.b16 %v2458
    %v3007 = vunpack.c.h.b16 %v2458
    %v3008 = vunpack.c.l.b16 %v2459
    %v3009 = vunpack.c.h.b16 %v2459
    %v3010 = vunpack.c.l.b16 %v2460
    %v3011 = vunpack.c.h.b16 %v2460
    %v3012 = vunpack.c.l.b16 %v2461
    %v3013 = vunpack.c.h.b16 %v2461
    %v3014 = vunpack.c.l.b16 %v2462
    %v3015 = vunpack.c.h.b16 %v2462
    %v3016 = vunpack.c.l.b16 %v2463
    %v3017 = vunpack.c.h.b16 %v2463
    %v3018 = vunpack.c.l.b16 %v2464
    %v3019 = vunpack.c.h.b16 %v2464
    %v3020 = vunpack.c.l.b16 %v2465
    %v3021 = vunpack.c.h.b16 %v2465
    %v3022 = vunpack.c.l.b16 %v2466
    %v3023 = vunpack.c.h.b16 %v2466
    %v3024 = vunpack.c.l.b16 %v2467
    %v3025 = vunpack.c.h.b16 %v2467
    %v3026 = vunpack.c.l.b16 %v2468
    %v3027 = vunpack.c.h.b16 %v2468
    %v3028 = vunpack.c.l.b16 %v2469
    %v3029 = vunpack.c.h.b16 %v2469
    %v3030 = vunpack.c.l.b16 %v2470
    %v3031 = vunpack.c.h.b16 %v2470
    %v3032 = vunpack.c.l.b16 %v2471
    %v3033 = vunpack.c.h.b16 %v2471
    %v3034 = vunpack.c.l.b16 %v2472
    %v3035 = vunpack.c.h.b16 %v2472
    %v3036 = vunpack.c.l.b16 %v2473
    %v3037 = vunpack.c.h.b16 %v2473
    %v3038 = vunpack.c.l.b16 %v2474
    %v3039 = vunpack.c.h.b16 %v2474
    %v3040 = vunpack.c.l.b16 %v2475
    %v3041 = vunpack.c.h.b16 %v2475
    %v3042 = vunpack.c.l.b16 %v2476
    %v3043 = vunpack.c.h.b16 %v2476
    %v3044 = vunpack.c.l.b16 %v2477
    %v3045 = vunpack.c.h.b16 %v2477
    %v3046 = vunpack.c.l.b16 %v2478
    %v3047 = vunpack.c.h.b16 %v2478
    %v3048 = vunpack.c.l.b16 %v2479
    %v3049 = vunpack.c.h.b16 %v2479
    %v3050 = vunpack.c.l.b16 %v2480
    %v3051 = vunpack.c.h.b16 %v2480
    %v3052 = vunpack.c.l.b16 %v2481
    %v3053 = vunpack.c.h.b16 %v2481
    %v3054 = vunpack.c.l.b16 %v2482
    %v3055 = vunpack.c.h.b16 %v2482
    %v3056 = vunpack.c.l.b16 %v2483
    %v3057 = vunpack.c.h.b16 %v2483
    %v3058 = vunpack.c.l.b16 %v2484
    %v3059 = vunpack.c.h.b16 %v2484
    %v3060 = vunpack.c.l.b16 %v2485
    %v3061 = vunpack.c.h.b16 %v2485
    %v3062 = vunpack.c.l.b16 %v2486
    %v3063 = vunpack.c.h.b16 %v2486
    %v3064 = vpack.c.b16 %v3004, %v3000
    %v3065 = vpack.c.b16 %v3005, %v3001
    %v3066 = vpack.c.b16 %v3006, %v3002
    %v3067 = vpack.c.b16 %v3007, %v3003
    %v3068 = vpack.c.b16 %v3012, %v3008
    %v3069 = vpack.c.b16 %v3013, %v3009
    %v3070 = vpack.c.b16 %v3014, %v3010
    %v3071 = vpack.c.b16 %v3015, %v3011
    %v3072 = vpack.c.b16 %v3020, %v3016
    %v3073 = vpack.c.b16 %v3021, %v3017
    %v3074 = vpack.c.b16 %v3022, %v3018
    %v3075 = vpack.c.b16 %v3023, %v3019
    %v3076 = vpack.c.b16 %v3028, %v3024
    %v3077 = vpack.c.b16 %v3029, %v3025
    %v3078 = vpack.c.b16 %v3030, %v3026
    %v3079 = vpack.c.b16 %v3031, %v3027
    %v3080 = vpack.c.b16 %v3036, %v3032
    %v3081 = vpack.c.b16 %v3037, %v3033
    %v3082 = vpack.c.b16 %v3038, %v3034
    %v3083 = vpack.c.b16 %v3039, %v3035
    %v3084 = vpack.c.b16 %v3044, %v3040
    %v3085 = vpack.c.b16 %v3045, %v3041
    %v3086 = vpack.c.b16 %v3046, %v3042
    %v3087 = vpack.c.b16 %v3047, %v3043
    %v3088 = vpack.c.b16 %v3052, %v3048
    %v3089 = vpack.c.b16 %v3053, %v3049
    %v3090 = vpack.c.b16 %v3054, %v3050
    %v3091 = vpack.c.b16 %v3055, %v3051
    %v3092 = vpack.c.b16 %v3060, %v3056
    %v3093 = vpack.c.b16 %v3061, %v3057
    %v3094 = vpack.c.b16 %v3062, %v3058
    %v3095 = vpack.c.b16 %v3063, %v3059
    %3128 = vmatprep.subr.bf16.mxu0 %v3093
    %3129 = vmatpush1.bf16.msra.mxu0 %v3092
    %3130 = vmatprep.subr.bf16.mxu0 %v3089
    %3131 = vmatpush1.bf16.msra.mxu0 %v3088
    %3132 = vmatprep.subr.bf16.mxu0 %v3085
    %3133 = vmatpush1.bf16.msra.mxu0 %v3084
    %3134 = vmatprep.subr.bf16.mxu0 %v3081
    %3135 = vmatpush1.bf16.msra.mxu0 %v3080
    %3136 = vmatprep.subr.bf16.mxu0 %v3077
    %3137 = vmatpush1.bf16.msra.mxu0 %v3076
    %3138 = vmatprep.subr.bf16.mxu0 %v3073
    %3139 = vmatpush1.bf16.msra.mxu0 %v3072
    %3140 = vmatprep.subr.bf16.mxu0 %v3069
    %3141 = vmatpush1.bf16.msra.mxu0 %v3068
    %3142 = vmatprep.subr.bf16.mxu0 %v3065
    %3143 = vmatpush1.bf16.msra.mxu0 %v3064
    %3144 = vmatprep.subr.bf16.mxu0 0
    %3145 = vmatpush2.bf16.msra.mxu0 0
    %3146 = vmatprep.subr.bf16.mxu0 0
    %3147 = vmatpush2.bf16.msra.mxu0 0
    %3148 = vmatprep.subr.bf16.mxu0 0
    %3149 = vmatpush2.bf16.msra.mxu0 0
    %3150 = vmatprep.subr.bf16.mxu0 0
    %3151 = vmatpush2.bf16.msra.mxu0 0
    %3152 = vmatprep.subr.bf16.mxu0 0
    %3153 = vmatpush2.bf16.msra.mxu0 0
    %3154 = vmatprep.subr.bf16.mxu0 0
    %3155 = vmatpush2.bf16.msra.mxu0 0
    %3156 = vmatprep.subr.bf16.mxu0 0
    %3157 = vmatpush2.bf16.msra.mxu0 0
    %3158 = vmatprep.subr.bf16.mxu0 0
    %3159 = vmatpush2.bf16.msra.mxu0 0
    %3160 = vmatprep.mubr.bf16.mxu0 0
    %3161 = vmatmul.mubr.bf16.gmra.mxu0 %v2451
    %v3162 = vpop.f32.mrf.mxu0
    %v3163 = vadd.f32 %v2857, %v3162
    %v3164 = vpop.f32.mrf.mxu0
    %v3165 = vadd.f32 %v2859, %v3164
    %v3166 = vpop.f32.mrf.mxu0
    %v3167 = vadd.f32 %v2861, %v3166
    %v3168 = vpop.f32.mrf.mxu0
    %v3169 = vadd.f32 %v2863, %v3168
    %3170 = vmatprep.mubr.bf16.mxu0 0
    %3171 = vmatmul.mubr.bf16.gmra.mxu0 %v2452
    %v3172 = vpop.f32.mrf.mxu0
    %v3173 = vadd.f32 %v2867, %v3172
    %v3174 = vpop.f32.mrf.mxu0
    %v3175 = vadd.f32 %v2869, %v3174
    %v3176 = vpop.f32.mrf.mxu0
    %v3177 = vadd.f32 %v2871, %v3176
    %v3178 = vpop.f32.mrf.mxu0
    %v3179 = vadd.f32 %v2873, %v3178
    %3180 = vmatprep.mubr.bf16.mxu0 0
    %3181 = vmatmul.mubr.bf16.gmra.mxu0 %v2453
    %v3182 = vpop.f32.mrf.mxu0
    %v3183 = vadd.f32 %v2877, %v3182
    %v3184 = vpop.f32.mrf.mxu0
    %v3185 = vadd.f32 %v2879, %v3184
    %v3186 = vpop.f32.mrf.mxu0
    %v3187 = vadd.f32 %v2881, %v3186
    %v3188 = vpop.f32.mrf.mxu0
    %v3189 = vadd.f32 %v2883, %v3188
    %3190 = vmatprep.mubr.bf16.mxu0 0
    %3191 = vmatmul.mubr.bf16.gmra.mxu0 %v2454
    %v3192 = vpop.f32.mrf.mxu0
    %v3193 = vadd.f32 %v2887, %v3192
    %v3194 = vpop.f32.mrf.mxu0
    %v3195 = vadd.f32 %v2889, %v3194
    %v3196 = vpop.f32.mrf.mxu0
    %v3197 = vadd.f32 %v2891, %v3196
    %v3198 = vpop.f32.mrf.mxu0
    %v3199 = vadd.f32 %v2893, %v3198
    %3200 = vdwg.mxu0
    %3201 = vmatprep.subr.bf16.mxu0 %v3095
    %3202 = vmatpush1.bf16.msra.mxu0 %v3094
    %3203 = vmatprep.subr.bf16.mxu0 %v3091
    %3204 = vmatpush1.bf16.msra.mxu0 %v3090
    %3205 = vmatprep.subr.bf16.mxu0 %v3087
    %3206 = vmatpush1.bf16.msra.mxu0 %v3086
    %3207 = vmatprep.subr.bf16.mxu0 %v3083
    %3208 = vmatpush1.bf16.msra.mxu0 %v3082
    %3209 = vmatprep.subr.bf16.mxu0 %v3079
    %3210 = vmatpush1.bf16.msra.mxu0 %v3078
    %3211 = vmatprep.subr.bf16.mxu0 %v3075
    %3212 = vmatpush1.bf16.msra.mxu0 %v3074
    %3213 = vmatprep.subr.bf16.mxu0 %v3071
    %3214 = vmatpush1.bf16.msra.mxu0 %v3070
    %3215 = vmatprep.subr.bf16.mxu0 %v3067
    %3216 = vmatpush1.bf16.msra.mxu0 %v3066
    %3217 = vmatprep.subr.bf16.mxu0 0
    %3218 = vmatpush2.bf16.msra.mxu0 0
    %3219 = vmatprep.subr.bf16.mxu0 0
    %3220 = vmatpush2.bf16.msra.mxu0 0
    %3221 = vmatprep.subr.bf16.mxu0 0
    %3222 = vmatpush2.bf16.msra.mxu0 0
    %3223 = vmatprep.subr.bf16.mxu0 0
    %3224 = vmatpush2.bf16.msra.mxu0 0
    %3225 = vmatprep.subr.bf16.mxu0 0
    %3226 = vmatpush2.bf16.msra.mxu0 0
    %3227 = vmatprep.subr.bf16.mxu0 0
    %3228 = vmatpush2.bf16.msra.mxu0 0
    %3229 = vmatprep.subr.bf16.mxu0 0
    %3230 = vmatpush2.bf16.msra.mxu0 0
    %3231 = vmatprep.subr.bf16.mxu0 0
    %3232 = vmatpush2.bf16.msra.mxu0 0
    %3233 = vmatprep.mubr.bf16.mxu0 0
    %3234 = vmatmul.mubr.bf16.gmra.mxu0 %v2451
    %v3235 = vpop.f32.mrf.mxu0
    %v3236 = vadd.f32 %v2930, %v3235
    %v3237 = vpop.f32.mrf.mxu0
    %v3238 = vadd.f32 %v2932, %v3237
    %v3239 = vpop.f32.mrf.mxu0
    %v3240 = vadd.f32 %v2934, %v3239
    %v3241 = vpop.f32.mrf.mxu0
    %v3242 = vadd.f32 %v2936, %v3241
    %3243 = vmatprep.mubr.bf16.mxu0 0
    %3244 = vmatmul.mubr.bf16.gmra.mxu0 %v2452
    %v3245 = vpop.f32.mrf.mxu0
    %v3246 = vadd.f32 %v2940, %v3245
    %v3247 = vpop.f32.mrf.mxu0
    %v3248 = vadd.f32 %v2942, %v3247
    %v3249 = vpop.f32.mrf.mxu0
    %v3250 = vadd.f32 %v2944, %v3249
    %v3251 = vpop.f32.mrf.mxu0
    %v3252 = vadd.f32 %v2946, %v3251
    %3253 = vmatprep.mubr.bf16.mxu0 0
    %3254 = vmatmul.mubr.bf16.gmra.mxu0 %v2453
    %v3255 = vpop.f32.mrf.mxu0
    %v3256 = vadd.f32 %v2950, %v3255
    %v3257 = vpop.f32.mrf.mxu0
    %v3258 = vadd.f32 %v2952, %v3257
    %v3259 = vpop.f32.mrf.mxu0
    %v3260 = vadd.f32 %v2954, %v3259
    %v3261 = vpop.f32.mrf.mxu0
    %v3262 = vadd.f32 %v2956, %v3261
    %3263 = vmatprep.mubr.bf16.mxu0 0
    %3264 = vmatmul.mubr.bf16.gmra.mxu0 %v2454
    %v3265 = vpop.f32.mrf.mxu0
    %v3266 = vadd.f32 %v2960, %v3265
    %v3267 = vpop.f32.mrf.mxu0
    %v3268 = vadd.f32 %v2962, %v3267
    %v3269 = vpop.f32.mrf.mxu0
    %v3270 = vadd.f32 %v2964, %v3269
    %v3271 = vpop.f32.mrf.mxu0
    %v3272 = vadd.f32 %v2966, %v3271
    %3273 = vdwg.mxu0
    %s3274 = scalar_lea.vmem [#allocation6], 128
    %v3275 = vld [vmem:[%s3274] sm:$0xff]
    %v3276 = vld [vmem:[%s3274 + $0x8] sm:$0xff]
    %v3277 = vld [vmem:[%s3274 + $0x10] sm:$0xff]
    %v3278 = vld [vmem:[%s3274 + $0x18] sm:$0xff]
    %v3279 = vld [vmem:[%s3274 + $0x20] sm:$0xff]
    %v3280 = vld [vmem:[%s3274 + $0x28] sm:$0xff]
    %v3281 = vld [vmem:[%s3274 + $0x30] sm:$0xff]
    %v3282 = vld [vmem:[%s3274 + $0x38] sm:$0xff]
    %v3284 = vsel %vm2321, %v3275, 0
    %v3287 = vsel %vm2321, %v3276, 0
    %v3290 = vsel %vm2321, %v3277, 0
    %v3293 = vsel %vm2321, %v3278, 0
    %v3296 = vsel %vm2321, %v3279, 0
    %v3299 = vsel %vm2321, %v3280, 0
    %v3302 = vsel %vm2321, %v3281, 0
    %v3305 = vsel %vm2321, %v3282, 0
    %3307 = vmatprep.subr.mxu0 0.0
    %3308 = vmatpush1.msra.mxu0 0.0
    %3309 = vmatprep.subr.mxu0 0.0
    %3310 = vmatpush1.msra.mxu0 0.0
    %3311 = vmatprep.subr.mxu0 0.0
    %3312 = vmatpush1.msra.mxu0 0.0
    %3313 = vmatprep.subr.mxu0 0.0
    %3314 = vmatpush1.msra.mxu0 0.0
    %3315 = vmatprep.subr.mxu0 0.0
    %3316 = vmatpush1.msra.mxu0 %v2312
    %3317 = vmatprep.subr.mxu0 0.0
    %3318 = vmatpush1.msra.mxu0 %v2311
    %3319 = vmatprep.subr.mxu0 0.0
    %3320 = vmatpush1.msra.mxu0 %v2310
    %3321 = vmatprep.subr.mxu0 0.0
    %3322 = vmatpush1.msra.mxu0 %v2309
    %3323 = vmatprep.subr.mxu0 0.0
    %3324 = vmatpush1.msra.mxu0 %v2308
    %3325 = vmatprep.subr.mxu0 0.0
    %3326 = vmatpush1.msra.mxu0 %v2307
    %3327 = vmatprep.subr.mxu0 0.0
    %3328 = vmatpush1.msra.mxu0 %v2306
    %3329 = vmatprep.subr.mxu0 0.0
    %3330 = vmatpush1.msra.mxu0 %v2305
    %3331 = vmatprep.subr.mxu0 0.0
    %3332 = vmatpush1.msra.mxu0 %v2304
    %3333 = vmatprep.subr.mxu0 0.0
    %3334 = vmatpush1.msra.mxu0 %v2303
    %3335 = vmatprep.subr.mxu0 0.0
    %3336 = vmatpush1.msra.mxu0 %v2302
    %3337 = vmatprep.subr.mxu0 0.0
    %3338 = vmatpush1.msra.mxu0 %v2301
    %3339 = vmatprep.subr.mxu0 0.0
    %3340 = vmatpush2.msra.mxu0 0.0
    %3341 = vmatprep.subr.mxu0 0.0
    %3342 = vmatpush2.msra.mxu0 0.0
    %3343 = vmatprep.subr.mxu0 0.0
    %3344 = vmatpush2.msra.mxu0 0.0
    %3345 = vmatprep.subr.mxu0 0.0
    %3346 = vmatpush2.msra.mxu0 0.0
    %3347 = vmatprep.subr.mxu0 0.0
    %3348 = vmatpush2.msra.mxu0 0.0
    %3349 = vmatprep.subr.mxu0 0.0
    %3350 = vmatpush2.msra.mxu0 0.0
    %3351 = vmatprep.subr.mxu0 0.0
    %3352 = vmatpush2.msra.mxu0 0.0
    %3353 = vmatprep.subr.mxu0 0.0
    %3354 = vmatpush2.msra.mxu0 0.0
    %3355 = vmatprep.subr.mxu0 0.0
    %3356 = vmatpush2.msra.mxu0 0.0
    %3357 = vmatprep.subr.mxu0 0.0
    %3358 = vmatpush2.msra.mxu0 0.0
    %3359 = vmatprep.subr.mxu0 0.0
    %3360 = vmatpush2.msra.mxu0 0.0
    %3361 = vmatprep.subr.mxu0 0.0
    %3362 = vmatpush2.msra.mxu0 0.0
    %3363 = vmatprep.subr.mxu0 0.0
    %3364 = vmatpush2.msra.mxu0 0.0
    %3365 = vmatprep.subr.mxu0 0.0
    %3366 = vmatpush2.msra.mxu0 0.0
    %3367 = vmatprep.subr.mxu0 0.0
    %3368 = vmatpush2.msra.mxu0 0.0
    %3369 = vmatprep.subr.mxu0 0.0
    %3370 = vmatpush2.msra.mxu0 0.0
    %3371 = vmatprep.mubr.f32.mxu0 0.0
    %3372 = vmatmul.mubr.f32.gmra.mxu0 %v3284
    %v3373 = vpop.f32.mrf.mxu0
    %v3374 = vadd.f32 0.0, %v3373
    %v3375 = vpop.f32.mrf.mxu0
    %3376 = vmatprep.mubr.f32.mxu0 0.0
    %3377 = vmatmul.mubr.f32.gmra.mxu0 %v3287
    %v3378 = vpop.f32.mrf.mxu0
    %v3379 = vadd.f32 0.0, %v3378
    %v3380 = vpop.f32.mrf.mxu0
    %3381 = vmatprep.mubr.f32.mxu0 0.0
    %3382 = vmatmul.mubr.f32.gmra.mxu0 %v3290
    %v3383 = vpop.f32.mrf.mxu0
    %v3384 = vadd.f32 0.0, %v3383
    %v3385 = vpop.f32.mrf.mxu0
    %3386 = vmatprep.mubr.f32.mxu0 0.0
    %3387 = vmatmul.mubr.f32.gmra.mxu0 %v3293
    %v3388 = vpop.f32.mrf.mxu0
    %v3389 = vadd.f32 0.0, %v3388
    %v3390 = vpop.f32.mrf.mxu0
    %3391 = vmatprep.mubr.f32.mxu0 0.0
    %3392 = vmatmul.mubr.f32.gmra.mxu0 %v3296
    %v3393 = vpop.f32.mrf.mxu0
    %v3394 = vadd.f32 0.0, %v3393
    %v3395 = vpop.f32.mrf.mxu0
    %3396 = vmatprep.mubr.f32.mxu0 0.0
    %3397 = vmatmul.mubr.f32.gmra.mxu0 %v3299
    %v3398 = vpop.f32.mrf.mxu0
    %v3399 = vadd.f32 0.0, %v3398
    %v3400 = vpop.f32.mrf.mxu0
    %3401 = vmatprep.mubr.f32.mxu0 0.0
    %3402 = vmatmul.mubr.f32.gmra.mxu0 %v3302
    %v3403 = vpop.f32.mrf.mxu0
    %v3404 = vadd.f32 0.0, %v3403
    %v3405 = vpop.f32.mrf.mxu0
    %3406 = vmatprep.mubr.f32.mxu0 0.0
    %3407 = vmatmul.mubr.f32.gmra.mxu0 %v3305
    %v3408 = vpop.f32.mrf.mxu0
    %v3409 = vadd.f32 0.0, %v3408
    %v3410 = vpop.f32.mrf.mxu0
    %3411 = vdwg.mxu0
    %v3412 = vpack.c.bf16 %v3379, %v3374
    %v3413 = vpack.c.bf16 %v3389, %v3384
    %v3414 = vpack.c.bf16 %v3399, %v3394
    %v3415 = vpack.c.bf16 %v3409, %v3404
    %s3416 = scalar_lea.vmem [#allocation7], 512
    %v3417 = vld [vmem:[%s3416] sm:$0xff]
    %v3418 = vld [vmem:[%s3416 + $0x8] sm:$0xff]
    %v3419 = vld [vmem:[%s3416 + $0x10] sm:$0xff]
    %v3420 = vld [vmem:[%s3416 + $0x18] sm:$0xff]
    %v3421 = vld [vmem:[%s3416 + $0x20] sm:$0xff]
    %v3422 = vld [vmem:[%s3416 + $0x28] sm:$0xff]
    %v3423 = vld [vmem:[%s3416 + $0x30] sm:$0xff]
    %v3424 = vld [vmem:[%s3416 + $0x38] sm:$0xff]
    %v3425 = vld [vmem:[%s3416 + $0x40] sm:$0xff]
    %v3426 = vld [vmem:[%s3416 + $0x48] sm:$0xff]
    %v3427 = vld [vmem:[%s3416 + $0x50] sm:$0xff]
    %v3428 = vld [vmem:[%s3416 + $0x58] sm:$0xff]
    %v3429 = vld [vmem:[%s3416 + $0x60] sm:$0xff]
    %v3430 = vld [vmem:[%s3416 + $0x68] sm:$0xff]
    %v3431 = vld [vmem:[%s3416 + $0x70] sm:$0xff]
    %v3432 = vld [vmem:[%s3416 + $0x78] sm:$0xff]
    %v3433 = vld [vmem:[%s3416 + $0x80] sm:$0xff]
    %v3434 = vld [vmem:[%s3416 + $0x88] sm:$0xff]
    %v3435 = vld [vmem:[%s3416 + $0x90] sm:$0xff]
    %v3436 = vld [vmem:[%s3416 + $0x98] sm:$0xff]
    %v3437 = vld [vmem:[%s3416 + $0xa0] sm:$0xff]
    %v3438 = vld [vmem:[%s3416 + $0xa8] sm:$0xff]
    %v3439 = vld [vmem:[%s3416 + $0xb0] sm:$0xff]
    %v3440 = vld [vmem:[%s3416 + $0xb8] sm:$0xff]
    %v3441 = vld [vmem:[%s3416 + $0xc0] sm:$0xff]
    %v3442 = vld [vmem:[%s3416 + $0xc8] sm:$0xff]
    %v3443 = vld [vmem:[%s3416 + $0xd0] sm:$0xff]
    %v3444 = vld [vmem:[%s3416 + $0xd8] sm:$0xff]
    %v3445 = vld [vmem:[%s3416 + $0xe0] sm:$0xff]
    %v3446 = vld [vmem:[%s3416 + $0xe8] sm:$0xff]
    %v3447 = vld [vmem:[%s3416 + $0xf0] sm:$0xff]
    %v3448 = vld [vmem:[%s3416 + $0xf8] sm:$0xff]
    %v3481 = vunpack.c.l.b16 %v3417
    %v3482 = vunpack.c.h.b16 %v3417
    %v3483 = vunpack.c.l.b16 %v3418
    %v3484 = vunpack.c.h.b16 %v3418
    %v3485 = vunpack.c.l.b16 %v3419
    %v3486 = vunpack.c.h.b16 %v3419
    %v3487 = vunpack.c.l.b16 %v3420
    %v3488 = vunpack.c.h.b16 %v3420
    %v3489 = vunpack.c.l.b16 %v3421
    %v3490 = vunpack.c.h.b16 %v3421
    %v3491 = vunpack.c.l.b16 %v3422
    %v3492 = vunpack.c.h.b16 %v3422
    %v3493 = vunpack.c.l.b16 %v3423
    %v3494 = vunpack.c.h.b16 %v3423
    %v3495 = vunpack.c.l.b16 %v3424
    %v3496 = vunpack.c.h.b16 %v3424
    %v3497 = vunpack.c.l.b16 %v3425
    %v3498 = vunpack.c.h.b16 %v3425
    %v3499 = vunpack.c.l.b16 %v3426
    %v3500 = vunpack.c.h.b16 %v3426
    %v3501 = vunpack.c.l.b16 %v3427
    %v3502 = vunpack.c.h.b16 %v3427
    %v3503 = vunpack.c.l.b16 %v3428
    %v3504 = vunpack.c.h.b16 %v3428
    %v3505 = vunpack.c.l.b16 %v3429
    %v3506 = vunpack.c.h.b16 %v3429
    %v3507 = vunpack.c.l.b16 %v3430
    %v3508 = vunpack.c.h.b16 %v3430
    %v3509 = vunpack.c.l.b16 %v3431
    %v3510 = vunpack.c.h.b16 %v3431
    %v3511 = vunpack.c.l.b16 %v3432
    %v3512 = vunpack.c.h.b16 %v3432
    %v3513 = vunpack.c.l.b16 %v3433
    %v3514 = vunpack.c.h.b16 %v3433
    %v3515 = vunpack.c.l.b16 %v3434
    %v3516 = vunpack.c.h.b16 %v3434
    %v3517 = vunpack.c.l.b16 %v3435
    %v3518 = vunpack.c.h.b16 %v3435
    %v3519 = vunpack.c.l.b16 %v3436
    %v3520 = vunpack.c.h.b16 %v3436
    %v3521 = vunpack.c.l.b16 %v3437
    %v3522 = vunpack.c.h.b16 %v3437
    %v3523 = vunpack.c.l.b16 %v3438
    %v3524 = vunpack.c.h.b16 %v3438
    %v3525 = vunpack.c.l.b16 %v3439
    %v3526 = vunpack.c.h.b16 %v3439
    %v3527 = vunpack.c.l.b16 %v3440
    %v3528 = vunpack.c.h.b16 %v3440
    %v3529 = vunpack.c.l.b16 %v3441
    %v3530 = vunpack.c.h.b16 %v3441
    %v3531 = vunpack.c.l.b16 %v3442
    %v3532 = vunpack.c.h.b16 %v3442
    %v3533 = vunpack.c.l.b16 %v3443
    %v3534 = vunpack.c.h.b16 %v3443
    %v3535 = vunpack.c.l.b16 %v3444
    %v3536 = vunpack.c.h.b16 %v3444
    %v3537 = vunpack.c.l.b16 %v3445
    %v3538 = vunpack.c.h.b16 %v3445
    %v3539 = vunpack.c.l.b16 %v3446
    %v3540 = vunpack.c.h.b16 %v3446
    %v3541 = vunpack.c.l.b16 %v3447
    %v3542 = vunpack.c.h.b16 %v3447
    %v3543 = vunpack.c.l.b16 %v3448
    %v3544 = vunpack.c.h.b16 %v3448
    %v3545 = vpack.c.b16 %v3485, %v3481
    %v3546 = vpack.c.b16 %v3486, %v3482
    %v3547 = vpack.c.b16 %v3487, %v3483
    %v3548 = vpack.c.b16 %v3488, %v3484
    %v3549 = vpack.c.b16 %v3493, %v3489
    %v3550 = vpack.c.b16 %v3494, %v3490
    %v3551 = vpack.c.b16 %v3495, %v3491
    %v3552 = vpack.c.b16 %v3496, %v3492
    %v3553 = vpack.c.b16 %v3501, %v3497
    %v3554 = vpack.c.b16 %v3502, %v3498
    %v3555 = vpack.c.b16 %v3503, %v3499
    %v3556 = vpack.c.b16 %v3504, %v3500
    %v3557 = vpack.c.b16 %v3509, %v3505
    %v3558 = vpack.c.b16 %v3510, %v3506
    %v3559 = vpack.c.b16 %v3511, %v3507
    %v3560 = vpack.c.b16 %v3512, %v3508
    %v3561 = vpack.c.b16 %v3517, %v3513
    %v3562 = vpack.c.b16 %v3518, %v3514
    %v3563 = vpack.c.b16 %v3519, %v3515
    %v3564 = vpack.c.b16 %v3520, %v3516
    %v3565 = vpack.c.b16 %v3525, %v3521
    %v3566 = vpack.c.b16 %v3526, %v3522
    %v3567 = vpack.c.b16 %v3527, %v3523
    %v3568 = vpack.c.b16 %v3528, %v3524
    %v3569 = vpack.c.b16 %v3533, %v3529
    %v3570 = vpack.c.b16 %v3534, %v3530
    %v3571 = vpack.c.b16 %v3535, %v3531
    %v3572 = vpack.c.b16 %v3536, %v3532
    %v3573 = vpack.c.b16 %v3541, %v3537
    %v3574 = vpack.c.b16 %v3542, %v3538
    %v3575 = vpack.c.b16 %v3543, %v3539
    %v3576 = vpack.c.b16 %v3544, %v3540
    %3609 = vmatprep.subr.bf16.mxu0 %v3574
    %3610 = vmatpush1.bf16.msra.mxu0 %v3573
    %3611 = vmatprep.subr.bf16.mxu0 %v3570
    %3612 = vmatpush1.bf16.msra.mxu0 %v3569
    %3613 = vmatprep.subr.bf16.mxu0 %v3566
    %3614 = vmatpush1.bf16.msra.mxu0 %v3565
    %3615 = vmatprep.subr.bf16.mxu0 %v3562
    %3616 = vmatpush1.bf16.msra.mxu0 %v3561
    %3617 = vmatprep.subr.bf16.mxu0 %v3558
    %3618 = vmatpush1.bf16.msra.mxu0 %v3557
    %3619 = vmatprep.subr.bf16.mxu0 %v3554
    %3620 = vmatpush1.bf16.msra.mxu0 %v3553
    %3621 = vmatprep.subr.bf16.mxu0 %v3550
    %3622 = vmatpush1.bf16.msra.mxu0 %v3549
    %3623 = vmatprep.subr.bf16.mxu0 %v3546
    %3624 = vmatpush1.bf16.msra.mxu0 %v3545
    %3625 = vmatprep.subr.bf16.mxu0 0
    %3626 = vmatpush2.bf16.msra.mxu0 0
    %3627 = vmatprep.subr.bf16.mxu0 0
    %3628 = vmatpush2.bf16.msra.mxu0 0
    %3629 = vmatprep.subr.bf16.mxu0 0
    %3630 = vmatpush2.bf16.msra.mxu0 0
    %3631 = vmatprep.subr.bf16.mxu0 0
    %3632 = vmatpush2.bf16.msra.mxu0 0
    %3633 = vmatprep.subr.bf16.mxu0 0
    %3634 = vmatpush2.bf16.msra.mxu0 0
    %3635 = vmatprep.subr.bf16.mxu0 0
    %3636 = vmatpush2.bf16.msra.mxu0 0
    %3637 = vmatprep.subr.bf16.mxu0 0
    %3638 = vmatpush2.bf16.msra.mxu0 0
    %3639 = vmatprep.subr.bf16.mxu0 0
    %3640 = vmatpush2.bf16.msra.mxu0 0
    %3641 = vmatprep.mubr.bf16.mxu0 0
    %3642 = vmatmul.mubr.bf16.gmra.mxu0 %v3412
    %v3643 = vpop.f32.mrf.mxu0
    %v3644 = vadd.f32 0.0, %v3643
    %v3645 = vpop.f32.mrf.mxu0
    %v3646 = vadd.f32 0.0, %v3645
    %v3647 = vpop.f32.mrf.mxu0
    %v3648 = vadd.f32 0.0, %v3647
    %v3649 = vpop.f32.mrf.mxu0
    %v3650 = vadd.f32 0.0, %v3649
    %3651 = vmatprep.mubr.bf16.mxu0 0
    %3652 = vmatmul.mubr.bf16.gmra.mxu0 %v3413
    %v3653 = vpop.f32.mrf.mxu0
    %v3654 = vadd.f32 0.0, %v3653
    %v3655 = vpop.f32.mrf.mxu0
    %v3656 = vadd.f32 0.0, %v3655
    %v3657 = vpop.f32.mrf.mxu0
    %v3658 = vadd.f32 0.0, %v3657
    %v3659 = vpop.f32.mrf.mxu0
    %v3660 = vadd.f32 0.0, %v3659
    %3661 = vmatprep.mubr.bf16.mxu0 0
    %3662 = vmatmul.mubr.bf16.gmra.mxu0 %v3414
    %v3663 = vpop.f32.mrf.mxu0
    %v3664 = vadd.f32 0.0, %v3663
    %v3665 = vpop.f32.mrf.mxu0
    %v3666 = vadd.f32 0.0, %v3665
    %v3667 = vpop.f32.mrf.mxu0
    %v3668 = vadd.f32 0.0, %v3667
    %v3669 = vpop.f32.mrf.mxu0
    %v3670 = vadd.f32 0.0, %v3669
    %3671 = vmatprep.mubr.bf16.mxu0 0
    %3672 = vmatmul.mubr.bf16.gmra.mxu0 %v3415
    %v3673 = vpop.f32.mrf.mxu0
    %v3674 = vadd.f32 0.0, %v3673
    %v3675 = vpop.f32.mrf.mxu0
    %v3676 = vadd.f32 0.0, %v3675
    %v3677 = vpop.f32.mrf.mxu0
    %v3678 = vadd.f32 0.0, %v3677
    %v3679 = vpop.f32.mrf.mxu0
    %v3680 = vadd.f32 0.0, %v3679
    %3681 = vdwg.mxu0
    %3682 = vmatprep.subr.bf16.mxu0 %v3576
    %3683 = vmatpush1.bf16.msra.mxu0 %v3575
    %3684 = vmatprep.subr.bf16.mxu0 %v3572
    %3685 = vmatpush1.bf16.msra.mxu0 %v3571
    %3686 = vmatprep.subr.bf16.mxu0 %v3568
    %3687 = vmatpush1.bf16.msra.mxu0 %v3567
    %3688 = vmatprep.subr.bf16.mxu0 %v3564
    %3689 = vmatpush1.bf16.msra.mxu0 %v3563
    %3690 = vmatprep.subr.bf16.mxu0 %v3560
    %3691 = vmatpush1.bf16.msra.mxu0 %v3559
    %3692 = vmatprep.subr.bf16.mxu0 %v3556
    %3693 = vmatpush1.bf16.msra.mxu0 %v3555
    %3694 = vmatprep.subr.bf16.mxu0 %v3552
    %3695 = vmatpush1.bf16.msra.mxu0 %v3551
    %3696 = vmatprep.subr.bf16.mxu0 %v3548
    %3697 = vmatpush1.bf16.msra.mxu0 %v3547
    %3698 = vmatprep.subr.bf16.mxu0 0
    %3699 = vmatpush2.bf16.msra.mxu0 0
    %3700 = vmatprep.subr.bf16.mxu0 0
    %3701 = vmatpush2.bf16.msra.mxu0 0
    %3702 = vmatprep.subr.bf16.mxu0 0
    %3703 = vmatpush2.bf16.msra.mxu0 0
    %3704 = vmatprep.subr.bf16.mxu0 0
    %3705 = vmatpush2.bf16.msra.mxu0 0
    %3706 = vmatprep.subr.bf16.mxu0 0
    %3707 = vmatpush2.bf16.msra.mxu0 0
    %3708 = vmatprep.subr.bf16.mxu0 0
    %3709 = vmatpush2.bf16.msra.mxu0 0
    %3710 = vmatprep.subr.bf16.mxu0 0
    %3711 = vmatpush2.bf16.msra.mxu0 0
    %3712 = vmatprep.subr.bf16.mxu0 0
    %3713 = vmatpush2.bf16.msra.mxu0 0
    %3714 = vmatprep.mubr.bf16.mxu0 0
    %3715 = vmatmul.mubr.bf16.gmra.mxu0 %v3412
    %v3716 = vpop.f32.mrf.mxu0
    %v3717 = vadd.f32 0.0, %v3716
    %v3718 = vpop.f32.mrf.mxu0
    %v3719 = vadd.f32 0.0, %v3718
    %v3720 = vpop.f32.mrf.mxu0
    %v3721 = vadd.f32 0.0, %v3720
    %v3722 = vpop.f32.mrf.mxu0
    %v3723 = vadd.f32 0.0, %v3722
    %3724 = vmatprep.mubr.bf16.mxu0 0
    %3725 = vmatmul.mubr.bf16.gmra.mxu0 %v3413
    %v3726 = vpop.f32.mrf.mxu0
    %v3727 = vadd.f32 0.0, %v3726
    %v3728 = vpop.f32.mrf.mxu0
    %v3729 = vadd.f32 0.0, %v3728
    %v3730 = vpop.f32.mrf.mxu0
    %v3731 = vadd.f32 0.0, %v3730
    %v3732 = vpop.f32.mrf.mxu0
    %v3733 = vadd.f32 0.0, %v3732
    %3734 = vmatprep.mubr.bf16.mxu0 0
    %3735 = vmatmul.mubr.bf16.gmra.mxu0 %v3414
    %v3736 = vpop.f32.mrf.mxu0
    %v3737 = vadd.f32 0.0, %v3736
    %v3738 = vpop.f32.mrf.mxu0
    %v3739 = vadd.f32 0.0, %v3738
    %v3740 = vpop.f32.mrf.mxu0
    %v3741 = vadd.f32 0.0, %v3740
    %v3742 = vpop.f32.mrf.mxu0
    %v3743 = vadd.f32 0.0, %v3742
    %3744 = vmatprep.mubr.bf16.mxu0 0
    %3745 = vmatmul.mubr.bf16.gmra.mxu0 %v3415
    %v3746 = vpop.f32.mrf.mxu0
    %v3747 = vadd.f32 0.0, %v3746
    %v3748 = vpop.f32.mrf.mxu0
    %v3749 = vadd.f32 0.0, %v3748
    %v3750 = vpop.f32.mrf.mxu0
    %v3751 = vadd.f32 0.0, %v3750
    %v3752 = vpop.f32.mrf.mxu0
    %v3753 = vadd.f32 0.0, %v3752
    %3754 = vdwg.mxu0
    %v3755 = vadd.f32 %v3163, %v3644
    %v3756 = vadd.f32 %v3165, %v3646
    %v3757 = vadd.f32 %v3236, %v3717
    %v3758 = vadd.f32 %v3238, %v3719
    %v3759 = vadd.f32 %v3167, %v3648
    %v3760 = vadd.f32 %v3169, %v3650
    %v3761 = vadd.f32 %v3240, %v3721
    %v3762 = vadd.f32 %v3242, %v3723
    %v3763 = vadd.f32 %v3173, %v3654
    %v3764 = vadd.f32 %v3175, %v3656
    %v3765 = vadd.f32 %v3246, %v3727
    %v3766 = vadd.f32 %v3248, %v3729
    %v3767 = vadd.f32 %v3177, %v3658
    %v3768 = vadd.f32 %v3179, %v3660
    %v3769 = vadd.f32 %v3250, %v3731
    %v3770 = vadd.f32 %v3252, %v3733
    %v3771 = vadd.f32 %v3183, %v3664
    %v3772 = vadd.f32 %v3185, %v3666
    %v3773 = vadd.f32 %v3256, %v3737
    %v3774 = vadd.f32 %v3258, %v3739
    %v3775 = vadd.f32 %v3187, %v3668
    %v3776 = vadd.f32 %v3189, %v3670
    %v3777 = vadd.f32 %v3260, %v3741
    %v3778 = vadd.f32 %v3262, %v3743
    %v3779 = vadd.f32 %v3193, %v3674
    %v3780 = vadd.f32 %v3195, %v3676
    %v3781 = vadd.f32 %v3266, %v3747
    %v3782 = vadd.f32 %v3268, %v3749
    %v3783 = vadd.f32 %v3197, %v3678
    %v3784 = vadd.f32 %v3199, %v3680
    %v3785 = vadd.f32 %v3270, %v3751
    %v3786 = vadd.f32 %v3272, %v3753
    %s3787 = scalar_lea.vmem [#allocation6], 192
    %v3788 = vld [vmem:[%s3787] sm:$0xff]
    %v3789 = vld [vmem:[%s3787 + $0x8] sm:$0xff]
    %v3790 = vld [vmem:[%s3787 + $0x10] sm:$0xff]
    %v3791 = vld [vmem:[%s3787 + $0x18] sm:$0xff]
    %v3792 = vld [vmem:[%s3787 + $0x20] sm:$0xff]
    %v3793 = vld [vmem:[%s3787 + $0x28] sm:$0xff]
    %v3794 = vld [vmem:[%s3787 + $0x30] sm:$0xff]
    %v3795 = vld [vmem:[%s3787 + $0x38] sm:$0xff]
    %v3797 = vsel %vm2321, %v3788, 0
    %v3800 = vsel %vm2321, %v3789, 0
    %v3803 = vsel %vm2321, %v3790, 0
    %v3806 = vsel %vm2321, %v3791, 0
    %v3809 = vsel %vm2321, %v3792, 0
    %v3812 = vsel %vm2321, %v3793, 0
    %v3815 = vsel %vm2321, %v3794, 0
    %v3818 = vsel %vm2321, %v3795, 0
    %3820 = vmatprep.subr.mxu0 0.0
    %3821 = vmatpush1.msra.mxu0 0.0
    %3822 = vmatprep.subr.mxu0 0.0
    %3823 = vmatpush1.msra.mxu0 0.0
    %3824 = vmatprep.subr.mxu0 0.0
    %3825 = vmatpush1.msra.mxu0 0.0
    %3826 = vmatprep.subr.mxu0 0.0
    %3827 = vmatpush1.msra.mxu0 0.0
    %3828 = vmatprep.subr.mxu0 0.0
    %3829 = vmatpush1.msra.mxu0 %v2312
    %3830 = vmatprep.subr.mxu0 0.0
    %3831 = vmatpush1.msra.mxu0 %v2311
    %3832 = vmatprep.subr.mxu0 0.0
    %3833 = vmatpush1.msra.mxu0 %v2310
    %3834 = vmatprep.subr.mxu0 0.0
    %3835 = vmatpush1.msra.mxu0 %v2309
    %3836 = vmatprep.subr.mxu0 0.0
    %3837 = vmatpush1.msra.mxu0 %v2308
    %3838 = vmatprep.subr.mxu0 0.0
    %3839 = vmatpush1.msra.mxu0 %v2307
    %3840 = vmatprep.subr.mxu0 0.0
    %3841 = vmatpush1.msra.mxu0 %v2306
    %3842 = vmatprep.subr.mxu0 0.0
    %3843 = vmatpush1.msra.mxu0 %v2305
    %3844 = vmatprep.subr.mxu0 0.0
    %3845 = vmatpush1.msra.mxu0 %v2304
    %3846 = vmatprep.subr.mxu0 0.0
    %3847 = vmatpush1.msra.mxu0 %v2303
    %3848 = vmatprep.subr.mxu0 0.0
    %3849 = vmatpush1.msra.mxu0 %v2302
    %3850 = vmatprep.subr.mxu0 0.0
    %3851 = vmatpush1.msra.mxu0 %v2301
    %3852 = vmatprep.subr.mxu0 0.0
    %3853 = vmatpush2.msra.mxu0 0.0
    %3854 = vmatprep.subr.mxu0 0.0
    %3855 = vmatpush2.msra.mxu0 0.0
    %3856 = vmatprep.subr.mxu0 0.0
    %3857 = vmatpush2.msra.mxu0 0.0
    %3858 = vmatprep.subr.mxu0 0.0
    %3859 = vmatpush2.msra.mxu0 0.0
    %3860 = vmatprep.subr.mxu0 0.0
    %3861 = vmatpush2.msra.mxu0 0.0
    %3862 = vmatprep.subr.mxu0 0.0
    %3863 = vmatpush2.msra.mxu0 0.0
    %3864 = vmatprep.subr.mxu0 0.0
    %3865 = vmatpush2.msra.mxu0 0.0
    %3866 = vmatprep.subr.mxu0 0.0
    %3867 = vmatpush2.msra.mxu0 0.0
    %3868 = vmatprep.subr.mxu0 0.0
    %3869 = vmatpush2.msra.mxu0 0.0
    %3870 = vmatprep.subr.mxu0 0.0
    %3871 = vmatpush2.msra.mxu0 0.0
    %3872 = vmatprep.subr.mxu0 0.0
    %3873 = vmatpush2.msra.mxu0 0.0
    %3874 = vmatprep.subr.mxu0 0.0
    %3875 = vmatpush2.msra.mxu0 0.0
    %3876 = vmatprep.subr.mxu0 0.0
    %3877 = vmatpush2.msra.mxu0 0.0
    %3878 = vmatprep.subr.mxu0 0.0
    %3879 = vmatpush2.msra.mxu0 0.0
    %3880 = vmatprep.subr.mxu0 0.0
    %3881 = vmatpush2.msra.mxu0 0.0
    %3882 = vmatprep.subr.mxu0 0.0
    %3883 = vmatpush2.msra.mxu0 0.0
    %3884 = vmatprep.mubr.f32.mxu0 0.0
    %3885 = vmatmul.mubr.f32.gmra.mxu0 %v3797
    %v3886 = vpop.f32.mrf.mxu0
    %v3887 = vadd.f32 0.0, %v3886
    %v3888 = vpop.f32.mrf.mxu0
    %3889 = vmatprep.mubr.f32.mxu0 0.0
    %3890 = vmatmul.mubr.f32.gmra.mxu0 %v3800
    %v3891 = vpop.f32.mrf.mxu0
    %v3892 = vadd.f32 0.0, %v3891
    %v3893 = vpop.f32.mrf.mxu0
    %3894 = vmatprep.mubr.f32.mxu0 0.0
    %3895 = vmatmul.mubr.f32.gmra.mxu0 %v3803
    %v3896 = vpop.f32.mrf.mxu0
    %v3897 = vadd.f32 0.0, %v3896
    %v3898 = vpop.f32.mrf.mxu0
    %3899 = vmatprep.mubr.f32.mxu0 0.0
    %3900 = vmatmul.mubr.f32.gmra.mxu0 %v3806
    %v3901 = vpop.f32.mrf.mxu0
    %v3902 = vadd.f32 0.0, %v3901
    %v3903 = vpop.f32.mrf.mxu0
    %3904 = vmatprep.mubr.f32.mxu0 0.0
    %3905 = vmatmul.mubr.f32.gmra.mxu0 %v3809
    %v3906 = vpop.f32.mrf.mxu0
    %v3907 = vadd.f32 0.0, %v3906
    %v3908 = vpop.f32.mrf.mxu0
    %3909 = vmatprep.mubr.f32.mxu0 0.0
    %3910 = vmatmul.mubr.f32.gmra.mxu0 %v3812
    %v3911 = vpop.f32.mrf.mxu0
    %v3912 = vadd.f32 0.0, %v3911
    %v3913 = vpop.f32.mrf.mxu0
    %3914 = vmatprep.mubr.f32.mxu0 0.0
    %3915 = vmatmul.mubr.f32.gmra.mxu0 %v3815
    %v3916 = vpop.f32.mrf.mxu0
    %v3917 = vadd.f32 0.0, %v3916
    %v3918 = vpop.f32.mrf.mxu0
    %3919 = vmatprep.mubr.f32.mxu0 0.0
    %3920 = vmatmul.mubr.f32.gmra.mxu0 %v3818
    %v3921 = vpop.f32.mrf.mxu0
    %v3922 = vadd.f32 0.0, %v3921
    %v3923 = vpop.f32.mrf.mxu0
    %3924 = vdwg.mxu0
    %v3925 = vpack.c.bf16 %v3892, %v3887
    %v3926 = vpack.c.bf16 %v3902, %v3897
    %v3927 = vpack.c.bf16 %v3912, %v3907
    %v3928 = vpack.c.bf16 %v3922, %v3917
    %s3929 = scalar_lea.vmem [#allocation7], 768
    %v3930 = vld [vmem:[%s3929] sm:$0xff]
    %v3931 = vld [vmem:[%s3929 + $0x8] sm:$0xff]
    %v3932 = vld [vmem:[%s3929 + $0x10] sm:$0xff]
    %v3933 = vld [vmem:[%s3929 + $0x18] sm:$0xff]
    %v3934 = vld [vmem:[%s3929 + $0x20] sm:$0xff]
    %v3935 = vld [vmem:[%s3929 + $0x28] sm:$0xff]
    %v3936 = vld [vmem:[%s3929 + $0x30] sm:$0xff]
    %v3937 = vld [vmem:[%s3929 + $0x38] sm:$0xff]
    %v3938 = vld [vmem:[%s3929 + $0x40] sm:$0xff]
    %v3939 = vld [vmem:[%s3929 + $0x48] sm:$0xff]
    %v3940 = vld [vmem:[%s3929 + $0x50] sm:$0xff]
    %v3941 = vld [vmem:[%s3929 + $0x58] sm:$0xff]
    %v3942 = vld [vmem:[%s3929 + $0x60] sm:$0xff]
    %v3943 = vld [vmem:[%s3929 + $0x68] sm:$0xff]
    %v3944 = vld [vmem:[%s3929 + $0x70] sm:$0xff]
    %v3945 = vld [vmem:[%s3929 + $0x78] sm:$0xff]
    %v3946 = vld [vmem:[%s3929 + $0x80] sm:$0xff]
    %v3947 = vld [vmem:[%s3929 + $0x88] sm:$0xff]
    %v3948 = vld [vmem:[%s3929 + $0x90] sm:$0xff]
    %v3949 = vld [vmem:[%s3929 + $0x98] sm:$0xff]
    %v3950 = vld [vmem:[%s3929 + $0xa0] sm:$0xff]
    %v3951 = vld [vmem:[%s3929 + $0xa8] sm:$0xff]
    %v3952 = vld [vmem:[%s3929 + $0xb0] sm:$0xff]
    %v3953 = vld [vmem:[%s3929 + $0xb8] sm:$0xff]
    %v3954 = vld [vmem:[%s3929 + $0xc0] sm:$0xff]
    %v3955 = vld [vmem:[%s3929 + $0xc8] sm:$0xff]
    %v3956 = vld [vmem:[%s3929 + $0xd0] sm:$0xff]
    %v3957 = vld [vmem:[%s3929 + $0xd8] sm:$0xff]
    %v3958 = vld [vmem:[%s3929 + $0xe0] sm:$0xff]
    %v3959 = vld [vmem:[%s3929 + $0xe8] sm:$0xff]
    %v3960 = vld [vmem:[%s3929 + $0xf0] sm:$0xff]
    %v3961 = vld [vmem:[%s3929 + $0xf8] sm:$0xff]
    %v3994 = vunpack.c.l.b16 %v3930
    %v3995 = vunpack.c.h.b16 %v3930
    %v3996 = vunpack.c.l.b16 %v3931
    %v3997 = vunpack.c.h.b16 %v3931
    %v3998 = vunpack.c.l.b16 %v3932
    %v3999 = vunpack.c.h.b16 %v3932
    %v4000 = vunpack.c.l.b16 %v3933
    %v4001 = vunpack.c.h.b16 %v3933
    %v4002 = vunpack.c.l.b16 %v3934
    %v4003 = vunpack.c.h.b16 %v3934
    %v4004 = vunpack.c.l.b16 %v3935
    %v4005 = vunpack.c.h.b16 %v3935
    %v4006 = vunpack.c.l.b16 %v3936
    %v4007 = vunpack.c.h.b16 %v3936
    %v4008 = vunpack.c.l.b16 %v3937
    %v4009 = vunpack.c.h.b16 %v3937
    %v4010 = vunpack.c.l.b16 %v3938
    %v4011 = vunpack.c.h.b16 %v3938
    %v4012 = vunpack.c.l.b16 %v3939
    %v4013 = vunpack.c.h.b16 %v3939
    %v4014 = vunpack.c.l.b16 %v3940
    %v4015 = vunpack.c.h.b16 %v3940
    %v4016 = vunpack.c.l.b16 %v3941
    %v4017 = vunpack.c.h.b16 %v3941
    %v4018 = vunpack.c.l.b16 %v3942
    %v4019 = vunpack.c.h.b16 %v3942
    %v4020 = vunpack.c.l.b16 %v3943
    %v4021 = vunpack.c.h.b16 %v3943
    %v4022 = vunpack.c.l.b16 %v3944
    %v4023 = vunpack.c.h.b16 %v3944
    %v4024 = vunpack.c.l.b16 %v3945
    %v4025 = vunpack.c.h.b16 %v3945
    %v4026 = vunpack.c.l.b16 %v3946
    %v4027 = vunpack.c.h.b16 %v3946
    %v4028 = vunpack.c.l.b16 %v3947
    %v4029 = vunpack.c.h.b16 %v3947
    %v4030 = vunpack.c.l.b16 %v3948
    %v4031 = vunpack.c.h.b16 %v3948
    %v4032 = vunpack.c.l.b16 %v3949
    %v4033 = vunpack.c.h.b16 %v3949
    %v4034 = vunpack.c.l.b16 %v3950
    %v4035 = vunpack.c.h.b16 %v3950
    %v4036 = vunpack.c.l.b16 %v3951
    %v4037 = vunpack.c.h.b16 %v3951
    %v4038 = vunpack.c.l.b16 %v3952
    %v4039 = vunpack.c.h.b16 %v3952
    %v4040 = vunpack.c.l.b16 %v3953
    %v4041 = vunpack.c.h.b16 %v3953
    %v4042 = vunpack.c.l.b16 %v3954
    %v4043 = vunpack.c.h.b16 %v3954
    %v4044 = vunpack.c.l.b16 %v3955
    %v4045 = vunpack.c.h.b16 %v3955
    %v4046 = vunpack.c.l.b16 %v3956
    %v4047 = vunpack.c.h.b16 %v3956
    %v4048 = vunpack.c.l.b16 %v3957
    %v4049 = vunpack.c.h.b16 %v3957
    %v4050 = vunpack.c.l.b16 %v3958
    %v4051 = vunpack.c.h.b16 %v3958
    %v4052 = vunpack.c.l.b16 %v3959
    %v4053 = vunpack.c.h.b16 %v3959
    %v4054 = vunpack.c.l.b16 %v3960
    %v4055 = vunpack.c.h.b16 %v3960
    %v4056 = vunpack.c.l.b16 %v3961
    %v4057 = vunpack.c.h.b16 %v3961
    %v4058 = vpack.c.b16 %v3998, %v3994
    %v4059 = vpack.c.b16 %v3999, %v3995
    %v4060 = vpack.c.b16 %v4000, %v3996
    %v4061 = vpack.c.b16 %v4001, %v3997
    %v4062 = vpack.c.b16 %v4006, %v4002
    %v4063 = vpack.c.b16 %v4007, %v4003
    %v4064 = vpack.c.b16 %v4008, %v4004
    %v4065 = vpack.c.b16 %v4009, %v4005
    %v4066 = vpack.c.b16 %v4014, %v4010
    %v4067 = vpack.c.b16 %v4015, %v4011
    %v4068 = vpack.c.b16 %v4016, %v4012
    %v4069 = vpack.c.b16 %v4017, %v4013
    %v4070 = vpack.c.b16 %v4022, %v4018
    %v4071 = vpack.c.b16 %v4023, %v4019
    %v4072 = vpack.c.b16 %v4024, %v4020
    %v4073 = vpack.c.b16 %v4025, %v4021
    %v4074 = vpack.c.b16 %v4030, %v4026
    %v4075 = vpack.c.b16 %v4031, %v4027
    %v4076 = vpack.c.b16 %v4032, %v4028
    %v4077 = vpack.c.b16 %v4033, %v4029
    %v4078 = vpack.c.b16 %v4038, %v4034
    %v4079 = vpack.c.b16 %v4039, %v4035
    %v4080 = vpack.c.b16 %v4040, %v4036
    %v4081 = vpack.c.b16 %v4041, %v4037
    %v4082 = vpack.c.b16 %v4046, %v4042
    %v4083 = vpack.c.b16 %v4047, %v4043
    %v4084 = vpack.c.b16 %v4048, %v4044
    %v4085 = vpack.c.b16 %v4049, %v4045
    %v4086 = vpack.c.b16 %v4054, %v4050
    %v4087 = vpack.c.b16 %v4055, %v4051
    %v4088 = vpack.c.b16 %v4056, %v4052
    %v4089 = vpack.c.b16 %v4057, %v4053
    %4122 = vmatprep.subr.bf16.mxu0 %v4087
    %4123 = vmatpush1.bf16.msra.mxu0 %v4086
    %4124 = vmatprep.subr.bf16.mxu0 %v4083
    %4125 = vmatpush1.bf16.msra.mxu0 %v4082
    %4126 = vmatprep.subr.bf16.mxu0 %v4079
    %4127 = vmatpush1.bf16.msra.mxu0 %v4078
    %4128 = vmatprep.subr.bf16.mxu0 %v4075
    %4129 = vmatpush1.bf16.msra.mxu0 %v4074
    %4130 = vmatprep.subr.bf16.mxu0 %v4071
    %4131 = vmatpush1.bf16.msra.mxu0 %v4070
    %4132 = vmatprep.subr.bf16.mxu0 %v4067
    %4133 = vmatpush1.bf16.msra.mxu0 %v4066
    %4134 = vmatprep.subr.bf16.mxu0 %v4063
    %4135 = vmatpush1.bf16.msra.mxu0 %v4062
    %4136 = vmatprep.subr.bf16.mxu0 %v4059
    %4137 = vmatpush1.bf16.msra.mxu0 %v4058
    %4138 = vmatprep.subr.bf16.mxu0 0
    %4139 = vmatpush2.bf16.msra.mxu0 0
    %4140 = vmatprep.subr.bf16.mxu0 0
    %4141 = vmatpush2.bf16.msra.mxu0 0
    %4142 = vmatprep.subr.bf16.mxu0 0
    %4143 = vmatpush2.bf16.msra.mxu0 0
    %4144 = vmatprep.subr.bf16.mxu0 0
    %4145 = vmatpush2.bf16.msra.mxu0 0
    %4146 = vmatprep.subr.bf16.mxu0 0
    %4147 = vmatpush2.bf16.msra.mxu0 0
    %4148 = vmatprep.subr.bf16.mxu0 0
    %4149 = vmatpush2.bf16.msra.mxu0 0
    %4150 = vmatprep.subr.bf16.mxu0 0
    %4151 = vmatpush2.bf16.msra.mxu0 0
    %4152 = vmatprep.subr.bf16.mxu0 0
    %4153 = vmatpush2.bf16.msra.mxu0 0
    %4154 = vmatprep.mubr.bf16.mxu0 0
    %4155 = vmatmul.mubr.bf16.gmra.mxu0 %v3925
    %v4156 = vpop.f32.mrf.mxu0
    %v4157 = vadd.f32 0.0, %v4156
    %v4158 = vpop.f32.mrf.mxu0
    %v4159 = vadd.f32 0.0, %v4158
    %v4160 = vpop.f32.mrf.mxu0
    %v4161 = vadd.f32 0.0, %v4160
    %v4162 = vpop.f32.mrf.mxu0
    %v4163 = vadd.f32 0.0, %v4162
    %4164 = vmatprep.mubr.bf16.mxu0 0
    %4165 = vmatmul.mubr.bf16.gmra.mxu0 %v3926
    %v4166 = vpop.f32.mrf.mxu0
    %v4167 = vadd.f32 0.0, %v4166
    %v4168 = vpop.f32.mrf.mxu0
    %v4169 = vadd.f32 0.0, %v4168
    %v4170 = vpop.f32.mrf.mxu0
    %v4171 = vadd.f32 0.0, %v4170
    %v4172 = vpop.f32.mrf.mxu0
    %v4173 = vadd.f32 0.0, %v4172
    %4174 = vmatprep.mubr.bf16.mxu0 0
    %4175 = vmatmul.mubr.bf16.gmra.mxu0 %v3927
    %v4176 = vpop.f32.mrf.mxu0
    %v4177 = vadd.f32 0.0, %v4176
    %v4178 = vpop.f32.mrf.mxu0
    %v4179 = vadd.f32 0.0, %v4178
    %v4180 = vpop.f32.mrf.mxu0
    %v4181 = vadd.f32 0.0, %v4180
    %v4182 = vpop.f32.mrf.mxu0
    %v4183 = vadd.f32 0.0, %v4182
    %4184 = vmatprep.mubr.bf16.mxu0 0
    %4185 = vmatmul.mubr.bf16.gmra.mxu0 %v3928
    %v4186 = vpop.f32.mrf.mxu0
    %v4187 = vadd.f32 0.0, %v4186
    %v4188 = vpop.f32.mrf.mxu0
    %v4189 = vadd.f32 0.0, %v4188
    %v4190 = vpop.f32.mrf.mxu0
    %v4191 = vadd.f32 0.0, %v4190
    %v4192 = vpop.f32.mrf.mxu0
    %v4193 = vadd.f32 0.0, %v4192
    %4194 = vdwg.mxu0
    %4195 = vmatprep.subr.bf16.mxu0 %v4089
    %4196 = vmatpush1.bf16.msra.mxu0 %v4088
    %4197 = vmatprep.subr.bf16.mxu0 %v4085
    %4198 = vmatpush1.bf16.msra.mxu0 %v4084
    %4199 = vmatprep.subr.bf16.mxu0 %v4081
    %4200 = vmatpush1.bf16.msra.mxu0 %v4080
    %4201 = vmatprep.subr.bf16.mxu0 %v4077
    %4202 = vmatpush1.bf16.msra.mxu0 %v4076
    %4203 = vmatprep.subr.bf16.mxu0 %v4073
    %4204 = vmatpush1.bf16.msra.mxu0 %v4072
    %4205 = vmatprep.subr.bf16.mxu0 %v4069
    %4206 = vmatpush1.bf16.msra.mxu0 %v4068
    %4207 = vmatprep.subr.bf16.mxu0 %v4065
    %4208 = vmatpush1.bf16.msra.mxu0 %v4064
    %4209 = vmatprep.subr.bf16.mxu0 %v4061
    %4210 = vmatpush1.bf16.msra.mxu0 %v4060
    %4211 = vmatprep.subr.bf16.mxu0 0
    %4212 = vmatpush2.bf16.msra.mxu0 0
    %4213 = vmatprep.subr.bf16.mxu0 0
    %4214 = vmatpush2.bf16.msra.mxu0 0
    %4215 = vmatprep.subr.bf16.mxu0 0
    %4216 = vmatpush2.bf16.msra.mxu0 0
    %4217 = vmatprep.subr.bf16.mxu0 0
    %4218 = vmatpush2.bf16.msra.mxu0 0
    %4219 = vmatprep.subr.bf16.mxu0 0
    %4220 = vmatpush2.bf16.msra.mxu0 0
    %4221 = vmatprep.subr.bf16.mxu0 0
    %4222 = vmatpush2.bf16.msra.mxu0 0
    %4223 = vmatprep.subr.bf16.mxu0 0
    %4224 = vmatpush2.bf16.msra.mxu0 0
    %4225 = vmatprep.subr.bf16.mxu0 0
    %4226 = vmatpush2.bf16.msra.mxu0 0
    %4227 = vmatprep.mubr.bf16.mxu0 0
    %4228 = vmatmul.mubr.bf16.gmra.mxu0 %v3925
    %v4229 = vpop.f32.mrf.mxu0
    %v4230 = vadd.f32 0.0, %v4229
    %v4231 = vpop.f32.mrf.mxu0
    %v4232 = vadd.f32 0.0, %v4231
    %v4233 = vpop.f32.mrf.mxu0
    %v4234 = vadd.f32 0.0, %v4233
    %v4235 = vpop.f32.mrf.mxu0
    %v4236 = vadd.f32 0.0, %v4235
    %4237 = vmatprep.mubr.bf16.mxu0 0
    %4238 = vmatmul.mubr.bf16.gmra.mxu0 %v3926
    %v4239 = vpop.f32.mrf.mxu0
    %v4240 = vadd.f32 0.0, %v4239
    %v4241 = vpop.f32.mrf.mxu0
    %v4242 = vadd.f32 0.0, %v4241
    %v4243 = vpop.f32.mrf.mxu0
    %v4244 = vadd.f32 0.0, %v4243
    %v4245 = vpop.f32.mrf.mxu0
    %v4246 = vadd.f32 0.0, %v4245
    %4247 = vmatprep.mubr.bf16.mxu0 0
    %4248 = vmatmul.mubr.bf16.gmra.mxu0 %v3927
    %v4249 = vpop.f32.mrf.mxu0
    %v4250 = vadd.f32 0.0, %v4249
    %v4251 = vpop.f32.mrf.mxu0
    %v4252 = vadd.f32 0.0, %v4251
    %v4253 = vpop.f32.mrf.mxu0
    %v4254 = vadd.f32 0.0, %v4253
    %v4255 = vpop.f32.mrf.mxu0
    %v4256 = vadd.f32 0.0, %v4255
    %4257 = vmatprep.mubr.bf16.mxu0 0
    %4258 = vmatmul.mubr.bf16.gmra.mxu0 %v3928
    %v4259 = vpop.f32.mrf.mxu0
    %v4260 = vadd.f32 0.0, %v4259
    %v4261 = vpop.f32.mrf.mxu0
    %v4262 = vadd.f32 0.0, %v4261
    %v4263 = vpop.f32.mrf.mxu0
    %v4264 = vadd.f32 0.0, %v4263
    %v4265 = vpop.f32.mrf.mxu0
    %v4266 = vadd.f32 0.0, %v4265
    %4267 = vdwg.mxu0
    %v4268 = vadd.f32 %v3755, %v4157
    %v4269 = vadd.f32 %v3756, %v4159
    %v4270 = vadd.f32 %v3757, %v4230
    %v4271 = vadd.f32 %v3758, %v4232
    %v4272 = vadd.f32 %v3759, %v4161
    %v4273 = vadd.f32 %v3760, %v4163
    %v4274 = vadd.f32 %v3761, %v4234
    %v4275 = vadd.f32 %v3762, %v4236
    %v4276 = vadd.f32 %v3763, %v4167
    %v4277 = vadd.f32 %v3764, %v4169
    %v4278 = vadd.f32 %v3765, %v4240
    %v4279 = vadd.f32 %v3766, %v4242
    %v4280 = vadd.f32 %v3767, %v4171
    %v4281 = vadd.f32 %v3768, %v4173
    %v4282 = vadd.f32 %v3769, %v4244
    %v4283 = vadd.f32 %v3770, %v4246
    %v4284 = vadd.f32 %v3771, %v4177
    %v4285 = vadd.f32 %v3772, %v4179
    %v4286 = vadd.f32 %v3773, %v4250
    %v4287 = vadd.f32 %v3774, %v4252
    %v4288 = vadd.f32 %v3775, %v4181
    %v4289 = vadd.f32 %v3776, %v4183
    %v4290 = vadd.f32 %v3777, %v4254
    %v4291 = vadd.f32 %v3778, %v4256
    %v4292 = vadd.f32 %v3779, %v4187
    %v4293 = vadd.f32 %v3780, %v4189
    %v4294 = vadd.f32 %v3781, %v4260
    %v4295 = vadd.f32 %v3782, %v4262
    %v4296 = vadd.f32 %v3783, %v4191
    %v4297 = vadd.f32 %v3784, %v4193
    %v4298 = vadd.f32 %v3785, %v4264
    %v4299 = vadd.f32 %v3786, %v4266
    %s4300 = scalar_lea.vmem [#allocation6], 256
    %v4301 = vld [vmem:[%s4300] sm:$0xff]
    %v4302 = vld [vmem:[%s4300 + $0x8] sm:$0xff]
    %v4303 = vld [vmem:[%s4300 + $0x10] sm:$0xff]
    %v4304 = vld [vmem:[%s4300 + $0x18] sm:$0xff]
    %v4305 = vld [vmem:[%s4300 + $0x20] sm:$0xff]
    %v4306 = vld [vmem:[%s4300 + $0x28] sm:$0xff]
    %v4307 = vld [vmem:[%s4300 + $0x30] sm:$0xff]
    %v4308 = vld [vmem:[%s4300 + $0x38] sm:$0xff]
    %v4310 = vsel %vm2321, %v4301, 0
    %v4313 = vsel %vm2321, %v4302, 0
    %v4316 = vsel %vm2321, %v4303, 0
    %v4319 = vsel %vm2321, %v4304, 0
    %v4322 = vsel %vm2321, %v4305, 0
    %v4325 = vsel %vm2321, %v4306, 0
    %v4328 = vsel %vm2321, %v4307, 0
    %v4331 = vsel %vm2321, %v4308, 0
    %4333 = vmatprep.subr.mxu0 0.0
    %4334 = vmatpush1.msra.mxu0 0.0
    %4335 = vmatprep.subr.mxu0 0.0
    %4336 = vmatpush1.msra.mxu0 0.0
    %4337 = vmatprep.subr.mxu0 0.0
    %4338 = vmatpush1.msra.mxu0 0.0
    %4339 = vmatprep.subr.mxu0 0.0
    %4340 = vmatpush1.msra.mxu0 0.0
    %4341 = vmatprep.subr.mxu0 0.0
    %4342 = vmatpush1.msra.mxu0 %v2312
    %4343 = vmatprep.subr.mxu0 0.0
    %4344 = vmatpush1.msra.mxu0 %v2311
    %4345 = vmatprep.subr.mxu0 0.0
    %4346 = vmatpush1.msra.mxu0 %v2310
    %4347 = vmatprep.subr.mxu0 0.0
    %4348 = vmatpush1.msra.mxu0 %v2309
    %4349 = vmatprep.subr.mxu0 0.0
    %4350 = vmatpush1.msra.mxu0 %v2308
    %4351 = vmatprep.subr.mxu0 0.0
    %4352 = vmatpush1.msra.mxu0 %v2307
    %4353 = vmatprep.subr.mxu0 0.0
    %4354 = vmatpush1.msra.mxu0 %v2306
    %4355 = vmatprep.subr.mxu0 0.0
    %4356 = vmatpush1.msra.mxu0 %v2305
    %4357 = vmatprep.subr.mxu0 0.0
    %4358 = vmatpush1.msra.mxu0 %v2304
    %4359 = vmatprep.subr.mxu0 0.0
    %4360 = vmatpush1.msra.mxu0 %v2303
    %4361 = vmatprep.subr.mxu0 0.0
    %4362 = vmatpush1.msra.mxu0 %v2302
    %4363 = vmatprep.subr.mxu0 0.0
    %4364 = vmatpush1.msra.mxu0 %v2301
    %4365 = vmatprep.subr.mxu0 0.0
    %4366 = vmatpush2.msra.mxu0 0.0
    %4367 = vmatprep.subr.mxu0 0.0
    %4368 = vmatpush2.msra.mxu0 0.0
    %4369 = vmatprep.subr.mxu0 0.0
    %4370 = vmatpush2.msra.mxu0 0.0
    %4371 = vmatprep.subr.mxu0 0.0
    %4372 = vmatpush2.msra.mxu0 0.0
    %4373 = vmatprep.subr.mxu0 0.0
    %4374 = vmatpush2.msra.mxu0 0.0
    %4375 = vmatprep.subr.mxu0 0.0
    %4376 = vmatpush2.msra.mxu0 0.0
    %4377 = vmatprep.subr.mxu0 0.0
    %4378 = vmatpush2.msra.mxu0 0.0
    %4379 = vmatprep.subr.mxu0 0.0
    %4380 = vmatpush2.msra.mxu0 0.0
    %4381 = vmatprep.subr.mxu0 0.0
    %4382 = vmatpush2.msra.mxu0 0.0
    %4383 = vmatprep.subr.mxu0 0.0
    %4384 = vmatpush2.msra.mxu0 0.0
    %4385 = vmatprep.subr.mxu0 0.0
    %4386 = vmatpush2.msra.mxu0 0.0
    %4387 = vmatprep.subr.mxu0 0.0
    %4388 = vmatpush2.msra.mxu0 0.0
    %4389 = vmatprep.subr.mxu0 0.0
    %4390 = vmatpush2.msra.mxu0 0.0
    %4391 = vmatprep.subr.mxu0 0.0
    %4392 = vmatpush2.msra.mxu0 0.0
    %4393 = vmatprep.subr.mxu0 0.0
    %4394 = vmatpush2.msra.mxu0 0.0
    %4395 = vmatprep.subr.mxu0 0.0
    %4396 = vmatpush2.msra.mxu0 0.0
    %4397 = vmatprep.mubr.f32.mxu0 0.0
    %4398 = vmatmul.mubr.f32.gmra.mxu0 %v4310
    %v4399 = vpop.f32.mrf.mxu0
    %v4400 = vadd.f32 0.0, %v4399
    %v4401 = vpop.f32.mrf.mxu0
    %4402 = vmatprep.mubr.f32.mxu0 0.0
    %4403 = vmatmul.mubr.f32.gmra.mxu0 %v4313
    %v4404 = vpop.f32.mrf.mxu0
    %v4405 = vadd.f32 0.0, %v4404
    %v4406 = vpop.f32.mrf.mxu0
    %4407 = vmatprep.mubr.f32.mxu0 0.0
    %4408 = vmatmul.mubr.f32.gmra.mxu0 %v4316
    %v4409 = vpop.f32.mrf.mxu0
    %v4410 = vadd.f32 0.0, %v4409
    %v4411 = vpop.f32.mrf.mxu0
    %4412 = vmatprep.mubr.f32.mxu0 0.0
    %4413 = vmatmul.mubr.f32.gmra.mxu0 %v4319
    %v4414 = vpop.f32.mrf.mxu0
    %v4415 = vadd.f32 0.0, %v4414
    %v4416 = vpop.f32.mrf.mxu0
    %4417 = vmatprep.mubr.f32.mxu0 0.0
    %4418 = vmatmul.mubr.f32.gmra.mxu0 %v4322
    %v4419 = vpop.f32.mrf.mxu0
    %v4420 = vadd.f32 0.0, %v4419
    %v4421 = vpop.f32.mrf.mxu0
    %4422 = vmatprep.mubr.f32.mxu0 0.0
    %4423 = vmatmul.mubr.f32.gmra.mxu0 %v4325
    %v4424 = vpop.f32.mrf.mxu0
    %v4425 = vadd.f32 0.0, %v4424
    %v4426 = vpop.f32.mrf.mxu0
    %4427 = vmatprep.mubr.f32.mxu0 0.0
    %4428 = vmatmul.mubr.f32.gmra.mxu0 %v4328
    %v4429 = vpop.f32.mrf.mxu0
    %v4430 = vadd.f32 0.0, %v4429
    %v4431 = vpop.f32.mrf.mxu0
    %4432 = vmatprep.mubr.f32.mxu0 0.0
    %4433 = vmatmul.mubr.f32.gmra.mxu0 %v4331
    %v4434 = vpop.f32.mrf.mxu0
    %v4435 = vadd.f32 0.0, %v4434
    %v4436 = vpop.f32.mrf.mxu0
    %4437 = vdwg.mxu0
    %v4438 = vpack.c.bf16 %v4405, %v4400
    %v4439 = vpack.c.bf16 %v4415, %v4410
    %v4440 = vpack.c.bf16 %v4425, %v4420
    %v4441 = vpack.c.bf16 %v4435, %v4430
    %s4442 = scalar_lea.vmem [#allocation7], 1024
    %v4443 = vld [vmem:[%s4442] sm:$0xff]
    %v4444 = vld [vmem:[%s4442 + $0x8] sm:$0xff]
    %v4445 = vld [vmem:[%s4442 + $0x10] sm:$0xff]
    %v4446 = vld [vmem:[%s4442 + $0x18] sm:$0xff]
    %v4447 = vld [vmem:[%s4442 + $0x20] sm:$0xff]
    %v4448 = vld [vmem:[%s4442 + $0x28] sm:$0xff]
    %v4449 = vld [vmem:[%s4442 + $0x30] sm:$0xff]
    %v4450 = vld [vmem:[%s4442 + $0x38] sm:$0xff]
    %v4451 = vld [vmem:[%s4442 + $0x40] sm:$0xff]
    %v4452 = vld [vmem:[%s4442 + $0x48] sm:$0xff]
    %v4453 = vld [vmem:[%s4442 + $0x50] sm:$0xff]
    %v4454 = vld [vmem:[%s4442 + $0x58] sm:$0xff]
    %v4455 = vld [vmem:[%s4442 + $0x60] sm:$0xff]
    %v4456 = vld [vmem:[%s4442 + $0x68] sm:$0xff]
    %v4457 = vld [vmem:[%s4442 + $0x70] sm:$0xff]
    %v4458 = vld [vmem:[%s4442 + $0x78] sm:$0xff]
    %v4459 = vld [vmem:[%s4442 + $0x80] sm:$0xff]
    %v4460 = vld [vmem:[%s4442 + $0x88] sm:$0xff]
    %v4461 = vld [vmem:[%s4442 + $0x90] sm:$0xff]
    %v4462 = vld [vmem:[%s4442 + $0x98] sm:$0xff]
    %v4463 = vld [vmem:[%s4442 + $0xa0] sm:$0xff]
    %v4464 = vld [vmem:[%s4442 + $0xa8] sm:$0xff]
    %v4465 = vld [vmem:[%s4442 + $0xb0] sm:$0xff]
    %v4466 = vld [vmem:[%s4442 + $0xb8] sm:$0xff]
    %v4467 = vld [vmem:[%s4442 + $0xc0] sm:$0xff]
    %v4468 = vld [vmem:[%s4442 + $0xc8] sm:$0xff]
    %v4469 = vld [vmem:[%s4442 + $0xd0] sm:$0xff]
    %v4470 = vld [vmem:[%s4442 + $0xd8] sm:$0xff]
    %v4471 = vld [vmem:[%s4442 + $0xe0] sm:$0xff]
    %v4472 = vld [vmem:[%s4442 + $0xe8] sm:$0xff]
    %v4473 = vld [vmem:[%s4442 + $0xf0] sm:$0xff]
    %v4474 = vld [vmem:[%s4442 + $0xf8] sm:$0xff]
    %v4507 = vunpack.c.l.b16 %v4443
    %v4508 = vunpack.c.h.b16 %v4443
    %v4509 = vunpack.c.l.b16 %v4444
    %v4510 = vunpack.c.h.b16 %v4444
    %v4511 = vunpack.c.l.b16 %v4445
    %v4512 = vunpack.c.h.b16 %v4445
    %v4513 = vunpack.c.l.b16 %v4446
    %v4514 = vunpack.c.h.b16 %v4446
    %v4515 = vunpack.c.l.b16 %v4447
    %v4516 = vunpack.c.h.b16 %v4447
    %v4517 = vunpack.c.l.b16 %v4448
    %v4518 = vunpack.c.h.b16 %v4448
    %v4519 = vunpack.c.l.b16 %v4449
    %v4520 = vunpack.c.h.b16 %v4449
    %v4521 = vunpack.c.l.b16 %v4450
    %v4522 = vunpack.c.h.b16 %v4450
    %v4523 = vunpack.c.l.b16 %v4451
    %v4524 = vunpack.c.h.b16 %v4451
    %v4525 = vunpack.c.l.b16 %v4452
    %v4526 = vunpack.c.h.b16 %v4452
    %v4527 = vunpack.c.l.b16 %v4453
    %v4528 = vunpack.c.h.b16 %v4453
    %v4529 = vunpack.c.l.b16 %v4454
    %v4530 = vunpack.c.h.b16 %v4454
    %v4531 = vunpack.c.l.b16 %v4455
    %v4532 = vunpack.c.h.b16 %v4455
    %v4533 = vunpack.c.l.b16 %v4456
    %v4534 = vunpack.c.h.b16 %v4456
    %v4535 = vunpack.c.l.b16 %v4457
    %v4536 = vunpack.c.h.b16 %v4457
    %v4537 = vunpack.c.l.b16 %v4458
    %v4538 = vunpack.c.h.b16 %v4458
    %v4539 = vunpack.c.l.b16 %v4459
    %v4540 = vunpack.c.h.b16 %v4459
    %v4541 = vunpack.c.l.b16 %v4460
    %v4542 = vunpack.c.h.b16 %v4460
    %v4543 = vunpack.c.l.b16 %v4461
    %v4544 = vunpack.c.h.b16 %v4461
    %v4545 = vunpack.c.l.b16 %v4462
    %v4546 = vunpack.c.h.b16 %v4462
    %v4547 = vunpack.c.l.b16 %v4463
    %v4548 = vunpack.c.h.b16 %v4463
    %v4549 = vunpack.c.l.b16 %v4464
    %v4550 = vunpack.c.h.b16 %v4464
    %v4551 = vunpack.c.l.b16 %v4465
    %v4552 = vunpack.c.h.b16 %v4465
    %v4553 = vunpack.c.l.b16 %v4466
    %v4554 = vunpack.c.h.b16 %v4466
    %v4555 = vunpack.c.l.b16 %v4467
    %v4556 = vunpack.c.h.b16 %v4467
    %v4557 = vunpack.c.l.b16 %v4468
    %v4558 = vunpack.c.h.b16 %v4468
    %v4559 = vunpack.c.l.b16 %v4469
    %v4560 = vunpack.c.h.b16 %v4469
    %v4561 = vunpack.c.l.b16 %v4470
    %v4562 = vunpack.c.h.b16 %v4470
    %v4563 = vunpack.c.l.b16 %v4471
    %v4564 = vunpack.c.h.b16 %v4471
    %v4565 = vunpack.c.l.b16 %v4472
    %v4566 = vunpack.c.h.b16 %v4472
    %v4567 = vunpack.c.l.b16 %v4473
    %v4568 = vunpack.c.h.b16 %v4473
    %v4569 = vunpack.c.l.b16 %v4474
    %v4570 = vunpack.c.h.b16 %v4474
    %v4571 = vpack.c.b16 %v4511, %v4507
    %v4572 = vpack.c.b16 %v4512, %v4508
    %v4573 = vpack.c.b16 %v4513, %v4509
    %v4574 = vpack.c.b16 %v4514, %v4510
    %v4575 = vpack.c.b16 %v4519, %v4515
    %v4576 = vpack.c.b16 %v4520, %v4516
    %v4577 = vpack.c.b16 %v4521, %v4517
    %v4578 = vpack.c.b16 %v4522, %v4518
    %v4579 = vpack.c.b16 %v4527, %v4523
    %v4580 = vpack.c.b16 %v4528, %v4524
    %v4581 = vpack.c.b16 %v4529, %v4525
    %v4582 = vpack.c.b16 %v4530, %v4526
    %v4583 = vpack.c.b16 %v4535, %v4531
    %v4584 = vpack.c.b16 %v4536, %v4532
    %v4585 = vpack.c.b16 %v4537, %v4533
    %v4586 = vpack.c.b16 %v4538, %v4534
    %v4587 = vpack.c.b16 %v4543, %v4539
    %v4588 = vpack.c.b16 %v4544, %v4540
    %v4589 = vpack.c.b16 %v4545, %v4541
    %v4590 = vpack.c.b16 %v4546, %v4542
    %v4591 = vpack.c.b16 %v4551, %v4547
    %v4592 = vpack.c.b16 %v4552, %v4548
    %v4593 = vpack.c.b16 %v4553, %v4549
    %v4594 = vpack.c.b16 %v4554, %v4550
    %v4595 = vpack.c.b16 %v4559, %v4555
    %v4596 = vpack.c.b16 %v4560, %v4556
    %v4597 = vpack.c.b16 %v4561, %v4557
    %v4598 = vpack.c.b16 %v4562, %v4558
    %v4599 = vpack.c.b16 %v4567, %v4563
    %v4600 = vpack.c.b16 %v4568, %v4564
    %v4601 = vpack.c.b16 %v4569, %v4565
    %v4602 = vpack.c.b16 %v4570, %v4566
    %4635 = vmatprep.subr.bf16.mxu0 %v4600
    %4636 = vmatpush1.bf16.msra.mxu0 %v4599
    %4637 = vmatprep.subr.bf16.mxu0 %v4596
    %4638 = vmatpush1.bf16.msra.mxu0 %v4595
    %4639 = vmatprep.subr.bf16.mxu0 %v4592
    %4640 = vmatpush1.bf16.msra.mxu0 %v4591
    %4641 = vmatprep.subr.bf16.mxu0 %v4588
    %4642 = vmatpush1.bf16.msra.mxu0 %v4587
    %4643 = vmatprep.subr.bf16.mxu0 %v4584
    %4644 = vmatpush1.bf16.msra.mxu0 %v4583
    %4645 = vmatprep.subr.bf16.mxu0 %v4580
    %4646 = vmatpush1.bf16.msra.mxu0 %v4579
    %4647 = vmatprep.subr.bf16.mxu0 %v4576
    %4648 = vmatpush1.bf16.msra.mxu0 %v4575
    %4649 = vmatprep.subr.bf16.mxu0 %v4572
    %4650 = vmatpush1.bf16.msra.mxu0 %v4571
    %4651 = vmatprep.subr.bf16.mxu0 0
    %4652 = vmatpush2.bf16.msra.mxu0 0
    %4653 = vmatprep.subr.bf16.mxu0 0
    %4654 = vmatpush2.bf16.msra.mxu0 0
    %4655 = vmatprep.subr.bf16.mxu0 0
    %4656 = vmatpush2.bf16.msra.mxu0 0
    %4657 = vmatprep.subr.bf16.mxu0 0
    %4658 = vmatpush2.bf16.msra.mxu0 0
    %4659 = vmatprep.subr.bf16.mxu0 0
    %4660 = vmatpush2.bf16.msra.mxu0 0
    %4661 = vmatprep.subr.bf16.mxu0 0
    %4662 = vmatpush2.bf16.msra.mxu0 0
    %4663 = vmatprep.subr.bf16.mxu0 0
    %4664 = vmatpush2.bf16.msra.mxu0 0
    %4665 = vmatprep.subr.bf16.mxu0 0
    %4666 = vmatpush2.bf16.msra.mxu0 0
    %4667 = vmatprep.mubr.bf16.mxu0 0
    %4668 = vmatmul.mubr.bf16.gmra.mxu0 %v4438
    %v4669 = vpop.f32.mrf.mxu0
    %v4670 = vadd.f32 0.0, %v4669
    %v4671 = vpop.f32.mrf.mxu0
    %v4672 = vadd.f32 0.0, %v4671
    %v4673 = vpop.f32.mrf.mxu0
    %v4674 = vadd.f32 0.0, %v4673
    %v4675 = vpop.f32.mrf.mxu0
    %v4676 = vadd.f32 0.0, %v4675
    %4677 = vmatprep.mubr.bf16.mxu0 0
    %4678 = vmatmul.mubr.bf16.gmra.mxu0 %v4439
    %v4679 = vpop.f32.mrf.mxu0
    %v4680 = vadd.f32 0.0, %v4679
    %v4681 = vpop.f32.mrf.mxu0
    %v4682 = vadd.f32 0.0, %v4681
    %v4683 = vpop.f32.mrf.mxu0
    %v4684 = vadd.f32 0.0, %v4683
    %v4685 = vpop.f32.mrf.mxu0
    %v4686 = vadd.f32 0.0, %v4685
    %4687 = vmatprep.mubr.bf16.mxu0 0
    %4688 = vmatmul.mubr.bf16.gmra.mxu0 %v4440
    %v4689 = vpop.f32.mrf.mxu0
    %v4690 = vadd.f32 0.0, %v4689
    %v4691 = vpop.f32.mrf.mxu0
    %v4692 = vadd.f32 0.0, %v4691
    %v4693 = vpop.f32.mrf.mxu0
    %v4694 = vadd.f32 0.0, %v4693
    %v4695 = vpop.f32.mrf.mxu0
    %v4696 = vadd.f32 0.0, %v4695
    %4697 = vmatprep.mubr.bf16.mxu0 0
    %4698 = vmatmul.mubr.bf16.gmra.mxu0 %v4441
    %v4699 = vpop.f32.mrf.mxu0
    %v4700 = vadd.f32 0.0, %v4699
    %v4701 = vpop.f32.mrf.mxu0
    %v4702 = vadd.f32 0.0, %v4701
    %v4703 = vpop.f32.mrf.mxu0
    %v4704 = vadd.f32 0.0, %v4703
    %v4705 = vpop.f32.mrf.mxu0
    %v4706 = vadd.f32 0.0, %v4705
    %4707 = vdwg.mxu0
    %4708 = vmatprep.subr.bf16.mxu0 %v4602
    %4709 = vmatpush1.bf16.msra.mxu0 %v4601
    %4710 = vmatprep.subr.bf16.mxu0 %v4598
    %4711 = vmatpush1.bf16.msra.mxu0 %v4597
    %4712 = vmatprep.subr.bf16.mxu0 %v4594
    %4713 = vmatpush1.bf16.msra.mxu0 %v4593
    %4714 = vmatprep.subr.bf16.mxu0 %v4590
    %4715 = vmatpush1.bf16.msra.mxu0 %v4589
    %4716 = vmatprep.subr.bf16.mxu0 %v4586
    %4717 = vmatpush1.bf16.msra.mxu0 %v4585
    %4718 = vmatprep.subr.bf16.mxu0 %v4582
    %4719 = vmatpush1.bf16.msra.mxu0 %v4581
    %4720 = vmatprep.subr.bf16.mxu0 %v4578
    %4721 = vmatpush1.bf16.msra.mxu0 %v4577
    %4722 = vmatprep.subr.bf16.mxu0 %v4574
    %4723 = vmatpush1.bf16.msra.mxu0 %v4573
    %4724 = vmatprep.subr.bf16.mxu0 0
    %4725 = vmatpush2.bf16.msra.mxu0 0
    %4726 = vmatprep.subr.bf16.mxu0 0
    %4727 = vmatpush2.bf16.msra.mxu0 0
    %4728 = vmatprep.subr.bf16.mxu0 0
    %4729 = vmatpush2.bf16.msra.mxu0 0
    %4730 = vmatprep.subr.bf16.mxu0 0
    %4731 = vmatpush2.bf16.msra.mxu0 0
    %4732 = vmatprep.subr.bf16.mxu0 0
    %4733 = vmatpush2.bf16.msra.mxu0 0
    %4734 = vmatprep.subr.bf16.mxu0 0
    %4735 = vmatpush2.bf16.msra.mxu0 0
    %4736 = vmatprep.subr.bf16.mxu0 0
    %4737 = vmatpush2.bf16.msra.mxu0 0
    %4738 = vmatprep.subr.bf16.mxu0 0
    %4739 = vmatpush2.bf16.msra.mxu0 0
    %4740 = vmatprep.mubr.bf16.mxu0 0
    %4741 = vmatmul.mubr.bf16.gmra.mxu0 %v4438
    %v4742 = vpop.f32.mrf.mxu0
    %v4743 = vadd.f32 0.0, %v4742
    %v4744 = vpop.f32.mrf.mxu0
    %v4745 = vadd.f32 0.0, %v4744
    %v4746 = vpop.f32.mrf.mxu0
    %v4747 = vadd.f32 0.0, %v4746
    %v4748 = vpop.f32.mrf.mxu0
    %v4749 = vadd.f32 0.0, %v4748
    %4750 = vmatprep.mubr.bf16.mxu0 0
    %4751 = vmatmul.mubr.bf16.gmra.mxu0 %v4439
    %v4752 = vpop.f32.mrf.mxu0
    %v4753 = vadd.f32 0.0, %v4752
    %v4754 = vpop.f32.mrf.mxu0
    %v4755 = vadd.f32 0.0, %v4754
    %v4756 = vpop.f32.mrf.mxu0
    %v4757 = vadd.f32 0.0, %v4756
    %v4758 = vpop.f32.mrf.mxu0
    %v4759 = vadd.f32 0.0, %v4758
    %4760 = vmatprep.mubr.bf16.mxu0 0
    %4761 = vmatmul.mubr.bf16.gmra.mxu0 %v4440
    %v4762 = vpop.f32.mrf.mxu0
    %v4763 = vadd.f32 0.0, %v4762
    %v4764 = vpop.f32.mrf.mxu0
    %v4765 = vadd.f32 0.0, %v4764
    %v4766 = vpop.f32.mrf.mxu0
    %v4767 = vadd.f32 0.0, %v4766
    %v4768 = vpop.f32.mrf.mxu0
    %v4769 = vadd.f32 0.0, %v4768
    %4770 = vmatprep.mubr.bf16.mxu0 0
    %4771 = vmatmul.mubr.bf16.gmra.mxu0 %v4441
    %v4772 = vpop.f32.mrf.mxu0
    %v4773 = vadd.f32 0.0, %v4772
    %v4774 = vpop.f32.mrf.mxu0
    %v4775 = vadd.f32 0.0, %v4774
    %v4776 = vpop.f32.mrf.mxu0
    %v4777 = vadd.f32 0.0, %v4776
    %v4778 = vpop.f32.mrf.mxu0
    %v4779 = vadd.f32 0.0, %v4778
    %4780 = vdwg.mxu0
    %v4781 = vadd.f32 %v4268, %v4670
    %v4782 = vadd.f32 %v4269, %v4672
    %v4783 = vadd.f32 %v4270, %v4743
    %v4784 = vadd.f32 %v4271, %v4745
    %v4785 = vadd.f32 %v4272, %v4674
    %v4786 = vadd.f32 %v4273, %v4676
    %v4787 = vadd.f32 %v4274, %v4747
    %v4788 = vadd.f32 %v4275, %v4749
    %v4789 = vadd.f32 %v4276, %v4680
    %v4790 = vadd.f32 %v4277, %v4682
    %v4791 = vadd.f32 %v4278, %v4753
    %v4792 = vadd.f32 %v4279, %v4755
    %v4793 = vadd.f32 %v4280, %v4684
    %v4794 = vadd.f32 %v4281, %v4686
    %v4795 = vadd.f32 %v4282, %v4757
    %v4796 = vadd.f32 %v4283, %v4759
    %v4797 = vadd.f32 %v4284, %v4690
    %v4798 = vadd.f32 %v4285, %v4692
    %v4799 = vadd.f32 %v4286, %v4763
    %v4800 = vadd.f32 %v4287, %v4765
    %v4801 = vadd.f32 %v4288, %v4694
    %v4802 = vadd.f32 %v4289, %v4696
    %v4803 = vadd.f32 %v4290, %v4767
    %v4804 = vadd.f32 %v4291, %v4769
    %v4805 = vadd.f32 %v4292, %v4700
    %v4806 = vadd.f32 %v4293, %v4702
    %v4807 = vadd.f32 %v4294, %v4773
    %v4808 = vadd.f32 %v4295, %v4775
    %v4809 = vadd.f32 %v4296, %v4704
    %v4810 = vadd.f32 %v4297, %v4706
    %v4811 = vadd.f32 %v4298, %v4777
    %v4812 = vadd.f32 %v4299, %v4779
    %v4813 = vld [vmem:[%s6] sm:$0xf]
    %v4815 = vlaneseq
    %v4816 = vshrl.u32 %v4815, 7
    %v4817 = vsub.s32 0, %v4816
    %v4818 = vrot.slane %v4813, %v4817
    %v4819 = vlaneseq
    %v4820 = vshrl.u32 %v4819, 7
    %v4821 = vsub.s32 1, %v4820
    %v4822 = vrot.slane %v4813, %v4821
    %v4823 = vlaneseq
    %v4824 = vshrl.u32 %v4823, 7
    %v4825 = vsub.s32 2, %v4824
    %v4826 = vrot.slane %v4813, %v4825
    %v4827 = vlaneseq
    %v4828 = vshrl.u32 %v4827, 7
    %v4829 = vsub.s32 3, %v4828
    %v4830 = vrot.slane %v4813, %v4829
    %v4835 = vadd.f32 %v4781, %v4818
    %v4836 = vadd.f32 %v4782, %v4822
    %v4837 = vadd.f32 %v4783, %v4826
    %v4838 = vadd.f32 %v4784, %v4830
    %v4839 = vadd.f32 %v4785, %v4818
    %v4840 = vadd.f32 %v4786, %v4822
    %v4841 = vadd.f32 %v4787, %v4826
    %v4842 = vadd.f32 %v4788, %v4830
    %v4843 = vadd.f32 %v4789, %v4818
    %v4844 = vadd.f32 %v4790, %v4822
    %v4845 = vadd.f32 %v4791, %v4826
    %v4846 = vadd.f32 %v4792, %v4830
    %v4847 = vadd.f32 %v4793, %v4818
    %v4848 = vadd.f32 %v4794, %v4822
    %v4849 = vadd.f32 %v4795, %v4826
    %v4850 = vadd.f32 %v4796, %v4830
    %v4851 = vadd.f32 %v4797, %v4818
    %v4852 = vadd.f32 %v4798, %v4822
    %v4853 = vadd.f32 %v4799, %v4826
    %v4854 = vadd.f32 %v4800, %v4830
    %v4855 = vadd.f32 %v4801, %v4818
    %v4856 = vadd.f32 %v4802, %v4822
    %v4857 = vadd.f32 %v4803, %v4826
    %v4858 = vadd.f32 %v4804, %v4830
    %v4859 = vadd.f32 %v4805, %v4818
    %v4860 = vadd.f32 %v4806, %v4822
    %v4861 = vadd.f32 %v4807, %v4826
    %v4862 = vadd.f32 %v4808, %v4830
    %v4863 = vadd.f32 %v4809, %v4818
    %v4864 = vadd.f32 %v4810, %v4822
    %v4865 = vadd.f32 %v4811, %v4826
    %v4866 = vadd.f32 %v4812, %v4830
    %v4867 = vld [vmem:[#allocation9] sm:$0xff]
    %v4868 = vld [vmem:[#allocation9 + $0x8] sm:$0xff]
    %v4869 = vld [vmem:[#allocation9 + $0x10] sm:$0xff]
    %v4870 = vld [vmem:[#allocation9 + $0x18] sm:$0xff]
    %v4872 = vsel %vm1893, %v4867, 0
    %v4875 = vsel %vm1893, %v4868, 0
    %v4878 = vsel %vm1893, %v4869, 0
    %v4881 = vsel %vm1893, %v4870, 0
    %4883 = vmatprep.subr.mxu0 0.0
    %4884 = vmatpush1.msra.mxu0 0.0
    %4885 = vmatprep.subr.mxu0 0.0
    %4886 = vmatpush1.msra.mxu0 0.0
    %4887 = vmatprep.subr.mxu0 0.0
    %4888 = vmatpush1.msra.mxu0 0.0
    %4889 = vmatprep.subr.mxu0 0.0
    %4890 = vmatpush1.msra.mxu0 0.0
    %4891 = vmatprep.subr.mxu0 0.0
    %4892 = vmatpush1.msra.mxu0 0.0
    %4893 = vmatprep.subr.mxu0 0.0
    %4894 = vmatpush1.msra.mxu0 0.0
    %4895 = vmatprep.subr.mxu0 0.0
    %4896 = vmatpush1.msra.mxu0 0.0
    %4897 = vmatprep.subr.mxu0 0.0
    %4898 = vmatpush1.msra.mxu0 0.0
    %4899 = vmatprep.subr.mxu0 %v4864
    %4900 = vmatpush1.msra.mxu0 %v4863
    %4901 = vmatprep.subr.mxu0 %v4860
    %4902 = vmatpush1.msra.mxu0 %v4859
    %4903 = vmatprep.subr.mxu0 %v4856
    %4904 = vmatpush1.msra.mxu0 %v4855
    %4905 = vmatprep.subr.mxu0 %v4852
    %4906 = vmatpush1.msra.mxu0 %v4851
    %4907 = vmatprep.subr.mxu0 %v4848
    %4908 = vmatpush1.msra.mxu0 %v4847
    %4909 = vmatprep.subr.mxu0 %v4844
    %4910 = vmatpush1.msra.mxu0 %v4843
    %4911 = vmatprep.subr.mxu0 %v4840
    %4912 = vmatpush1.msra.mxu0 %v4839
    %4913 = vmatprep.subr.mxu0 %v4836
    %4914 = vmatpush1.msra.mxu0 %v4835
    %4915 = vmatprep.subr.mxu0 0.0
    %4916 = vmatpush2.msra.mxu0 0.0
    %4917 = vmatprep.subr.mxu0 0.0
    %4918 = vmatpush2.msra.mxu0 0.0
    %4919 = vmatprep.subr.mxu0 0.0
    %4920 = vmatpush2.msra.mxu0 0.0
    %4921 = vmatprep.subr.mxu0 0.0
    %4922 = vmatpush2.msra.mxu0 0.0
    %4923 = vmatprep.subr.mxu0 0.0
    %4924 = vmatpush2.msra.mxu0 0.0
    %4925 = vmatprep.subr.mxu0 0.0
    %4926 = vmatpush2.msra.mxu0 0.0
    %4927 = vmatprep.subr.mxu0 0.0
    %4928 = vmatpush2.msra.mxu0 0.0
    %4929 = vmatprep.subr.mxu0 0.0
    %4930 = vmatpush2.msra.mxu0 0.0
    %4931 = vmatprep.subr.mxu0 0.0
    %4932 = vmatpush2.msra.mxu0 0.0
    %4933 = vmatprep.subr.mxu0 0.0
    %4934 = vmatpush2.msra.mxu0 0.0
    %4935 = vmatprep.subr.mxu0 0.0
    %4936 = vmatpush2.msra.mxu0 0.0
    %4937 = vmatprep.subr.mxu0 0.0
    %4938 = vmatpush2.msra.mxu0 0.0
    %4939 = vmatprep.subr.mxu0 0.0
    %4940 = vmatpush2.msra.mxu0 0.0
    %4941 = vmatprep.subr.mxu0 0.0
    %4942 = vmatpush2.msra.mxu0 0.0
    %4943 = vmatprep.subr.mxu0 0.0
    %4944 = vmatpush2.msra.mxu0 0.0
    %4945 = vmatprep.subr.mxu0 0.0
    %4946 = vmatpush2.msra.mxu0 0.0
    %4947 = vmatprep.mubr.f32.mxu0 0.0
    %4948 = vmatmul.mubr.f32.gmra.mxu0 %v4872
    %v4949 = vpop.f32.mrf.mxu0
    %v4950 = vadd.f32 0.0, %v4949
    %v4951 = vpop.f32.mrf.mxu0
    %v4952 = vadd.f32 0.0, %v4951
    %4953 = vmatprep.mubr.f32.mxu0 0.0
    %4954 = vmatmul.mubr.f32.gmra.mxu0 %v4875
    %v4955 = vpop.f32.mrf.mxu0
    %v4956 = vadd.f32 0.0, %v4955
    %v4957 = vpop.f32.mrf.mxu0
    %v4958 = vadd.f32 0.0, %v4957
    %4959 = vmatprep.mubr.f32.mxu0 0.0
    %4960 = vmatmul.mubr.f32.gmra.mxu0 %v4878
    %v4961 = vpop.f32.mrf.mxu0
    %v4962 = vadd.f32 0.0, %v4961
    %v4963 = vpop.f32.mrf.mxu0
    %v4964 = vadd.f32 0.0, %v4963
    %4965 = vmatprep.mubr.f32.mxu0 0.0
    %4966 = vmatmul.mubr.f32.gmra.mxu0 %v4881
    %v4967 = vpop.f32.mrf.mxu0
    %v4968 = vadd.f32 0.0, %v4967
    %v4969 = vpop.f32.mrf.mxu0
    %v4970 = vadd.f32 0.0, %v4969
    %4971 = vdwg.mxu0
    %4972 = vmatprep.subr.mxu0 0.0
    %4973 = vmatpush1.msra.mxu0 0.0
    %4974 = vmatprep.subr.mxu0 0.0
    %4975 = vmatpush1.msra.mxu0 0.0
    %4976 = vmatprep.subr.mxu0 0.0
    %4977 = vmatpush1.msra.mxu0 0.0
    %4978 = vmatprep.subr.mxu0 0.0
    %4979 = vmatpush1.msra.mxu0 0.0
    %4980 = vmatprep.subr.mxu0 0.0
    %4981 = vmatpush1.msra.mxu0 0.0
    %4982 = vmatprep.subr.mxu0 0.0
    %4983 = vmatpush1.msra.mxu0 0.0
    %4984 = vmatprep.subr.mxu0 0.0
    %4985 = vmatpush1.msra.mxu0 0.0
    %4986 = vmatprep.subr.mxu0 0.0
    %4987 = vmatpush1.msra.mxu0 0.0
    %4988 = vmatprep.subr.mxu0 %v4866
    %4989 = vmatpush1.msra.mxu0 %v4865
    %4990 = vmatprep.subr.mxu0 %v4862
    %4991 = vmatpush1.msra.mxu0 %v4861
    %4992 = vmatprep.subr.mxu0 %v4858
    %4993 = vmatpush1.msra.mxu0 %v4857
    %4994 = vmatprep.subr.mxu0 %v4854
    %4995 = vmatpush1.msra.mxu0 %v4853
    %4996 = vmatprep.subr.mxu0 %v4850
    %4997 = vmatpush1.msra.mxu0 %v4849
    %4998 = vmatprep.subr.mxu0 %v4846
    %4999 = vmatpush1.msra.mxu0 %v4845
    %5000 = vmatprep.subr.mxu0 %v4842
    %5001 = vmatpush1.msra.mxu0 %v4841
    %5002 = vmatprep.subr.mxu0 %v4838
    %5003 = vmatpush1.msra.mxu0 %v4837
    %5004 = vmatprep.subr.mxu0 0.0
    %5005 = vmatpush2.msra.mxu0 0.0
    %5006 = vmatprep.subr.mxu0 0.0
    %5007 = vmatpush2.msra.mxu0 0.0
    %5008 = vmatprep.subr.mxu0 0.0
    %5009 = vmatpush2.msra.mxu0 0.0
    %5010 = vmatprep.subr.mxu0 0.0
    %5011 = vmatpush2.msra.mxu0 0.0
    %5012 = vmatprep.subr.mxu0 0.0
    %5013 = vmatpush2.msra.mxu0 0.0
    %5014 = vmatprep.subr.mxu0 0.0
    %5015 = vmatpush2.msra.mxu0 0.0
    %5016 = vmatprep.subr.mxu0 0.0
    %5017 = vmatpush2.msra.mxu0 0.0
    %5018 = vmatprep.subr.mxu0 0.0
    %5019 = vmatpush2.msra.mxu0 0.0
    %5020 = vmatprep.subr.mxu0 0.0
    %5021 = vmatpush2.msra.mxu0 0.0
    %5022 = vmatprep.subr.mxu0 0.0
    %5023 = vmatpush2.msra.mxu0 0.0
    %5024 = vmatprep.subr.mxu0 0.0
    %5025 = vmatpush2.msra.mxu0 0.0
    %5026 = vmatprep.subr.mxu0 0.0
    %5027 = vmatpush2.msra.mxu0 0.0
    %5028 = vmatprep.subr.mxu0 0.0
    %5029 = vmatpush2.msra.mxu0 0.0
    %5030 = vmatprep.subr.mxu0 0.0
    %5031 = vmatpush2.msra.mxu0 0.0
    %5032 = vmatprep.subr.mxu0 0.0
    %5033 = vmatpush2.msra.mxu0 0.0
    %5034 = vmatprep.subr.mxu0 0.0
    %5035 = vmatpush2.msra.mxu0 0.0
    %5036 = vmatprep.mubr.f32.mxu0 0.0
    %5037 = vmatmul.mubr.f32.gmra.mxu0 %v4872
    %v5038 = vpop.f32.mrf.mxu0
    %v5039 = vadd.f32 0.0, %v5038
    %v5040 = vpop.f32.mrf.mxu0
    %v5041 = vadd.f32 0.0, %v5040
    %5042 = vmatprep.mubr.f32.mxu0 0.0
    %5043 = vmatmul.mubr.f32.gmra.mxu0 %v4875
    %v5044 = vpop.f32.mrf.mxu0
    %v5045 = vadd.f32 0.0, %v5044
    %v5046 = vpop.f32.mrf.mxu0
    %v5047 = vadd.f32 0.0, %v5046
    %5048 = vmatprep.mubr.f32.mxu0 0.0
    %5049 = vmatmul.mubr.f32.gmra.mxu0 %v4878
    %v5050 = vpop.f32.mrf.mxu0
    %v5051 = vadd.f32 0.0, %v5050
    %v5052 = vpop.f32.mrf.mxu0
    %v5053 = vadd.f32 0.0, %v5052
    %5054 = vmatprep.mubr.f32.mxu0 0.0
    %5055 = vmatmul.mubr.f32.gmra.mxu0 %v4881
    %v5056 = vpop.f32.mrf.mxu0
    %v5057 = vadd.f32 0.0, %v5056
    %v5058 = vpop.f32.mrf.mxu0
    %v5059 = vadd.f32 0.0, %v5058
    %5060 = vdwg.mxu0
    %s5061 = scalar_lea.vmem [#allocation9], 32
    %v5062 = vld [vmem:[%s5061] sm:$0xff]
    %v5063 = vld [vmem:[%s5061 + $0x8] sm:$0xff]
    %v5064 = vld [vmem:[%s5061 + $0x10] sm:$0xff]
    %v5065 = vld [vmem:[%s5061 + $0x18] sm:$0xff]
    %v5067 = vsel %vm1893, %v5062, 0
    %v5070 = vsel %vm1893, %v5063, 0
    %v5073 = vsel %vm1893, %v5064, 0
    %v5076 = vsel %vm1893, %v5065, 0
    %5078 = vmatprep.subr.mxu0 0.0
    %5079 = vmatpush1.msra.mxu0 0.0
    %5080 = vmatprep.subr.mxu0 0.0
    %5081 = vmatpush1.msra.mxu0 0.0
    %5082 = vmatprep.subr.mxu0 0.0
    %5083 = vmatpush1.msra.mxu0 0.0
    %5084 = vmatprep.subr.mxu0 0.0
    %5085 = vmatpush1.msra.mxu0 0.0
    %5086 = vmatprep.subr.mxu0 0.0
    %5087 = vmatpush1.msra.mxu0 0.0
    %5088 = vmatprep.subr.mxu0 0.0
    %5089 = vmatpush1.msra.mxu0 0.0
    %5090 = vmatprep.subr.mxu0 0.0
    %5091 = vmatpush1.msra.mxu0 0.0
    %5092 = vmatprep.subr.mxu0 0.0
    %5093 = vmatpush1.msra.mxu0 0.0
    %5094 = vmatprep.subr.mxu0 %v4864
    %5095 = vmatpush1.msra.mxu0 %v4863
    %5096 = vmatprep.subr.mxu0 %v4860
    %5097 = vmatpush1.msra.mxu0 %v4859
    %5098 = vmatprep.subr.mxu0 %v4856
    %5099 = vmatpush1.msra.mxu0 %v4855
    %5100 = vmatprep.subr.mxu0 %v4852
    %5101 = vmatpush1.msra.mxu0 %v4851
    %5102 = vmatprep.subr.mxu0 %v4848
    %5103 = vmatpush1.msra.mxu0 %v4847
    %5104 = vmatprep.subr.mxu0 %v4844
    %5105 = vmatpush1.msra.mxu0 %v4843
    %5106 = vmatprep.subr.mxu0 %v4840
    %5107 = vmatpush1.msra.mxu0 %v4839
    %5108 = vmatprep.subr.mxu0 %v4836
    %5109 = vmatpush1.msra.mxu0 %v4835
    %5110 = vmatprep.subr.mxu0 0.0
    %5111 = vmatpush2.msra.mxu0 0.0
    %5112 = vmatprep.subr.mxu0 0.0
    %5113 = vmatpush2.msra.mxu0 0.0
    %5114 = vmatprep.subr.mxu0 0.0
    %5115 = vmatpush2.msra.mxu0 0.0
    %5116 = vmatprep.subr.mxu0 0.0
    %5117 = vmatpush2.msra.mxu0 0.0
    %5118 = vmatprep.subr.mxu0 0.0
    %5119 = vmatpush2.msra.mxu0 0.0
    %5120 = vmatprep.subr.mxu0 0.0
    %5121 = vmatpush2.msra.mxu0 0.0
    %5122 = vmatprep.subr.mxu0 0.0
    %5123 = vmatpush2.msra.mxu0 0.0
    %5124 = vmatprep.subr.mxu0 0.0
    %5125 = vmatpush2.msra.mxu0 0.0
    %5126 = vmatprep.subr.mxu0 0.0
    %5127 = vmatpush2.msra.mxu0 0.0
    %5128 = vmatprep.subr.mxu0 0.0
    %5129 = vmatpush2.msra.mxu0 0.0
    %5130 = vmatprep.subr.mxu0 0.0
    %5131 = vmatpush2.msra.mxu0 0.0
    %5132 = vmatprep.subr.mxu0 0.0
    %5133 = vmatpush2.msra.mxu0 0.0
    %5134 = vmatprep.subr.mxu0 0.0
    %5135 = vmatpush2.msra.mxu0 0.0
    %5136 = vmatprep.subr.mxu0 0.0
    %5137 = vmatpush2.msra.mxu0 0.0
    %5138 = vmatprep.subr.mxu0 0.0
    %5139 = vmatpush2.msra.mxu0 0.0
    %5140 = vmatprep.subr.mxu0 0.0
    %5141 = vmatpush2.msra.mxu0 0.0
    %5142 = vmatprep.mubr.f32.mxu0 0.0
    %5143 = vmatmul.mubr.f32.gmra.mxu0 %v5067
    %v5144 = vpop.f32.mrf.mxu0
    %v5145 = vadd.f32 0.0, %v5144
    %v5146 = vpop.f32.mrf.mxu0
    %v5147 = vadd.f32 0.0, %v5146
    %5148 = vmatprep.mubr.f32.mxu0 0.0
    %5149 = vmatmul.mubr.f32.gmra.mxu0 %v5070
    %v5150 = vpop.f32.mrf.mxu0
    %v5151 = vadd.f32 0.0, %v5150
    %v5152 = vpop.f32.mrf.mxu0
    %v5153 = vadd.f32 0.0, %v5152
    %5154 = vmatprep.mubr.f32.mxu0 0.0
    %5155 = vmatmul.mubr.f32.gmra.mxu0 %v5073
    %v5156 = vpop.f32.mrf.mxu0
    %v5157 = vadd.f32 0.0, %v5156
    %v5158 = vpop.f32.mrf.mxu0
    %v5159 = vadd.f32 0.0, %v5158
    %5160 = vmatprep.mubr.f32.mxu0 0.0
    %5161 = vmatmul.mubr.f32.gmra.mxu0 %v5076
    %v5162 = vpop.f32.mrf.mxu0
    %v5163 = vadd.f32 0.0, %v5162
    %v5164 = vpop.f32.mrf.mxu0
    %v5165 = vadd.f32 0.0, %v5164
    %5166 = vdwg.mxu0
    %5167 = vmatprep.subr.mxu0 0.0
    %5168 = vmatpush1.msra.mxu0 0.0
    %5169 = vmatprep.subr.mxu0 0.0
    %5170 = vmatpush1.msra.mxu0 0.0
    %5171 = vmatprep.subr.mxu0 0.0
    %5172 = vmatpush1.msra.mxu0 0.0
    %5173 = vmatprep.subr.mxu0 0.0
    %5174 = vmatpush1.msra.mxu0 0.0
    %5175 = vmatprep.subr.mxu0 0.0
    %5176 = vmatpush1.msra.mxu0 0.0
    %5177 = vmatprep.subr.mxu0 0.0
    %5178 = vmatpush1.msra.mxu0 0.0
    %5179 = vmatprep.subr.mxu0 0.0
    %5180 = vmatpush1.msra.mxu0 0.0
    %5181 = vmatprep.subr.mxu0 0.0
    %5182 = vmatpush1.msra.mxu0 0.0
    %5183 = vmatprep.subr.mxu0 %v4866
    %5184 = vmatpush1.msra.mxu0 %v4865
    %5185 = vmatprep.subr.mxu0 %v4862
    %5186 = vmatpush1.msra.mxu0 %v4861
    %5187 = vmatprep.subr.mxu0 %v4858
    %5188 = vmatpush1.msra.mxu0 %v4857
    %5189 = vmatprep.subr.mxu0 %v4854
    %5190 = vmatpush1.msra.mxu0 %v4853
    %5191 = vmatprep.subr.mxu0 %v4850
    %5192 = vmatpush1.msra.mxu0 %v4849
    %5193 = vmatprep.subr.mxu0 %v4846
    %5194 = vmatpush1.msra.mxu0 %v4845
    %5195 = vmatprep.subr.mxu0 %v4842
    %5196 = vmatpush1.msra.mxu0 %v4841
    %5197 = vmatprep.subr.mxu0 %v4838
    %5198 = vmatpush1.msra.mxu0 %v4837
    %5199 = vmatprep.subr.mxu0 0.0
    %5200 = vmatpush2.msra.mxu0 0.0
    %5201 = vmatprep.subr.mxu0 0.0
    %5202 = vmatpush2.msra.mxu0 0.0
    %5203 = vmatprep.subr.mxu0 0.0
    %5204 = vmatpush2.msra.mxu0 0.0
    %5205 = vmatprep.subr.mxu0 0.0
    %5206 = vmatpush2.msra.mxu0 0.0
    %5207 = vmatprep.subr.mxu0 0.0
    %5208 = vmatpush2.msra.mxu0 0.0
    %5209 = vmatprep.subr.mxu0 0.0
    %5210 = vmatpush2.msra.mxu0 0.0
    %5211 = vmatprep.subr.mxu0 0.0
    %5212 = vmatpush2.msra.mxu0 0.0
    %5213 = vmatprep.subr.mxu0 0.0
    %5214 = vmatpush2.msra.mxu0 0.0
    %5215 = vmatprep.subr.mxu0 0.0
    %5216 = vmatpush2.msra.mxu0 0.0
    %5217 = vmatprep.subr.mxu0 0.0
    %5218 = vmatpush2.msra.mxu0 0.0
    %5219 = vmatprep.subr.mxu0 0.0
    %5220 = vmatpush2.msra.mxu0 0.0
    %5221 = vmatprep.subr.mxu0 0.0
    %5222 = vmatpush2.msra.mxu0 0.0
    %5223 = vmatprep.subr.mxu0 0.0
    %5224 = vmatpush2.msra.mxu0 0.0
    %5225 = vmatprep.subr.mxu0 0.0
    %5226 = vmatpush2.msra.mxu0 0.0
    %5227 = vmatprep.subr.mxu0 0.0
    %5228 = vmatpush2.msra.mxu0 0.0
    %5229 = vmatprep.subr.mxu0 0.0
    %5230 = vmatpush2.msra.mxu0 0.0
    %5231 = vmatprep.mubr.f32.mxu0 0.0
    %5232 = vmatmul.mubr.f32.gmra.mxu0 %v5067
    %v5233 = vpop.f32.mrf.mxu0
    %v5234 = vadd.f32 0.0, %v5233
    %v5235 = vpop.f32.mrf.mxu0
    %v5236 = vadd.f32 0.0, %v5235
    %5237 = vmatprep.mubr.f32.mxu0 0.0
    %5238 = vmatmul.mubr.f32.gmra.mxu0 %v5070
    %v5239 = vpop.f32.mrf.mxu0
    %v5240 = vadd.f32 0.0, %v5239
    %v5241 = vpop.f32.mrf.mxu0
    %v5242 = vadd.f32 0.0, %v5241
    %5243 = vmatprep.mubr.f32.mxu0 0.0
    %5244 = vmatmul.mubr.f32.gmra.mxu0 %v5073
    %v5245 = vpop.f32.mrf.mxu0
    %v5246 = vadd.f32 0.0, %v5245
    %v5247 = vpop.f32.mrf.mxu0
    %v5248 = vadd.f32 0.0, %v5247
    %5249 = vmatprep.mubr.f32.mxu0 0.0
    %5250 = vmatmul.mubr.f32.gmra.mxu0 %v5076
    %v5251 = vpop.f32.mrf.mxu0
    %v5252 = vadd.f32 0.0, %v5251
    %v5253 = vpop.f32.mrf.mxu0
    %v5254 = vadd.f32 0.0, %v5253
    %5255 = vdwg.mxu0
    %v5256 = vmax.f32 %v4950, %v5145
    %v5257 = vmax.f32 %v4952, %v5147
    %v5258 = vmax.f32 %v5039, %v5234
    %v5259 = vmax.f32 %v5041, %v5236
    %v5260 = vmax.f32 %v4956, %v5151
    %v5261 = vmax.f32 %v4958, %v5153
    %v5262 = vmax.f32 %v5045, %v5240
    %v5263 = vmax.f32 %v5047, %v5242
    %v5264 = vmax.f32 %v4962, %v5157
    %v5265 = vmax.f32 %v4964, %v5159
    %v5266 = vmax.f32 %v5051, %v5246
    %v5267 = vmax.f32 %v5053, %v5248
    %v5268 = vmax.f32 %v4968, %v5163
    %v5269 = vmax.f32 %v4970, %v5165
    %v5270 = vmax.f32 %v5057, %v5252
    %v5271 = vmax.f32 %v5059, %v5254
    %v5272 = vmax.f32 %v5256, %v5258
    %v5273 = vmax.f32 %v5257, %v5259
    %v5274 = vmax.f32 %v5260, %v5262
    %v5275 = vmax.f32 %v5261, %v5263
    %v5276 = vmax.f32 %v5264, %v5266
    %v5277 = vmax.f32 %v5265, %v5267
    %v5278 = vmax.f32 %v5268, %v5270
    %v5279 = vmax.f32 %v5269, %v5271
    %v5280 = vmax.f32 %v5272, 0.0
    %v5281 = vmax.f32 %v5273, 0.0
    %v5282 = vmax.f32 %v5274, 0.0
    %v5283 = vmax.f32 %v5275, 0.0
    %v5284 = vmax.f32 %v5276, 0.0
    %v5285 = vmax.f32 %v5277, 0.0
    %v5286 = vmax.f32 %v5278, 0.0
    %v5287 = vmax.f32 %v5279, 0.0
    %v5288 = vld [vmem:[%s8] sm:$0xff]
    %vm5289 = vcmask 261120
    %v5291 = vsel %vm5289, %v5288, 0
    %5293 = vmatprep.subr.mxu0 0.0
    %5294 = vmatpush1.msra.mxu0 0.0
    %5295 = vmatprep.subr.mxu0 0.0
    %5296 = vmatpush1.msra.mxu0 0.0
    %5297 = vmatprep.subr.mxu0 0.0
    %5298 = vmatpush1.msra.mxu0 0.0
    %5299 = vmatprep.subr.mxu0 0.0
    %5300 = vmatpush1.msra.mxu0 0.0
    %5301 = vmatprep.subr.mxu0 0.0
    %5302 = vmatpush1.msra.mxu0 0.0
    %5303 = vmatprep.subr.mxu0 0.0
    %5304 = vmatpush1.msra.mxu0 0.0
    %5305 = vmatprep.subr.mxu0 0.0
    %5306 = vmatpush1.msra.mxu0 0.0
    %5307 = vmatprep.subr.mxu0 0.0
    %5308 = vmatpush1.msra.mxu0 0.0
    %5309 = vmatprep.subr.mxu0 0.0
    %5310 = vmatpush1.msra.mxu0 0.0
    %5311 = vmatprep.subr.mxu0 0.0
    %5312 = vmatpush1.msra.mxu0 0.0
    %5313 = vmatprep.subr.mxu0 0.0
    %5314 = vmatpush1.msra.mxu0 0.0
    %5315 = vmatprep.subr.mxu0 0.0
    %5316 = vmatpush1.msra.mxu0 0.0
    %5317 = vmatprep.subr.mxu0 %v5287
    %5318 = vmatpush1.msra.mxu0 %v5286
    %5319 = vmatprep.subr.mxu0 %v5285
    %5320 = vmatpush1.msra.mxu0 %v5284
    %5321 = vmatprep.subr.mxu0 %v5283
    %5322 = vmatpush1.msra.mxu0 %v5282
    %5323 = vmatprep.subr.mxu0 %v5281
    %5324 = vmatpush1.msra.mxu0 %v5280
    %5325 = vmatprep.subr.mxu0 0.0
    %5326 = vmatpush2.msra.mxu0 0.0
    %5327 = vmatprep.subr.mxu0 0.0
    %5328 = vmatpush2.msra.mxu0 0.0
    %5329 = vmatprep.subr.mxu0 0.0
    %5330 = vmatpush2.msra.mxu0 0.0
    %5331 = vmatprep.subr.mxu0 0.0
    %5332 = vmatpush2.msra.mxu0 0.0
    %5333 = vmatprep.subr.mxu0 0.0
    %5334 = vmatpush2.msra.mxu0 0.0
    %5335 = vmatprep.subr.mxu0 0.0
    %5336 = vmatpush2.msra.mxu0 0.0
    %5337 = vmatprep.subr.mxu0 0.0
    %5338 = vmatpush2.msra.mxu0 0.0
    %5339 = vmatprep.subr.mxu0 0.0
    %5340 = vmatpush2.msra.mxu0 0.0
    %5341 = vmatprep.subr.mxu0 0.0
    %5342 = vmatpush2.msra.mxu0 0.0
    %5343 = vmatprep.subr.mxu0 0.0
    %5344 = vmatpush2.msra.mxu0 0.0
    %5345 = vmatprep.subr.mxu0 0.0
    %5346 = vmatpush2.msra.mxu0 0.0
    %5347 = vmatprep.subr.mxu0 0.0
    %5348 = vmatpush2.msra.mxu0 0.0
    %5349 = vmatprep.subr.mxu0 0.0
    %5350 = vmatpush2.msra.mxu0 0.0
    %5351 = vmatprep.subr.mxu0 0.0
    %5352 = vmatpush2.msra.mxu0 0.0
    %5353 = vmatprep.subr.mxu0 0.0
    %5354 = vmatpush2.msra.mxu0 0.0
    %5355 = vmatprep.subr.mxu0 0.0
    %5356 = vmatpush2.msra.mxu0 0.0
    %5357 = vmatprep.mubr.f32.mxu0 0.0
    %5358 = vmatmul.mubr.f32.gmra.mxu0 %v5291
    %v5359 = vpop.f32.mrf.mxu0
    %v5360 = vadd.f32 0.0, %v5359
    %v5361 = vpop.f32.mrf.mxu0
    %v5362 = vadd.f32 0.0, %v5361
    %5363 = vdwg.mxu0
    %v5364 = vpack.c.bf16 %v5360, %v5360
    %v5365 = vpack.c.bf16 %v5362, %v5362
    %v5366 = vld [vmem:[%s9] sm:$0xf]
    %v5367 = vld [vmem:[%s9 + $0x4] sm:$0xf]
    %v5368 = vld [vmem:[%s9 + $0x8] sm:$0xf]
    %v5369 = vld [vmem:[%s9 + $0xc] sm:$0xf]
    %v5370 = vld [vmem:[%s9 + $0x10] sm:$0xf]
    %v5371 = vld [vmem:[%s9 + $0x14] sm:$0xf]
    %v5372 = vld [vmem:[%s9 + $0x18] sm:$0xf]
    %v5373 = vld [vmem:[%s9 + $0x1c] sm:$0xf]
    %v5374 = vld [vmem:[%s9 + $0x20] sm:$0xf]
    %v5375 = vld [vmem:[%s9 + $0x24] sm:$0xf]
    %v5376 = vld [vmem:[%s9 + $0x28] sm:$0xf]
    %v5377 = vld [vmem:[%s9 + $0x2c] sm:$0xf]
    %v5378 = vld [vmem:[%s9 + $0x30] sm:$0xf]
    %v5379 = vld [vmem:[%s9 + $0x34] sm:$0xf]
    %v5380 = vld [vmem:[%s9 + $0x38] sm:$0xf]
    %v5381 = vld [vmem:[%s9 + $0x3c] sm:$0xf]
    %v5382 = vld [vmem:[%s9 + $0x40] sm:$0xf]
    %v5383 = vld [vmem:[%s9 + $0x44] sm:$0xf]
    %v5384 = vld [vmem:[%s9 + $0x48] sm:$0xf]
    %v5385 = vld [vmem:[%s9 + $0x4c] sm:$0xf]
    %v5386 = vld [vmem:[%s9 + $0x50] sm:$0xf]
    %v5387 = vld [vmem:[%s9 + $0x54] sm:$0xf]
    %v5388 = vld [vmem:[%s9 + $0x58] sm:$0xf]
    %v5389 = vld [vmem:[%s9 + $0x5c] sm:$0xf]
    %v5390 = vld [vmem:[%s9 + $0x60] sm:$0xf]
    %v5391 = vld [vmem:[%s9 + $0x64] sm:$0xf]
    %v5392 = vld [vmem:[%s9 + $0x68] sm:$0xf]
    %v5393 = vld [vmem:[%s9 + $0x6c] sm:$0xf]
    %v5394 = vld [vmem:[%s9 + $0x70] sm:$0xf]
    %v5395 = vld [vmem:[%s9 + $0x74] sm:$0xf]
    %v5396 = vld [vmem:[%s9 + $0x78] sm:$0xf]
    %v5397 = vld [vmem:[%s9 + $0x7c] sm:$0xf]
    %s5398 = scalar_lea.vmem %s8, 8
    %v5399 = vld [vmem:[%s5398] sm:$0xff]
    %v5401 = vsel %vm5289, %v5399, 0
    %5403 = vmatprep.subr.mxu0 0.0
    %5404 = vmatpush1.msra.mxu0 0.0
    %5405 = vmatprep.subr.mxu0 0.0
    %5406 = vmatpush1.msra.mxu0 0.0
    %5407 = vmatprep.subr.mxu0 0.0
    %5408 = vmatpush1.msra.mxu0 0.0
    %5409 = vmatprep.subr.mxu0 0.0
    %5410 = vmatpush1.msra.mxu0 0.0
    %5411 = vmatprep.subr.mxu0 0.0
    %5412 = vmatpush1.msra.mxu0 0.0
    %5413 = vmatprep.subr.mxu0 0.0
    %5414 = vmatpush1.msra.mxu0 0.0
    %5415 = vmatprep.subr.mxu0 0.0
    %5416 = vmatpush1.msra.mxu0 0.0
    %5417 = vmatprep.subr.mxu0 0.0
    %5418 = vmatpush1.msra.mxu0 0.0
    %5419 = vmatprep.subr.mxu0 0.0
    %5420 = vmatpush1.msra.mxu0 0.0
    %5421 = vmatprep.subr.mxu0 0.0
    %5422 = vmatpush1.msra.mxu0 0.0
    %5423 = vmatprep.subr.mxu0 0.0
    %5424 = vmatpush1.msra.mxu0 0.0
    %5425 = vmatprep.subr.mxu0 0.0
    %5426 = vmatpush1.msra.mxu0 0.0
    %5427 = vmatprep.subr.mxu0 %v5287
    %5428 = vmatpush1.msra.mxu0 %v5286
    %5429 = vmatprep.subr.mxu0 %v5285
    %5430 = vmatpush1.msra.mxu0 %v5284
    %5431 = vmatprep.subr.mxu0 %v5283
    %5432 = vmatpush1.msra.mxu0 %v5282
    %5433 = vmatprep.subr.mxu0 %v5281
    %5434 = vmatpush1.msra.mxu0 %v5280
    %5435 = vmatprep.subr.mxu0 0.0
    %5436 = vmatpush2.msra.mxu0 0.0
    %5437 = vmatprep.subr.mxu0 0.0
    %5438 = vmatpush2.msra.mxu0 0.0
    %5439 = vmatprep.subr.mxu0 0.0
    %5440 = vmatpush2.msra.mxu0 0.0
    %5441 = vmatprep.subr.mxu0 0.0
    %5442 = vmatpush2.msra.mxu0 0.0
    %5443 = vmatprep.subr.mxu0 0.0
    %5444 = vmatpush2.msra.mxu0 0.0
    %5445 = vmatprep.subr.mxu0 0.0
    %5446 = vmatpush2.msra.mxu0 0.0
    %5447 = vmatprep.subr.mxu0 0.0
    %5448 = vmatpush2.msra.mxu0 0.0
    %5449 = vmatprep.subr.mxu0 0.0
    %5450 = vmatpush2.msra.mxu0 0.0
    %5451 = vmatprep.subr.mxu0 0.0
    %5452 = vmatpush2.msra.mxu0 0.0
    %5453 = vmatprep.subr.mxu0 0.0
    %5454 = vmatpush2.msra.mxu0 0.0
    %5455 = vmatprep.subr.mxu0 0.0
    %5456 = vmatpush2.msra.mxu0 0.0
    %5457 = vmatprep.subr.mxu0 0.0
    %5458 = vmatpush2.msra.mxu0 0.0
    %5459 = vmatprep.subr.mxu0 0.0
    %5460 = vmatpush2.msra.mxu0 0.0
    %5461 = vmatprep.subr.mxu0 0.0
    %5462 = vmatpush2.msra.mxu0 0.0
    %5463 = vmatprep.subr.mxu0 0.0
    %5464 = vmatpush2.msra.mxu0 0.0
    %5465 = vmatprep.subr.mxu0 0.0
    %5466 = vmatpush2.msra.mxu0 0.0
    %5467 = vmatprep.mubr.f32.mxu0 0.0
    %5468 = vmatmul.mubr.f32.gmra.mxu0 %v5401
    %v5469 = vpop.f32.mrf.mxu0
    %v5470 = vadd.f32 0.0, %v5469
    %v5471 = vpop.f32.mrf.mxu0
    %v5472 = vadd.f32 0.0, %v5471
    %5473 = vdwg.mxu0
    %v5474 = vpack.c.bf16 %v5470, %v5470
    %v5475 = vpack.c.bf16 %v5472, %v5472
    %s5476 = scalar_lea.vmem %s9, 128
    %v5477 = vld [vmem:[%s5476] sm:$0xf]
    %v5478 = vld [vmem:[%s5476 + $0x4] sm:$0xf]
    %v5479 = vld [vmem:[%s5476 + $0x8] sm:$0xf]
    %v5480 = vld [vmem:[%s5476 + $0xc] sm:$0xf]
    %v5481 = vld [vmem:[%s5476 + $0x10] sm:$0xf]
    %v5482 = vld [vmem:[%s5476 + $0x14] sm:$0xf]
    %v5483 = vld [vmem:[%s5476 + $0x18] sm:$0xf]
    %v5484 = vld [vmem:[%s5476 + $0x1c] sm:$0xf]
    %v5485 = vld [vmem:[%s5476 + $0x20] sm:$0xf]
    %v5486 = vld [vmem:[%s5476 + $0x24] sm:$0xf]
    %v5487 = vld [vmem:[%s5476 + $0x28] sm:$0xf]
    %v5488 = vld [vmem:[%s5476 + $0x2c] sm:$0xf]
    %v5489 = vld [vmem:[%s5476 + $0x30] sm:$0xf]
    %v5490 = vld [vmem:[%s5476 + $0x34] sm:$0xf]
    %v5491 = vld [vmem:[%s5476 + $0x38] sm:$0xf]
    %v5492 = vld [vmem:[%s5476 + $0x3c] sm:$0xf]
    %v5493 = vld [vmem:[%s5476 + $0x40] sm:$0xf]
    %v5494 = vld [vmem:[%s5476 + $0x44] sm:$0xf]
    %v5495 = vld [vmem:[%s5476 + $0x48] sm:$0xf]
    %v5496 = vld [vmem:[%s5476 + $0x4c] sm:$0xf]
    %v5497 = vld [vmem:[%s5476 + $0x50] sm:$0xf]
    %v5498 = vld [vmem:[%s5476 + $0x54] sm:$0xf]
    %v5499 = vld [vmem:[%s5476 + $0x58] sm:$0xf]
    %v5500 = vld [vmem:[%s5476 + $0x5c] sm:$0xf]
    %v5501 = vld [vmem:[%s5476 + $0x60] sm:$0xf]
    %v5502 = vld [vmem:[%s5476 + $0x64] sm:$0xf]
    %v5503 = vld [vmem:[%s5476 + $0x68] sm:$0xf]
    %v5504 = vld [vmem:[%s5476 + $0x6c] sm:$0xf]
    %v5505 = vld [vmem:[%s5476 + $0x70] sm:$0xf]
    %v5506 = vld [vmem:[%s5476 + $0x74] sm:$0xf]
    %v5507 = vld [vmem:[%s5476 + $0x78] sm:$0xf]
    %v5508 = vld [vmem:[%s5476 + $0x7c] sm:$0xf]
    %v5541 = vunpack.c.l.b16 %v5477
    %v5542 = vunpack.c.l.b16 %v5478
    %v5543 = vunpack.c.l.b16 %v5479
    %v5544 = vunpack.c.l.b16 %v5480
    %v5545 = vunpack.c.l.b16 %v5481
    %v5546 = vunpack.c.l.b16 %v5482
    %v5547 = vunpack.c.l.b16 %v5483
    %v5548 = vunpack.c.l.b16 %v5484
    %v5549 = vunpack.c.l.b16 %v5485
    %v5550 = vunpack.c.l.b16 %v5486
    %v5551 = vunpack.c.l.b16 %v5487
    %v5552 = vunpack.c.l.b16 %v5488
    %v5553 = vunpack.c.l.b16 %v5489
    %v5554 = vunpack.c.l.b16 %v5490
    %v5555 = vunpack.c.l.b16 %v5491
    %v5556 = vunpack.c.l.b16 %v5492
    %v5557 = vunpack.c.l.b16 %v5493
    %v5558 = vunpack.c.l.b16 %v5494
    %v5559 = vunpack.c.l.b16 %v5495
    %v5560 = vunpack.c.l.b16 %v5496
    %v5561 = vunpack.c.l.b16 %v5497
    %v5562 = vunpack.c.l.b16 %v5498
    %v5563 = vunpack.c.l.b16 %v5499
    %v5564 = vunpack.c.l.b16 %v5500
    %v5565 = vunpack.c.l.b16 %v5501
    %v5566 = vunpack.c.l.b16 %v5502
    %v5567 = vunpack.c.l.b16 %v5503
    %v5568 = vunpack.c.l.b16 %v5504
    %v5569 = vunpack.c.l.b16 %v5505
    %v5570 = vunpack.c.l.b16 %v5506
    %v5571 = vunpack.c.l.b16 %v5507
    %v5572 = vunpack.c.l.b16 %v5508
    %v5573 = vpack.c.b16 %v5542, %v5541
    %v5574 = vpack.c.b16 %v5544, %v5543
    %v5575 = vpack.c.b16 %v5546, %v5545
    %v5576 = vpack.c.b16 %v5548, %v5547
    %v5577 = vpack.c.b16 %v5550, %v5549
    %v5578 = vpack.c.b16 %v5552, %v5551
    %v5579 = vpack.c.b16 %v5554, %v5553
    %v5580 = vpack.c.b16 %v5556, %v5555
    %v5581 = vpack.c.b16 %v5558, %v5557
    %v5582 = vpack.c.b16 %v5560, %v5559
    %v5583 = vpack.c.b16 %v5562, %v5561
    %v5584 = vpack.c.b16 %v5564, %v5563
    %v5585 = vpack.c.b16 %v5566, %v5565
    %v5586 = vpack.c.b16 %v5568, %v5567
    %v5587 = vpack.c.b16 %v5570, %v5569
    %v5588 = vpack.c.b16 %v5572, %v5571
    %5605 = vmatprep.subr.bf16.mxu0 0
    %5606 = vmatpush1.bf16.msra.mxu0 %v5580
    %5607 = vmatprep.subr.bf16.mxu0 0
    %5608 = vmatpush1.bf16.msra.mxu0 %v5579
    %5609 = vmatprep.subr.bf16.mxu0 0
    %5610 = vmatpush1.bf16.msra.mxu0 %v5578
    %5611 = vmatprep.subr.bf16.mxu0 0
    %5612 = vmatpush1.bf16.msra.mxu0 %v5577
    %5613 = vmatprep.subr.bf16.mxu0 0
    %5614 = vmatpush1.bf16.msra.mxu0 %v5576
    %5615 = vmatprep.subr.bf16.mxu0 0
    %5616 = vmatpush1.bf16.msra.mxu0 %v5575
    %5617 = vmatprep.subr.bf16.mxu0 0
    %5618 = vmatpush1.bf16.msra.mxu0 %v5574
    %5619 = vmatprep.subr.bf16.mxu0 0
    %5620 = vmatpush1.bf16.msra.mxu0 %v5573
    %5621 = vmatprep.subr.bf16.mxu0 0
    %5622 = vmatpush2.bf16.msra.mxu0 %v5588
    %5623 = vmatprep.subr.bf16.mxu0 0
    %5624 = vmatpush2.bf16.msra.mxu0 %v5587
    %5625 = vmatprep.subr.bf16.mxu0 0
    %5626 = vmatpush2.bf16.msra.mxu0 %v5586
    %5627 = vmatprep.subr.bf16.mxu0 0
    %5628 = vmatpush2.bf16.msra.mxu0 %v5585
    %5629 = vmatprep.subr.bf16.mxu0 0
    %5630 = vmatpush2.bf16.msra.mxu0 %v5584
    %5631 = vmatprep.subr.bf16.mxu0 0
    %5632 = vmatpush2.bf16.msra.mxu0 %v5583
    %5633 = vmatprep.subr.bf16.mxu0 0
    %5634 = vmatpush2.bf16.msra.mxu0 %v5582
    %5635 = vmatprep.subr.bf16.mxu0 0
    %5636 = vmatpush2.bf16.msra.mxu0 %v5581
    %5637 = vmatprep.mubr.bf16.mxu0 %v5475
    %5638 = vmatmul.mubr.bf16.gmra.mxu0 %v5474
    %v5639 = vpop.f32.mrf.mxu0
    %v5640 = vadd.f32 0.0, %v5639
    %v5641 = vpop.f32.mrf.mxu0
    %v5642 = vpop.f32.mrf.mxu0
    %v5643 = vpop.f32.mrf.mxu0
    %5644 = vdwg.mxu0
    %v5677 = vunpack.c.l.b16 %v5366
    %v5678 = vunpack.c.l.b16 %v5367
    %v5679 = vunpack.c.l.b16 %v5368
    %v5680 = vunpack.c.l.b16 %v5369
    %v5681 = vunpack.c.l.b16 %v5370
    %v5682 = vunpack.c.l.b16 %v5371
    %v5683 = vunpack.c.l.b16 %v5372
    %v5684 = vunpack.c.l.b16 %v5373
    %v5685 = vunpack.c.l.b16 %v5374
    %v5686 = vunpack.c.l.b16 %v5375
    %v5687 = vunpack.c.l.b16 %v5376
    %v5688 = vunpack.c.l.b16 %v5377
    %v5689 = vunpack.c.l.b16 %v5378
    %v5690 = vunpack.c.l.b16 %v5379
    %v5691 = vunpack.c.l.b16 %v5380
    %v5692 = vunpack.c.l.b16 %v5381
    %v5693 = vunpack.c.l.b16 %v5382
    %v5694 = vunpack.c.l.b16 %v5383
    %v5695 = vunpack.c.l.b16 %v5384
    %v5696 = vunpack.c.l.b16 %v5385
    %v5697 = vunpack.c.l.b16 %v5386
    %v5698 = vunpack.c.l.b16 %v5387
    %v5699 = vunpack.c.l.b16 %v5388
    %v5700 = vunpack.c.l.b16 %v5389
    %v5701 = vunpack.c.l.b16 %v5390
    %v5702 = vunpack.c.l.b16 %v5391
    %v5703 = vunpack.c.l.b16 %v5392
    %v5704 = vunpack.c.l.b16 %v5393
    %v5705 = vunpack.c.l.b16 %v5394
    %v5706 = vunpack.c.l.b16 %v5395
    %v5707 = vunpack.c.l.b16 %v5396
    %v5708 = vunpack.c.l.b16 %v5397
    %v5709 = vpack.c.b16 %v5678, %v5677
    %v5710 = vpack.c.b16 %v5680, %v5679
    %v5711 = vpack.c.b16 %v5682, %v5681
    %v5712 = vpack.c.b16 %v5684, %v5683
    %v5713 = vpack.c.b16 %v5686, %v5685
    %v5714 = vpack.c.b16 %v5688, %v5687
    %v5715 = vpack.c.b16 %v5690, %v5689
    %v5716 = vpack.c.b16 %v5692, %v5691
    %v5717 = vpack.c.b16 %v5694, %v5693
    %v5718 = vpack.c.b16 %v5696, %v5695
    %v5719 = vpack.c.b16 %v5698, %v5697
    %v5720 = vpack.c.b16 %v5700, %v5699
    %v5721 = vpack.c.b16 %v5702, %v5701
    %v5722 = vpack.c.b16 %v5704, %v5703
    %v5723 = vpack.c.b16 %v5706, %v5705
    %v5724 = vpack.c.b16 %v5708, %v5707
    %5741 = vmatprep.subr.bf16.mxu0 0
    %5742 = vmatpush1.bf16.msra.mxu0 %v5716
    %5743 = vmatprep.subr.bf16.mxu0 0
    %5744 = vmatpush1.bf16.msra.mxu0 %v5715
    %5745 = vmatprep.subr.bf16.mxu0 0
    %5746 = vmatpush1.bf16.msra.mxu0 %v5714
    %5747 = vmatprep.subr.bf16.mxu0 0
    %5748 = vmatpush1.bf16.msra.mxu0 %v5713
    %5749 = vmatprep.subr.bf16.mxu0 0
    %5750 = vmatpush1.bf16.msra.mxu0 %v5712
    %5751 = vmatprep.subr.bf16.mxu0 0
    %5752 = vmatpush1.bf16.msra.mxu0 %v5711
    %5753 = vmatprep.subr.bf16.mxu0 0
    %5754 = vmatpush1.bf16.msra.mxu0 %v5710
    %5755 = vmatprep.subr.bf16.mxu0 0
    %5756 = vmatpush1.bf16.msra.mxu0 %v5709
    %5757 = vmatprep.subr.bf16.mxu0 0
    %5758 = vmatpush2.bf16.msra.mxu0 %v5724
    %5759 = vmatprep.subr.bf16.mxu0 0
    %5760 = vmatpush2.bf16.msra.mxu0 %v5723
    %5761 = vmatprep.subr.bf16.mxu0 0
    %5762 = vmatpush2.bf16.msra.mxu0 %v5722
    %5763 = vmatprep.subr.bf16.mxu0 0
    %5764 = vmatpush2.bf16.msra.mxu0 %v5721
    %5765 = vmatprep.subr.bf16.mxu0 0
    %5766 = vmatpush2.bf16.msra.mxu0 %v5720
    %5767 = vmatprep.subr.bf16.mxu0 0
    %5768 = vmatpush2.bf16.msra.mxu0 %v5719
    %5769 = vmatprep.subr.bf16.mxu0 0
    %5770 = vmatpush2.bf16.msra.mxu0 %v5718
    %5771 = vmatprep.subr.bf16.mxu0 0
    %5772 = vmatpush2.bf16.msra.mxu0 %v5717
    %5773 = vmatprep.mubr.bf16.mxu0 %v5365
    %5774 = vmatmul.mubr.bf16.gmra.mxu0 %v5364
    %v5775 = vpop.f32.mrf.mxu0
    %v5776 = vadd.f32 %v5640, %v5775
    %v5777 = vpop.f32.mrf.mxu0
    %v5778 = vpop.f32.mrf.mxu0
    %v5779 = vpop.f32.mrf.mxu0
    %5780 = vdwg.mxu0
    %s5781 = scalar_lea.vmem %s8, 16
    %v5782 = vld [vmem:[%s5781] sm:$0xff]
    %v5784 = vsel %vm5289, %v5782, 0
    %5786 = vmatprep.subr.mxu0 0.0
    %5787 = vmatpush1.msra.mxu0 0.0
    %5788 = vmatprep.subr.mxu0 0.0
    %5789 = vmatpush1.msra.mxu0 0.0
    %5790 = vmatprep.subr.mxu0 0.0
    %5791 = vmatpush1.msra.mxu0 0.0
    %5792 = vmatprep.subr.mxu0 0.0
    %5793 = vmatpush1.msra.mxu0 0.0
    %5794 = vmatprep.subr.mxu0 0.0
    %5795 = vmatpush1.msra.mxu0 0.0
    %5796 = vmatprep.subr.mxu0 0.0
    %5797 = vmatpush1.msra.mxu0 0.0
    %5798 = vmatprep.subr.mxu0 0.0
    %5799 = vmatpush1.msra.mxu0 0.0
    %5800 = vmatprep.subr.mxu0 0.0
    %5801 = vmatpush1.msra.mxu0 0.0
    %5802 = vmatprep.subr.mxu0 0.0
    %5803 = vmatpush1.msra.mxu0 0.0
    %5804 = vmatprep.subr.mxu0 0.0
    %5805 = vmatpush1.msra.mxu0 0.0
    %5806 = vmatprep.subr.mxu0 0.0
    %5807 = vmatpush1.msra.mxu0 0.0
    %5808 = vmatprep.subr.mxu0 0.0
    %5809 = vmatpush1.msra.mxu0 0.0
    %5810 = vmatprep.subr.mxu0 %v5287
    %5811 = vmatpush1.msra.mxu0 %v5286
    %5812 = vmatprep.subr.mxu0 %v5285
    %5813 = vmatpush1.msra.mxu0 %v5284
    %5814 = vmatprep.subr.mxu0 %v5283
    %5815 = vmatpush1.msra.mxu0 %v5282
    %5816 = vmatprep.subr.mxu0 %v5281
    %5817 = vmatpush1.msra.mxu0 %v5280
    %5818 = vmatprep.subr.mxu0 0.0
    %5819 = vmatpush2.msra.mxu0 0.0
    %5820 = vmatprep.subr.mxu0 0.0
    %5821 = vmatpush2.msra.mxu0 0.0
    %5822 = vmatprep.subr.mxu0 0.0
    %5823 = vmatpush2.msra.mxu0 0.0
    %5824 = vmatprep.subr.mxu0 0.0
    %5825 = vmatpush2.msra.mxu0 0.0
    %5826 = vmatprep.subr.mxu0 0.0
    %5827 = vmatpush2.msra.mxu0 0.0
    %5828 = vmatprep.subr.mxu0 0.0
    %5829 = vmatpush2.msra.mxu0 0.0
    %5830 = vmatprep.subr.mxu0 0.0
    %5831 = vmatpush2.msra.mxu0 0.0
    %5832 = vmatprep.subr.mxu0 0.0
    %5833 = vmatpush2.msra.mxu0 0.0
    %5834 = vmatprep.subr.mxu0 0.0
    %5835 = vmatpush2.msra.mxu0 0.0
    %5836 = vmatprep.subr.mxu0 0.0
    %5837 = vmatpush2.msra.mxu0 0.0
    %5838 = vmatprep.subr.mxu0 0.0
    %5839 = vmatpush2.msra.mxu0 0.0
    %5840 = vmatprep.subr.mxu0 0.0
    %5841 = vmatpush2.msra.mxu0 0.0
    %5842 = vmatprep.subr.mxu0 0.0
    %5843 = vmatpush2.msra.mxu0 0.0
    %5844 = vmatprep.subr.mxu0 0.0
    %5845 = vmatpush2.msra.mxu0 0.0
    %5846 = vmatprep.subr.mxu0 0.0
    %5847 = vmatpush2.msra.mxu0 0.0
    %5848 = vmatprep.subr.mxu0 0.0
    %5849 = vmatpush2.msra.mxu0 0.0
    %5850 = vmatprep.mubr.f32.mxu0 0.0
    %5851 = vmatmul.mubr.f32.gmra.mxu0 %v5784
    %v5852 = vpop.f32.mrf.mxu0
    %v5853 = vadd.f32 0.0, %v5852
    %v5854 = vpop.f32.mrf.mxu0
    %v5855 = vadd.f32 0.0, %v5854
    %5856 = vdwg.mxu0
    %v5857 = vpack.c.bf16 %v5853, %v5853
    %v5858 = vpack.c.bf16 %v5855, %v5855
    %s5859 = scalar_lea.vmem %s9, 256
    %v5860 = vld [vmem:[%s5859] sm:$0xf]
    %v5861 = vld [vmem:[%s5859 + $0x4] sm:$0xf]
    %v5862 = vld [vmem:[%s5859 + $0x8] sm:$0xf]
    %v5863 = vld [vmem:[%s5859 + $0xc] sm:$0xf]
    %v5864 = vld [vmem:[%s5859 + $0x10] sm:$0xf]
    %v5865 = vld [vmem:[%s5859 + $0x14] sm:$0xf]
    %v5866 = vld [vmem:[%s5859 + $0x18] sm:$0xf]
    %v5867 = vld [vmem:[%s5859 + $0x1c] sm:$0xf]
    %v5868 = vld [vmem:[%s5859 + $0x20] sm:$0xf]
    %v5869 = vld [vmem:[%s5859 + $0x24] sm:$0xf]
    %v5870 = vld [vmem:[%s5859 + $0x28] sm:$0xf]
    %v5871 = vld [vmem:[%s5859 + $0x2c] sm:$0xf]
    %v5872 = vld [vmem:[%s5859 + $0x30] sm:$0xf]
    %v5873 = vld [vmem:[%s5859 + $0x34] sm:$0xf]
    %v5874 = vld [vmem:[%s5859 + $0x38] sm:$0xf]
    %v5875 = vld [vmem:[%s5859 + $0x3c] sm:$0xf]
    %v5876 = vld [vmem:[%s5859 + $0x40] sm:$0xf]
    %v5877 = vld [vmem:[%s5859 + $0x44] sm:$0xf]
    %v5878 = vld [vmem:[%s5859 + $0x48] sm:$0xf]
    %v5879 = vld [vmem:[%s5859 + $0x4c] sm:$0xf]
    %v5880 = vld [vmem:[%s5859 + $0x50] sm:$0xf]
    %v5881 = vld [vmem:[%s5859 + $0x54] sm:$0xf]
    %v5882 = vld [vmem:[%s5859 + $0x58] sm:$0xf]
    %v5883 = vld [vmem:[%s5859 + $0x5c] sm:$0xf]
    %v5884 = vld [vmem:[%s5859 + $0x60] sm:$0xf]
    %v5885 = vld [vmem:[%s5859 + $0x64] sm:$0xf]
    %v5886 = vld [vmem:[%s5859 + $0x68] sm:$0xf]
    %v5887 = vld [vmem:[%s5859 + $0x6c] sm:$0xf]
    %v5888 = vld [vmem:[%s5859 + $0x70] sm:$0xf]
    %v5889 = vld [vmem:[%s5859 + $0x74] sm:$0xf]
    %v5890 = vld [vmem:[%s5859 + $0x78] sm:$0xf]
    %v5891 = vld [vmem:[%s5859 + $0x7c] sm:$0xf]
    %v5924 = vunpack.c.l.b16 %v5860
    %v5925 = vunpack.c.l.b16 %v5861
    %v5926 = vunpack.c.l.b16 %v5862
    %v5927 = vunpack.c.l.b16 %v5863
    %v5928 = vunpack.c.l.b16 %v5864
    %v5929 = vunpack.c.l.b16 %v5865
    %v5930 = vunpack.c.l.b16 %v5866
    %v5931 = vunpack.c.l.b16 %v5867
    %v5932 = vunpack.c.l.b16 %v5868
    %v5933 = vunpack.c.l.b16 %v5869
    %v5934 = vunpack.c.l.b16 %v5870
    %v5935 = vunpack.c.l.b16 %v5871
    %v5936 = vunpack.c.l.b16 %v5872
    %v5937 = vunpack.c.l.b16 %v5873
    %v5938 = vunpack.c.l.b16 %v5874
    %v5939 = vunpack.c.l.b16 %v5875
    %v5940 = vunpack.c.l.b16 %v5876
    %v5941 = vunpack.c.l.b16 %v5877
    %v5942 = vunpack.c.l.b16 %v5878
    %v5943 = vunpack.c.l.b16 %v5879
    %v5944 = vunpack.c.l.b16 %v5880
    %v5945 = vunpack.c.l.b16 %v5881
    %v5946 = vunpack.c.l.b16 %v5882
    %v5947 = vunpack.c.l.b16 %v5883
    %v5948 = vunpack.c.l.b16 %v5884
    %v5949 = vunpack.c.l.b16 %v5885
    %v5950 = vunpack.c.l.b16 %v5886
    %v5951 = vunpack.c.l.b16 %v5887
    %v5952 = vunpack.c.l.b16 %v5888
    %v5953 = vunpack.c.l.b16 %v5889
    %v5954 = vunpack.c.l.b16 %v5890
    %v5955 = vunpack.c.l.b16 %v5891
    %v5956 = vpack.c.b16 %v5925, %v5924
    %v5957 = vpack.c.b16 %v5927, %v5926
    %v5958 = vpack.c.b16 %v5929, %v5928
    %v5959 = vpack.c.b16 %v5931, %v5930
    %v5960 = vpack.c.b16 %v5933, %v5932
    %v5961 = vpack.c.b16 %v5935, %v5934
    %v5962 = vpack.c.b16 %v5937, %v5936
    %v5963 = vpack.c.b16 %v5939, %v5938
    %v5964 = vpack.c.b16 %v5941, %v5940
    %v5965 = vpack.c.b16 %v5943, %v5942
    %v5966 = vpack.c.b16 %v5945, %v5944
    %v5967 = vpack.c.b16 %v5947, %v5946
    %v5968 = vpack.c.b16 %v5949, %v5948
    %v5969 = vpack.c.b16 %v5951, %v5950
    %v5970 = vpack.c.b16 %v5953, %v5952
    %v5971 = vpack.c.b16 %v5955, %v5954
    %5988 = vmatprep.subr.bf16.mxu0 0
    %5989 = vmatpush1.bf16.msra.mxu0 %v5963
    %5990 = vmatprep.subr.bf16.mxu0 0
    %5991 = vmatpush1.bf16.msra.mxu0 %v5962
    %5992 = vmatprep.subr.bf16.mxu0 0
    %5993 = vmatpush1.bf16.msra.mxu0 %v5961
    %5994 = vmatprep.subr.bf16.mxu0 0
    %5995 = vmatpush1.bf16.msra.mxu0 %v5960
    %5996 = vmatprep.subr.bf16.mxu0 0
    %5997 = vmatpush1.bf16.msra.mxu0 %v5959
    %5998 = vmatprep.subr.bf16.mxu0 0
    %5999 = vmatpush1.bf16.msra.mxu0 %v5958
    %6000 = vmatprep.subr.bf16.mxu0 0
    %6001 = vmatpush1.bf16.msra.mxu0 %v5957
    %6002 = vmatprep.subr.bf16.mxu0 0
    %6003 = vmatpush1.bf16.msra.mxu0 %v5956
    %6004 = vmatprep.subr.bf16.mxu0 0
    %6005 = vmatpush2.bf16.msra.mxu0 %v5971
    %6006 = vmatprep.subr.bf16.mxu0 0
    %6007 = vmatpush2.bf16.msra.mxu0 %v5970
    %6008 = vmatprep.subr.bf16.mxu0 0
    %6009 = vmatpush2.bf16.msra.mxu0 %v5969
    %6010 = vmatprep.subr.bf16.mxu0 0
    %6011 = vmatpush2.bf16.msra.mxu0 %v5968
    %6012 = vmatprep.subr.bf16.mxu0 0
    %6013 = vmatpush2.bf16.msra.mxu0 %v5967
    %6014 = vmatprep.subr.bf16.mxu0 0
    %6015 = vmatpush2.bf16.msra.mxu0 %v5966
    %6016 = vmatprep.subr.bf16.mxu0 0
    %6017 = vmatpush2.bf16.msra.mxu0 %v5965
    %6018 = vmatprep.subr.bf16.mxu0 0
    %6019 = vmatpush2.bf16.msra.mxu0 %v5964
    %6020 = vmatprep.mubr.bf16.mxu0 %v5858
    %6021 = vmatmul.mubr.bf16.gmra.mxu0 %v5857
    %v6022 = vpop.f32.mrf.mxu0
    %v6023 = vadd.f32 0.0, %v6022
    %v6024 = vpop.f32.mrf.mxu0
    %v6025 = vpop.f32.mrf.mxu0
    %v6026 = vpop.f32.mrf.mxu0
    %6027 = vdwg.mxu0
    %v6028 = vadd.f32 %v5776, %v6023
    %s6029 = scalar_lea.vmem %s8, 24
    %v6030 = vld [vmem:[%s6029] sm:$0xff]
    %v6032 = vsel %vm5289, %v6030, 0
    %6034 = vmatprep.subr.mxu0 0.0
    %6035 = vmatpush1.msra.mxu0 0.0
    %6036 = vmatprep.subr.mxu0 0.0
    %6037 = vmatpush1.msra.mxu0 0.0
    %6038 = vmatprep.subr.mxu0 0.0
    %6039 = vmatpush1.msra.mxu0 0.0
    %6040 = vmatprep.subr.mxu0 0.0
    %6041 = vmatpush1.msra.mxu0 0.0
    %6042 = vmatprep.subr.mxu0 0.0
    %6043 = vmatpush1.msra.mxu0 0.0
    %6044 = vmatprep.subr.mxu0 0.0
    %6045 = vmatpush1.msra.mxu0 0.0
    %6046 = vmatprep.subr.mxu0 0.0
    %6047 = vmatpush1.msra.mxu0 0.0
    %6048 = vmatprep.subr.mxu0 0.0
    %6049 = vmatpush1.msra.mxu0 0.0
    %6050 = vmatprep.subr.mxu0 0.0
    %6051 = vmatpush1.msra.mxu0 0.0
    %6052 = vmatprep.subr.mxu0 0.0
    %6053 = vmatpush1.msra.mxu0 0.0
    %6054 = vmatprep.subr.mxu0 0.0
    %6055 = vmatpush1.msra.mxu0 0.0
    %6056 = vmatprep.subr.mxu0 0.0
    %6057 = vmatpush1.msra.mxu0 0.0
    %6058 = vmatprep.subr.mxu0 %v5287
    %6059 = vmatpush1.msra.mxu0 %v5286
    %6060 = vmatprep.subr.mxu0 %v5285
    %6061 = vmatpush1.msra.mxu0 %v5284
    %6062 = vmatprep.subr.mxu0 %v5283
    %6063 = vmatpush1.msra.mxu0 %v5282
    %6064 = vmatprep.subr.mxu0 %v5281
    %6065 = vmatpush1.msra.mxu0 %v5280
    %6066 = vmatprep.subr.mxu0 0.0
    %6067 = vmatpush2.msra.mxu0 0.0
    %6068 = vmatprep.subr.mxu0 0.0
    %6069 = vmatpush2.msra.mxu0 0.0
    %6070 = vmatprep.subr.mxu0 0.0
    %6071 = vmatpush2.msra.mxu0 0.0
    %6072 = vmatprep.subr.mxu0 0.0
    %6073 = vmatpush2.msra.mxu0 0.0
    %6074 = vmatprep.subr.mxu0 0.0
    %6075 = vmatpush2.msra.mxu0 0.0
    %6076 = vmatprep.subr.mxu0 0.0
    %6077 = vmatpush2.msra.mxu0 0.0
    %6078 = vmatprep.subr.mxu0 0.0
    %6079 = vmatpush2.msra.mxu0 0.0
    %6080 = vmatprep.subr.mxu0 0.0
    %6081 = vmatpush2.msra.mxu0 0.0
    %6082 = vmatprep.subr.mxu0 0.0
    %6083 = vmatpush2.msra.mxu0 0.0
    %6084 = vmatprep.subr.mxu0 0.0
    %6085 = vmatpush2.msra.mxu0 0.0
    %6086 = vmatprep.subr.mxu0 0.0
    %6087 = vmatpush2.msra.mxu0 0.0
    %6088 = vmatprep.subr.mxu0 0.0
    %6089 = vmatpush2.msra.mxu0 0.0
    %6090 = vmatprep.subr.mxu0 0.0
    %6091 = vmatpush2.msra.mxu0 0.0
    %6092 = vmatprep.subr.mxu0 0.0
    %6093 = vmatpush2.msra.mxu0 0.0
    %6094 = vmatprep.subr.mxu0 0.0
    %6095 = vmatpush2.msra.mxu0 0.0
    %6096 = vmatprep.subr.mxu0 0.0
    %6097 = vmatpush2.msra.mxu0 0.0
    %6098 = vmatprep.mubr.f32.mxu0 0.0
    %6099 = vmatmul.mubr.f32.gmra.mxu0 %v6032
    %v6100 = vpop.f32.mrf.mxu0
    %v6101 = vadd.f32 0.0, %v6100
    %v6102 = vpop.f32.mrf.mxu0
    %v6103 = vadd.f32 0.0, %v6102
    %6104 = vdwg.mxu0
    %v6105 = vpack.c.bf16 %v6101, %v6101
    %v6106 = vpack.c.bf16 %v6103, %v6103
    %s6107 = scalar_lea.vmem %s9, 384
    %v6108 = vld [vmem:[%s6107] sm:$0xf]
    %v6109 = vld [vmem:[%s6107 + $0x4] sm:$0xf]
    %v6110 = vld [vmem:[%s6107 + $0x8] sm:$0xf]
    %v6111 = vld [vmem:[%s6107 + $0xc] sm:$0xf]
    %v6112 = vld [vmem:[%s6107 + $0x10] sm:$0xf]
    %v6113 = vld [vmem:[%s6107 + $0x14] sm:$0xf]
    %v6114 = vld [vmem:[%s6107 + $0x18] sm:$0xf]
    %v6115 = vld [vmem:[%s6107 + $0x1c] sm:$0xf]
    %v6116 = vld [vmem:[%s6107 + $0x20] sm:$0xf]
    %v6117 = vld [vmem:[%s6107 + $0x24] sm:$0xf]
    %v6118 = vld [vmem:[%s6107 + $0x28] sm:$0xf]
    %v6119 = vld [vmem:[%s6107 + $0x2c] sm:$0xf]
    %v6120 = vld [vmem:[%s6107 + $0x30] sm:$0xf]
    %v6121 = vld [vmem:[%s6107 + $0x34] sm:$0xf]
    %v6122 = vld [vmem:[%s6107 + $0x38] sm:$0xf]
    %v6123 = vld [vmem:[%s6107 + $0x3c] sm:$0xf]
    %v6124 = vld [vmem:[%s6107 + $0x40] sm:$0xf]
    %v6125 = vld [vmem:[%s6107 + $0x44] sm:$0xf]
    %v6126 = vld [vmem:[%s6107 + $0x48] sm:$0xf]
    %v6127 = vld [vmem:[%s6107 + $0x4c] sm:$0xf]
    %v6128 = vld [vmem:[%s6107 + $0x50] sm:$0xf]
    %v6129 = vld [vmem:[%s6107 + $0x54] sm:$0xf]
    %v6130 = vld [vmem:[%s6107 + $0x58] sm:$0xf]
    %v6131 = vld [vmem:[%s6107 + $0x5c] sm:$0xf]
    %v6132 = vld [vmem:[%s6107 + $0x60] sm:$0xf]
    %v6133 = vld [vmem:[%s6107 + $0x64] sm:$0xf]
    %v6134 = vld [vmem:[%s6107 + $0x68] sm:$0xf]
    %v6135 = vld [vmem:[%s6107 + $0x6c] sm:$0xf]
    %v6136 = vld [vmem:[%s6107 + $0x70] sm:$0xf]
    %v6137 = vld [vmem:[%s6107 + $0x74] sm:$0xf]
    %v6138 = vld [vmem:[%s6107 + $0x78] sm:$0xf]
    %v6139 = vld [vmem:[%s6107 + $0x7c] sm:$0xf]
    %v6172 = vunpack.c.l.b16 %v6108
    %v6173 = vunpack.c.l.b16 %v6109
    %v6174 = vunpack.c.l.b16 %v6110
    %v6175 = vunpack.c.l.b16 %v6111
    %v6176 = vunpack.c.l.b16 %v6112
    %v6177 = vunpack.c.l.b16 %v6113
    %v6178 = vunpack.c.l.b16 %v6114
    %v6179 = vunpack.c.l.b16 %v6115
    %v6180 = vunpack.c.l.b16 %v6116
    %v6181 = vunpack.c.l.b16 %v6117
    %v6182 = vunpack.c.l.b16 %v6118
    %v6183 = vunpack.c.l.b16 %v6119
    %v6184 = vunpack.c.l.b16 %v6120
    %v6185 = vunpack.c.l.b16 %v6121
    %v6186 = vunpack.c.l.b16 %v6122
    %v6187 = vunpack.c.l.b16 %v6123
    %v6188 = vunpack.c.l.b16 %v6124
    %v6189 = vunpack.c.l.b16 %v6125
    %v6190 = vunpack.c.l.b16 %v6126
    %v6191 = vunpack.c.l.b16 %v6127
    %v6192 = vunpack.c.l.b16 %v6128
    %v6193 = vunpack.c.l.b16 %v6129
    %v6194 = vunpack.c.l.b16 %v6130
    %v6195 = vunpack.c.l.b16 %v6131
    %v6196 = vunpack.c.l.b16 %v6132
    %v6197 = vunpack.c.l.b16 %v6133
    %v6198 = vunpack.c.l.b16 %v6134
    %v6199 = vunpack.c.l.b16 %v6135
    %v6200 = vunpack.c.l.b16 %v6136
    %v6201 = vunpack.c.l.b16 %v6137
    %v6202 = vunpack.c.l.b16 %v6138
    %v6203 = vunpack.c.l.b16 %v6139
    %v6204 = vpack.c.b16 %v6173, %v6172
    %v6205 = vpack.c.b16 %v6175, %v6174
    %v6206 = vpack.c.b16 %v6177, %v6176
    %v6207 = vpack.c.b16 %v6179, %v6178
    %v6208 = vpack.c.b16 %v6181, %v6180
    %v6209 = vpack.c.b16 %v6183, %v6182
    %v6210 = vpack.c.b16 %v6185, %v6184
    %v6211 = vpack.c.b16 %v6187, %v6186
    %v6212 = vpack.c.b16 %v6189, %v6188
    %v6213 = vpack.c.b16 %v6191, %v6190
    %v6214 = vpack.c.b16 %v6193, %v6192
    %v6215 = vpack.c.b16 %v6195, %v6194
    %v6216 = vpack.c.b16 %v6197, %v6196
    %v6217 = vpack.c.b16 %v6199, %v6198
    %v6218 = vpack.c.b16 %v6201, %v6200
    %v6219 = vpack.c.b16 %v6203, %v6202
    %6236 = vmatprep.subr.bf16.mxu0 0
    %6237 = vmatpush1.bf16.msra.mxu0 %v6211
    %6238 = vmatprep.subr.bf16.mxu0 0
    %6239 = vmatpush1.bf16.msra.mxu0 %v6210
    %6240 = vmatprep.subr.bf16.mxu0 0
    %6241 = vmatpush1.bf16.msra.mxu0 %v6209
    %6242 = vmatprep.subr.bf16.mxu0 0
    %6243 = vmatpush1.bf16.msra.mxu0 %v6208
    %6244 = vmatprep.subr.bf16.mxu0 0
    %6245 = vmatpush1.bf16.msra.mxu0 %v6207
    %6246 = vmatprep.subr.bf16.mxu0 0
    %6247 = vmatpush1.bf16.msra.mxu0 %v6206
    %6248 = vmatprep.subr.bf16.mxu0 0
    %6249 = vmatpush1.bf16.msra.mxu0 %v6205
    %6250 = vmatprep.subr.bf16.mxu0 0
    %6251 = vmatpush1.bf16.msra.mxu0 %v6204
    %6252 = vmatprep.subr.bf16.mxu0 0
    %6253 = vmatpush2.bf16.msra.mxu0 %v6219
    %6254 = vmatprep.subr.bf16.mxu0 0
    %6255 = vmatpush2.bf16.msra.mxu0 %v6218
    %6256 = vmatprep.subr.bf16.mxu0 0
    %6257 = vmatpush2.bf16.msra.mxu0 %v6217
    %6258 = vmatprep.subr.bf16.mxu0 0
    %6259 = vmatpush2.bf16.msra.mxu0 %v6216
    %6260 = vmatprep.subr.bf16.mxu0 0
    %6261 = vmatpush2.bf16.msra.mxu0 %v6215
    %6262 = vmatprep.subr.bf16.mxu0 0
    %6263 = vmatpush2.bf16.msra.mxu0 %v6214
    %6264 = vmatprep.subr.bf16.mxu0 0
    %6265 = vmatpush2.bf16.msra.mxu0 %v6213
    %6266 = vmatprep.subr.bf16.mxu0 0
    %6267 = vmatpush2.bf16.msra.mxu0 %v6212
    %6268 = vmatprep.mubr.bf16.mxu0 %v6106
    %6269 = vmatmul.mubr.bf16.gmra.mxu0 %v6105
    %v6270 = vpop.f32.mrf.mxu0
    %v6271 = vadd.f32 0.0, %v6270
    %v6272 = vpop.f32.mrf.mxu0
    %v6273 = vpop.f32.mrf.mxu0
    %v6274 = vpop.f32.mrf.mxu0
    %6275 = vdwg.mxu0
    %v6276 = vadd.f32 %v6028, %v6271
    %v6277 = vld [vmem:[%s10] sm:$0x1]
    %v6279 = vlaneseq
    %v6280 = vshrl.u32 %v6279, 7
    %v6281 = vsub.s32 0, %v6280
    %v6282 = vrot.slane %v6277, %v6281
    %v6284 = vadd.f32 %v6276, %v6282
    %v6285 = vmax.f32 %v6284, 0.0
    %v6286 = vpack.c.bf16 %v6285, %v6285
    %v6287 = vld [vmem:[#allocation10] sm:$0xf]
    %v6288 = vld [vmem:[#allocation10 + $0x4] sm:$0xf]
    %v6289 = vld [vmem:[#allocation10 + $0x8] sm:$0xf]
    %v6290 = vld [vmem:[#allocation10 + $0xc] sm:$0xf]
    %v6291 = vld [vmem:[#allocation10 + $0x10] sm:$0xf]
    %v6292 = vld [vmem:[#allocation10 + $0x14] sm:$0xf]
    %v6293 = vld [vmem:[#allocation10 + $0x18] sm:$0xf]
    %v6294 = vld [vmem:[#allocation10 + $0x1c] sm:$0xf]
    %v6295 = vld [vmem:[#allocation10 + $0x20] sm:$0xf]
    %v6296 = vld [vmem:[#allocation10 + $0x24] sm:$0xf]
    %v6297 = vld [vmem:[#allocation10 + $0x28] sm:$0xf]
    %v6298 = vld [vmem:[#allocation10 + $0x2c] sm:$0xf]
    %v6299 = vld [vmem:[#allocation10 + $0x30] sm:$0xf]
    %v6300 = vld [vmem:[#allocation10 + $0x34] sm:$0xf]
    %v6301 = vld [vmem:[#allocation10 + $0x38] sm:$0xf]
    %v6302 = vld [vmem:[#allocation10 + $0x3c] sm:$0xf]
    %v6303 = vld [vmem:[%s12] sm:$0x1]
    %v6305 = vlaneseq
    %v6306 = vshrl.u32 %v6305, 7
    %v6307 = vsub.s32 0, %v6306
    %v6308 = vrot.slane %v6303, %v6307
    %v6326 = vunpack.c.l.b16 %v6287
    %v6327 = vunpack.c.l.b16 %v6288
    %v6328 = vunpack.c.l.b16 %v6289
    %v6329 = vunpack.c.l.b16 %v6290
    %v6330 = vunpack.c.l.b16 %v6291
    %v6331 = vunpack.c.l.b16 %v6292
    %v6332 = vunpack.c.l.b16 %v6293
    %v6333 = vunpack.c.l.b16 %v6294
    %v6334 = vunpack.c.l.b16 %v6295
    %v6335 = vunpack.c.l.b16 %v6296
    %v6336 = vunpack.c.l.b16 %v6297
    %v6337 = vunpack.c.l.b16 %v6298
    %v6338 = vunpack.c.l.b16 %v6299
    %v6339 = vunpack.c.l.b16 %v6300
    %v6340 = vunpack.c.l.b16 %v6301
    %v6341 = vunpack.c.l.b16 %v6302
    %v6342 = vpack.c.b16 %v6327, %v6326
    %v6343 = vpack.c.b16 %v6329, %v6328
    %v6344 = vpack.c.b16 %v6331, %v6330
    %v6345 = vpack.c.b16 %v6333, %v6332
    %v6346 = vpack.c.b16 %v6335, %v6334
    %v6347 = vpack.c.b16 %v6337, %v6336
    %v6348 = vpack.c.b16 %v6339, %v6338
    %v6349 = vpack.c.b16 %v6341, %v6340
    %6358 = vmatprep.subr.bf16.mxu0 0
    %6359 = vmatpush1.bf16.msra.mxu0 %v6349
    %6360 = vmatprep.subr.bf16.mxu0 0
    %6361 = vmatpush1.bf16.msra.mxu0 %v6348
    %6362 = vmatprep.subr.bf16.mxu0 0
    %6363 = vmatpush1.bf16.msra.mxu0 %v6347
    %6364 = vmatprep.subr.bf16.mxu0 0
    %6365 = vmatpush1.bf16.msra.mxu0 %v6346
    %6366 = vmatprep.subr.bf16.mxu0 0
    %6367 = vmatpush1.bf16.msra.mxu0 %v6345
    %6368 = vmatprep.subr.bf16.mxu0 0
    %6369 = vmatpush1.bf16.msra.mxu0 %v6344
    %6370 = vmatprep.subr.bf16.mxu0 0
    %6371 = vmatpush1.bf16.msra.mxu0 %v6343
    %6372 = vmatprep.subr.bf16.mxu0 0
    %6373 = vmatpush1.bf16.msra.mxu0 %v6342
    %6374 = vmatprep.subr.bf16.mxu0 0
    %6375 = vmatpush2.bf16.msra.mxu0 0
    %6376 = vmatprep.subr.bf16.mxu0 0
    %6377 = vmatpush2.bf16.msra.mxu0 0
    %6378 = vmatprep.subr.bf16.mxu0 0
    %6379 = vmatpush2.bf16.msra.mxu0 0
    %6380 = vmatprep.subr.bf16.mxu0 0
    %6381 = vmatpush2.bf16.msra.mxu0 0
    %6382 = vmatprep.subr.bf16.mxu0 0
    %6383 = vmatpush2.bf16.msra.mxu0 0
    %6384 = vmatprep.subr.bf16.mxu0 0
    %6385 = vmatpush2.bf16.msra.mxu0 0
    %6386 = vmatprep.subr.bf16.mxu0 0
    %6387 = vmatpush2.bf16.msra.mxu0 0
    %6388 = vmatprep.subr.bf16.mxu0 0
    %6389 = vmatpush2.bf16.msra.mxu0 0
    %6390 = vmatprep.mubr.bf16.mxu0 0
    %6391 = vmatmul.mubr.bf16.gmra.mxu0 %v6286
    %v6392 = vpop.f32.mrf.mxu0
    %v6393 = vadd.f32 %v6308, %v6392
    %v6394 = vpop.f32.mrf.mxu0
    %v6395 = vpop.f32.mrf.mxu0
    %v6396 = vpop.f32.mrf.mxu0
    %6397 = vdwg.mxu0
    %v6398 = vlaneseq
    %v6399 = vand.u32 %v6398, 127
    %vm6400 = vcmp.lt.s32.totalorder %v6399, 10
    %v6401 = vsel %vm6400, %v6393, -1e+30
    %6402 = vmax.xlane.f32.xlu0 %v6401
    %v6403 = vpop.xlane.xlu0 %6402
    %v6404 = vsub.f32 %v6401, %v6403
    %v6405 = vmul.f32 %v6404, 1.442695
    %v6406 = vpow.pop %v6405
    %6407 = vadd.xlane.f32.xlu0 %v6406
    %v6408 = vpop.xlane.xlu0 %6407
    %v6409 = vlog2.pop %v6408
    %v6410 = vmul.f32 %v6409, 0.6931472
    %v6411 = vsub.f32 %v6393, %v6403
    %v6412 = vsub.f32 %v6411, %v6410
    %v6413 = vsel %vm6400, %v6412, 0.0
    %6414 = vst [vmem:[%s13] sm:$0xff] %v6413
    // Predicated region
    $region78: #{cnn_mnist_forward.1} parent=1 // pred_check
      _
    $region79: #{cnn_mnist_forward.1} parent=1 // pred_check_branch
      %6416 = sbr.rel (0) target = $region81
    $region80: #{cnn_mnist_forward.1} parent=1 // pred_region
      _
    $region81: #{cnn_mnist_forward.1} parent=1 // pred_fallthru
      _
    // Predicated region
    $region82: #{cnn_mnist_forward.1} parent=1 // pred_check
      _
    $region83: #{cnn_mnist_forward.1} parent=1 // pred_check_branch
      %6418 = sbr.rel (0) target = $region85
    $region84: #{cnn_mnist_forward.1} parent=1 // pred_region
      _
    $region85: #{cnn_mnist_forward.1} parent=1 // pred_fallthru
      _
    %6419 = vsyncpa [#allocation3], 1
    %6420 = vsyncpa [#allocation5], 1
    %6421 = vsyncpa [#allocation8], 1
    %6422 = vsyncpa [#allocation11], 1

</llo_original>
